<compile_context>
chip_gen: v5e
topology: v5e:2x2
jax: 0.10.0
libtpu: 0.0.40
codegen_flags: <defaults>
</compile_context>

<pallas_src>
import jax
import jax.numpy as jnp
from jax.experimental import pallas as pl
from jax.experimental.pallas import tpu as pltpu

L_IN = 500              # sequence length implied by fc input 1600*2+2 (500/2/2/5 = 25)
L1, L2, L3 = 500, 250, 125
C1, C2, C3 = 16, 32, 64
K1, K2, K3 = 7, 5, 3
L_OUT = 25
FEAT = C3 * L_OUT       # 1600
HID1, HID2, OUT = 512, 128, 2


# --------------------------------------------------------------------------- #
# CNN kernel: per-sample normalization + 3x (im2col conv1d + relu + maxpool)
# --------------------------------------------------------------------------- #
def _cnn_kernel(ppg_ref, w1_ref, b1_ref, w2_ref, b2_ref, w3_ref, b3_ref,
                out_ref,
                p1, s1, p2, s2, p3, s3):
    x = ppg_ref[0]                                   # (500, 1)

    # torch: mean/std over dim=1 (unbiased std) then +1e-6
    n = float(L_IN)
    m = jnp.sum(x) / n
    xc = x - m
    std = jnp.sqrt(jnp.sum(xc * xc) / (n - 1.0)) + 1e-6
    xn = xc / std

    # ---- conv1: k=7, pad=3, 1 -> 16; single im2col matmul, single store ----
    p1[pl.ds(0, K1 - 4), :] = jnp.zeros((3, 1), jnp.float32)       # left halo
    p1[pl.ds(L1 + 3, 3), :] = jnp.zeros((3, 1), jnp.float32)       # right halo
    p1[pl.ds(3, L1), :] = xn
    x1 = jnp.concatenate([p1[pl.ds(k, L1), :] for k in range(K1)], axis=1)  # (500, 7)
    s1[...] = jnp.maximum(
        jnp.dot(x1, w1_ref[...], preferred_element_type=jnp.float32) + b1_ref[...],
        0.0)
    # maxpool(2)
    h1 = jnp.maximum(s1[pl.ds(0, L2, stride=2), :],
                     s1[pl.ds(1, L2, stride=2), :])                # (250, 16)

    # ---- conv2: k=5, pad=2, 16 -> 32; im2col (250,80)@(80,32) ----
    p2[pl.ds(0, 2), :] = jnp.zeros((2, C1), jnp.float32)
    p2[pl.ds(L2 + 2, 2), :] = jnp.zeros((2, C1), jnp.float32)
    p2[pl.ds(2, L2), :] = h1
    x2 = jnp.concatenate([p2[pl.ds(k, L2), :] for k in range(K2)], axis=1)  # (250, 80)
    s2[...] = jnp.maximum(
        jnp.dot(x2, w2_ref[...], preferred_element_type=jnp.float32) + b2_ref[...],
        0.0)
    # maxpool(2)
    h2 = jnp.maximum(s2[pl.ds(0, L3, stride=2), :],
                     s2[pl.ds(1, L3, stride=2), :])                # (125, 32)

    # ---- conv3: k=3, pad=1, 32 -> 64; im2col (125,96)@(96,64) ----
    p3[pl.ds(0, 1), :] = jnp.zeros((1, C2), jnp.float32)
    p3[pl.ds(L3 + 1, 1), :] = jnp.zeros((1, C2), jnp.float32)
    p3[pl.ds(1, L3), :] = h2
    x3 = jnp.concatenate([p3[pl.ds(k, L3), :] for k in range(K3)], axis=1)  # (125, 96)
    s3[...] = jnp.maximum(
        jnp.dot(x3, w3_ref[...], preferred_element_type=jnp.float32) + b3_ref[...],
        0.0)
    # maxpool(5)
    f = s3[pl.ds(0, L_OUT, stride=5), :]
    for j in range(1, 5):
        f = jnp.maximum(f, s3[pl.ds(j, L_OUT, stride=5), :])
    out_ref[0] = f                                                 # (25, 64)


def cnn_forward(ppg_all, w1i, b1, w2i, b2, w3i, b3):
    nb = ppg_all.shape[0]
    grid_spec = pltpu.PrefetchScalarGridSpec(
        num_scalar_prefetch=0,
        grid=(nb,),
        in_specs=[
            pl.BlockSpec((1, L_IN, 1), lambda i: (i, 0, 0)),
            pl.BlockSpec((K1, C1), lambda i: (0, 0)),
            pl.BlockSpec((1, C1), lambda i: (0, 0)),
            pl.BlockSpec((K2 * C1, C2), lambda i: (0, 0)),
            pl.BlockSpec((1, C2), lambda i: (0, 0)),
            pl.BlockSpec((K3 * C2, C3), lambda i: (0, 0)),
            pl.BlockSpec((1, C3), lambda i: (0, 0)),
        ],
        out_specs=pl.BlockSpec((1, L_OUT, C3), lambda i: (i, 0, 0)),
        scratch_shapes=[
            pltpu.VMEM((L1 + K1 - 1, 1), jnp.float32),    # padded conv1 input
            pltpu.VMEM((L1, C1), jnp.float32),            # conv1 output (pre-pool)
            pltpu.VMEM((L2 + K2 - 1, C1), jnp.float32),   # padded conv2 input
            pltpu.VMEM((L2, C2), jnp.float32),            # conv2 output (pre-pool)
            pltpu.VMEM((L3 + K3 - 1, C2), jnp.float32),   # padded conv3 input
            pltpu.VMEM((L3, C3), jnp.float32),            # conv3 output (pre-pool)
        ],
    )
    return pl.pallas_call(
        _cnn_kernel,
        out_shape=jax.ShapeDtypeStruct((nb, L_OUT, C3), jnp.float32),
        grid_spec=grid_spec,
        compiler_params=pltpu.CompilerParams(
            dimension_semantics=("parallel",)),
    )(ppg_all, w1i, b1, w2i, b2, w3i, b3)


# --------------------------------------------------------------------------- #
# FC head kernel: concat([f_c, f_t, cals]) @ W1 as split matmuls; cals term on VPU
# --------------------------------------------------------------------------- #
def _fc_kernel(fc_ref, ft_ref, sbp_ref, dbp_ref, w1a_ref, w1b_ref,
               w1c0_ref, w1c1_ref, b1_ref, w2_ref, b2_ref, w3_ref, b3_ref,
               out_ref):
    h1 = (jnp.dot(fc_ref[...], w1a_ref[...], preferred_element_type=jnp.float32)
          + jnp.dot(ft_ref[...], w1b_ref[...], preferred_element_type=jnp.float32)
          + sbp_ref[...] * w1c0_ref[...]          # (TM,1)*(1,512) on VPU
          + dbp_ref[...] * w1c1_ref[...]
          + b1_ref[...])
    h1 = jnp.maximum(h1, 0.0)
    # TODO(synk): nn.Dropout(0.3)/(0.2) are identity at inference; train-mode stochastic masking not implemented.
    h2 = jnp.maximum(
        jnp.dot(h1, w2_ref[...], preferred_element_type=jnp.float32) + b2_ref[...], 0.0)
    out_ref[...] = jnp.dot(h2, w3_ref[...],
                           preferred_element_type=jnp.float32) + b3_ref[...]


def fc_forward(f_c, f_t, sbp, dbp, w1a, w1b, w1c0, w1c1, b1, w2, b2, w3, b3):
    B = f_c.shape[0]
    tm = B if B <= 128 else 128
    grid = (pl.cdiv(B, tm),)
    grid_spec = pltpu.PrefetchScalarGridSpec(
        num_scalar_prefetch=0,
        grid=grid,
        in_specs=[
            pl.BlockSpec((tm, FEAT), lambda i: (i, 0)),
            pl.BlockSpec((tm, FEAT), lambda i: (i, 0)),
            pl.BlockSpec((tm, 1), lambda i: (i, 0)),
            pl.BlockSpec((tm, 1), lambda i: (i, 0)),
            pl.BlockSpec((FEAT, HID1), lambda i: (0, 0)),   # resident weights
            pl.BlockSpec((FEAT, HID1), lambda i: (0, 0)),
            pl.BlockSpec((1, HID1), lambda i: (0, 0)),
            pl.BlockSpec((1, HID1), lambda i: (0, 0)),
            pl.BlockSpec((1, HID1), lambda i: (0, 0)),
            pl.BlockSpec((HID1, HID2), lambda i: (0, 0)),
            pl.BlockSpec((1, HID2), lambda i: (0, 0)),
            pl.BlockSpec((HID2, OUT), lambda i: (0, 0)),
            pl.BlockSpec((1, OUT), lambda i: (0, 0)),
        ],
        out_specs=pl.BlockSpec((tm, OUT), lambda i: (i, 0)),
    )
    return pl.pallas_call(
        _fc_kernel,
        out_shape=jax.ShapeDtypeStruct((B, OUT), jnp.float32),
        grid_spec=grid_spec,
        compiler_params=pltpu.CompilerParams(
            dimension_semantics=("parallel",),
            vmem_limit_bytes=32 * 1024 * 1024),
    )(f_c, f_t, sbp, dbp, w1a, w1b, w1c0, w1c1, b1, w2, b2, w3, b3)


# --------------------------------------------------------------------------- #
# Full forward (glue in plain JAX: stacking, one-time weight reorders, cals)
# --------------------------------------------------------------------------- #
def paired_ppg2bp_forward(params, ppg_c, ppg_t, sbp_c, dbp_c):
    B = ppg_c.shape[0]
    ppg_all = jnp.concatenate([ppg_c, ppg_t], axis=0)[:, :, None].astype(jnp.float32)

    # conv weights (K, Cin, Cout) -> im2col layout (K*Cin, Cout)
    w1i = params["w1"].reshape(K1 * 1, C1)
    w2i = params["w2"].reshape(K2 * C1, C2)
    w3i = params["w3"].reshape(K3 * C2, C3)
    feats = cnn_forward(ppg_all, w1i, params["b1"], w2i, params["b2"],
                        w3i, params["b3"])                       # (2B, 25, 64)

    # torch nn.Flatten on (N, 64, 25) uses feature index c*25 + l; instead of
    # transposing the activations, permute the fc1 weight rows once to the
    # kernel's row-major (l*64 + c) order and reshape feats for free.
    feats = feats.reshape(2 * B, FEAT)
    f_c, f_t = feats[:B], feats[B:]

    def to_lmajor(w):   # (1600, H) indexed by c*25+l  ->  indexed by l*64+c
        return w.reshape(C3, L_OUT, HID1).transpose(1, 0, 2).reshape(FEAT, HID1)

    w1a_lm = to_lmajor(params["w1a"])
    w1b_lm = to_lmajor(params["w1b"])
    w1c0 = params["w1c"][0:1, :]
    w1c1 = params["w1c"][1:2, :]

    sbp = sbp_c.reshape(B, 1).astype(jnp.float32)
    dbp = dbp_c.reshape(B, 1).astype(jnp.float32)
    return fc_forward(f_c, f_t, sbp, dbp, w1a_lm, w1b_lm, w1c0, w1c1,
                      params["fb1"], params["fw2"], params["fb2"],
                      params["fw3"], params["fb3"])


# --------------------------------------------------------------------------- #
# Pure-JAX reference (same math as the PyTorch module) for verification
# --------------------------------------------------------------------------- #
def _conv1d_ref(x, w, b):          # x (N, L, Cin), w (K, Cin, Cout), b (1, Cout)
    K = w.shape[0]
    p = K // 2
    L = x.shape[1]
    xp = jnp.pad(x, ((0, 0), (p, p), (0, 0)))
    y = jnp.zeros((x.shape[0], L, w.shape[2]), jnp.float32)
    for k in range(K):
        y = y + jnp.einsum('nlc,co->nlo', xp[:, k:k + L, :], w[k])
    return jnp.maximum(y + b[None], 0.0)


def _pool_ref(x, s):
    N, L, C = x.shape
    return x.reshape(N, L // s, s, C).max(axis=2)


def reference_forward(params, ppg_c, ppg_t, sbp_c, dbp_c):
    B = ppg_c.shape[0]

    def norm(p):
        m = p.mean(axis=1, keepdims=True)
        sd = jnp.sqrt(jnp.sum((p - m) ** 2, axis=1, keepdims=True) / (p.shape[1] - 1)) + 1e-6
        return (p - m) / sd

    x = jnp.concatenate([norm(ppg_c), norm(ppg_t)], axis=0)[:, :, None]
    h = _pool_ref(_conv1d_ref(x, params["w1"], params["b1"]), 2)
    h = _pool_ref(_conv1d_ref(h, params["w2"], params["b2"]), 2)
    h = _pool_ref(_conv1d_ref(h, params["w3"], params["b3"]), 5)
    feats = jnp.transpose(h, (0, 2, 1)).reshape(2 * B, FEAT)    # torch flatten: c*25+l
    f_c, f_t = feats[:B], feats[B:]
    cals = jnp.stack([sbp_c, dbp_c], axis=1)
    h1 = jnp.maximum(f_c @ params["w1a"] + f_t @ params["w1b"]
                     + cals @ params["w1c"] + params["fb1"], 0.0)
    h2 = jnp.maximum(h1 @ params["fw2"] + params["fb2"], 0.0)
    return h2 @ params["fw3"] + params["fb3"]


if __name__ == "__main__":
    B = 4
    key = jax.random.PRNGKey(0)
    ks = jax.random.split(key, 16)

    params = {
        # conv weights stored channels-last: (K, Cin, Cout); biases as (1, Cout)
        "w1": 0.3 * jax.random.normal(ks[0], (K1, 1, C1), jnp.float32),
        "b1": 0.05 * jax.random.normal(ks[1], (1, C1), jnp.float32),
        "w2": 0.1 * jax.random.normal(ks[2], (K2, C1, C2), jnp.float32),
        "b2": 0.05 * jax.random.normal(ks[3], (1, C2), jnp.float32),
        "w3": 0.1 * jax.random.normal(ks[4], (K3, C2, C3), jnp.float32),
        "b3": 0.05 * jax.random.normal(ks[5], (1, C3), jnp.float32),
        # fc1 weight (3202, 512) split into [f_c | f_t | cals] row blocks,
        # rows indexed in torch flatten order c*25 + l
        "w1a": 0.02 * jax.random.normal(ks[6], (FEAT, HID1), jnp.float32),
        "w1b": 0.02 * jax.random.normal(ks[7], (FEAT, HID1), jnp.float32),
        "w1c": 0.02 * jax.random.normal(ks[8], (2, HID1), jnp.float32),
        "fb1": 0.02 * jax.random.normal(ks[9], (1, HID1), jnp.float32),
        "fw2": 0.05 * jax.random.normal(ks[10], (HID1, HID2), jnp.float32),
        "fb2": 0.02 * jax.random.normal(ks[11], (1, HID2), jnp.float32),
        "fw3": 0.1 * jax.random.normal(ks[12], (HID2, OUT), jnp.float32),
        "fb3": 0.02 * jax.random.normal(ks[13], (1, OUT), jnp.float32),
    }

    ppg_c = jax.random.normal(ks[14], (B, L_IN), jnp.float32)
    ppg_t = jax.random.normal(ks[15], (B, L_IN), jnp.float32)
    sbp_c = 120.0 + 10.0 * jax.random.normal(jax.random.PRNGKey(1), (B,), jnp.float32)
    dbp_c = 80.0 + 5.0 * jax.random.normal(jax.random.PRNGKey(2), (B,), jnp.float32)

    out = paired_ppg2bp_forward(params, ppg_c, ppg_t, sbp_c, dbp_c)
    out = jax.block_until_ready(out)

    ref = reference_forward(params, ppg_c, ppg_t, sbp_c, dbp_c)
    assert out.shape == (B, OUT), out.shape
    assert bool(jnp.all(jnp.isfinite(out)))
    assert jnp.allclose(out, ref, rtol=5e-2, atol=5e-2), (out, ref)
    print("KERNEL_OK")
</pallas_src>

<mosaic_0001>
module attributes {stable_mosaic.version = 11 : i64} {
  func.func @_cnn_kernel(%arg0: i32, %arg1: memref<1x500x1xf32, #tpu.memory_space<vmem>>, %arg2: memref<7x16xf32, #tpu.memory_space<vmem>>, %arg3: memref<1x16xf32, #tpu.memory_space<vmem>>, %arg4: memref<80x32xf32, #tpu.memory_space<vmem>>, %arg5: memref<1x32xf32, #tpu.memory_space<vmem>>, %arg6: memref<96x64xf32, #tpu.memory_space<vmem>>, %arg7: memref<1x64xf32, #tpu.memory_space<vmem>>, %arg8: memref<1x25x64xf32, #tpu.memory_space<vmem>>, %arg9: memref<506x1xf32, #tpu.memory_space<vmem>>, %arg10: memref<500x16xf32, #tpu.memory_space<vmem>>, %arg11: memref<254x16xf32, #tpu.memory_space<vmem>>, %arg12: memref<250x32xf32, #tpu.memory_space<vmem>>, %arg13: memref<127x32xf32, #tpu.memory_space<vmem>>, %arg14: memref<125x64xf32, #tpu.memory_space<vmem>>) attributes {dimension_semantics = [#tpu.dimension_semantics<parallel>], iteration_bounds = array<i64: 8>, scalar_prefetch = 0 : i64, scratch_operands = 6 : i64, tpu.core_type = #tpu.core_type<tc>, window_params = [{transform_indices = @transform_0, window_bounds = array<i64: 1, 500, 1>}, {pipeline_mode = #tpu.pipeline_mode<synchronous>, transform_indices = @transform_1, window_bounds = array<i64: 7, 16>}, {pipeline_mode = #tpu.pipeline_mode<synchronous>, transform_indices = @transform_2, window_bounds = array<i64: 1, 16>}, {pipeline_mode = #tpu.pipeline_mode<synchronous>, transform_indices = @transform_3, window_bounds = array<i64: 80, 32>}, {pipeline_mode = #tpu.pipeline_mode<synchronous>, transform_indices = @transform_4, window_bounds = array<i64: 1, 32>}, {pipeline_mode = #tpu.pipeline_mode<synchronous>, transform_indices = @transform_5, window_bounds = array<i64: 96, 64>}, {pipeline_mode = #tpu.pipeline_mode<synchronous>, transform_indices = @transform_6, window_bounds = array<i64: 1, 64>}, {transform_indices = @transform_7, window_bounds = array<i64: 1, 25, 64>}]} {
    %c0 = arith.constant 0 : index
    %c0_0 = arith.constant 0 : index
    %c0_1 = arith.constant 0 : index
    %0 = vector.load %arg1[%c0, %c0_0, %c0_1] : memref<1x500x1xf32, #tpu.memory_space<vmem>>, vector<1x500x1xf32>
    %1 = vector.shape_cast %0 : vector<1x500x1xf32> to vector<500x1xf32>
    %2 = vector.shape_cast %1 : vector<500x1xf32> to vector<1x500x1xf32>
    %cst = arith.constant dense<0.000000e+00> : vector<1xf32>
    %3 = vector.multi_reduction <add>, %2, %cst [1, 2] : vector<1x500x1xf32> to vector<1xf32>
    %4 = vector.shape_cast %3 : vector<1xf32> to vector<1x1x1xf32>
    %5 = vector.extract %4[0, 0, 0] : f32 from vector<1x1x1xf32>
    %cst_2 = arith.constant 5.000000e+02 : f32
    %6 = arith.divf %5, %cst_2 : f32
    %7 = vector.broadcast %6 : f32 to vector<500x1xf32>
    %8 = arith.subf %1, %7 : vector<500x1xf32>
    %9 = arith.mulf %8, %8 : vector<500x1xf32>
    %10 = vector.shape_cast %9 : vector<500x1xf32> to vector<1x500x1xf32>
    %cst_3 = arith.constant dense<0.000000e+00> : vector<1xf32>
    %11 = vector.multi_reduction <add>, %10, %cst_3 [1, 2] : vector<1x500x1xf32> to vector<1xf32>
    %12 = vector.shape_cast %11 : vector<1xf32> to vector<1x1x1xf32>
    %13 = vector.extract %12[0, 0, 0] : f32 from vector<1x1x1xf32>
    %cst_4 = arith.constant 4.990000e+02 : f32
    %14 = arith.divf %13, %cst_4 : f32
    %15 = math.sqrt %14 : f32
    %cst_5 = arith.constant 9.99999997E-7 : f32
    %16 = arith.addf %15, %cst_5 : f32
    %17 = vector.broadcast %16 : f32 to vector<500x1xf32>
    %18 = arith.divf %8, %17 : vector<500x1xf32>
    %cst_6 = arith.constant 0.000000e+00 : f32
    %19 = vector.broadcast %cst_6 : f32 to vector<3x1xf32>
    %c0_7 = arith.constant 0 : index
    %c0_8 = arith.constant 0 : index
    %20 = vector.load %arg9[%c0_7, %c0_8] : memref<506x1xf32, #tpu.memory_space<vmem>>, vector<3x1xf32>
    tpu.vector_store %arg9[%c0_7, %c0_8], %19 {strides = array<i32>} : memref<506x1xf32, #tpu.memory_space<vmem>>, vector<3x1xf32>,
    %cst_9 = arith.constant 0.000000e+00 : f32
    %21 = vector.broadcast %cst_9 : f32 to vector<3x1xf32>
    %c503 = arith.constant 503 : index
    %c0_10 = arith.constant 0 : index
    %22 = vector.load %arg9[%c503, %c0_10] : memref<506x1xf32, #tpu.memory_space<vmem>>, vector<3x1xf32>
    tpu.vector_store %arg9[%c503, %c0_10], %21 {strides = array<i32>} : memref<506x1xf32, #tpu.memory_space<vmem>>, vector<3x1xf32>,
    %c3 = arith.constant 3 : index
    %c0_11 = arith.constant 0 : index
    %23 = vector.load %arg9[%c3, %c0_11] : memref<506x1xf32, #tpu.memory_space<vmem>>, vector<500x1xf32>
    tpu.vector_store %arg9[%c3, %c0_11], %18 {strides = array<i32>} : memref<506x1xf32, #tpu.memory_space<vmem>>, vector<500x1xf32>,
    %c0_12 = arith.constant 0 : index
    %c0_13 = arith.constant 0 : index
    %24 = vector.load %arg9[%c0_12, %c0_13] : memref<506x1xf32, #tpu.memory_space<vmem>>, vector<500x1xf32>
    %c1 = arith.constant 1 : index
    %c0_14 = arith.constant 0 : index
    %25 = vector.load %arg9[%c1, %c0_14] : memref<506x1xf32, #tpu.memory_space<vmem>>, vector<500x1xf32>
    %c2 = arith.constant 2 : index
    %c0_15 = arith.constant 0 : index
    %26 = vector.load %arg9[%c2, %c0_15] : memref<506x1xf32, #tpu.memory_space<vmem>>, vector<500x1xf32>
    %c3_16 = arith.constant 3 : index
    %c0_17 = arith.constant 0 : index
    %27 = vector.load %arg9[%c3_16, %c0_17] : memref<506x1xf32, #tpu.memory_space<vmem>>, vector<500x1xf32>
    %c4 = arith.constant 4 : index
    %c0_18 = arith.constant 0 : index
    %28 = vector.load %arg9[%c4, %c0_18] : memref<506x1xf32, #tpu.memory_space<vmem>>, vector<500x1xf32>
    %c5 = arith.constant 5 : index
    %c0_19 = arith.constant 0 : index
    %29 = vector.load %arg9[%c5, %c0_19] : memref<506x1xf32, #tpu.memory_space<vmem>>, vector<500x1xf32>
    %c6 = arith.constant 6 : index
    %c0_20 = arith.constant 0 : index
    %30 = vector.load %arg9[%c6, %c0_20] : memref<506x1xf32, #tpu.memory_space<vmem>>, vector<500x1xf32>
    %31 = tpu.concatenate %24, %25, %26, %27, %28, %29, %30 in 1 : vector<500x1xf32>, vector<500x1xf32>, vector<500x1xf32>, vector<500x1xf32>, vector<500x1xf32>, vector<500x1xf32>, vector<500x1xf32> -> vector<500x7xf32>
    %c0_21 = arith.constant 0 : index
    %c0_22 = arith.constant 0 : index
    %32 = vector.load %arg2[%c0_21, %c0_22] : memref<7x16xf32, #tpu.memory_space<vmem>>, vector<7x16xf32>
    %cst_23 = arith.constant dense<0.000000e+00> : vector<500x16xf32>
    %33 = tpu.matmul %31, %32, %cst_23 {dimension_numbers = #tpu.dot_dimension_numbers<[1], [0], [0], [1], [0, 0, 1, 1], [], []>} : vector<500x7xf32>, vector<7x16xf32>, vector<500x16xf32> -> vector<500x16xf32>
    %c0_24 = arith.constant 0 : index
    %c0_25 = arith.constant 0 : index
    %34 = vector.load %arg3[%c0_24, %c0_25] : memref<1x16xf32, #tpu.memory_space<vmem>>, vector<1x16xf32>
    %35 = vector.broadcast %34 : vector<1x16xf32> to vector<500x16xf32>
    %36 = arith.addf %33, %35 : vector<500x16xf32>
    %cst_26 = arith.constant 0.000000e+00 : f32
    %37 = vector.broadcast %cst_26 : f32 to vector<500x16xf32>
    %38 = arith.maximumf %36, %37 : vector<500x16xf32>
    %c0_27 = arith.constant 0 : index
    %c0_28 = arith.constant 0 : index
    %39 = vector.load %arg10[%c0_27, %c0_28] : memref<500x16xf32, #tpu.memory_space<vmem>>, vector<500x16xf32>
    tpu.vector_store %arg10[%c0_27, %c0_28], %38 {strides = array<i32>} : memref<500x16xf32, #tpu.memory_space<vmem>>, vector<500x16xf32>,
    %c0_29 = arith.constant 0 : index
    %c0_30 = arith.constant 0 : index
    %40 = tpu.strided_load %arg10[%c0_29, %c0_30] {strides = array<i32: 2, 1>} : memref<500x16xf32, #tpu.memory_space<vmem>>, vector<250x16xf32>
    %c1_31 = arith.constant 1 : index
    %c0_32 = arith.constant 0 : index
    %41 = tpu.strided_load %arg10[%c1_31, %c0_32] {strides = array<i32: 2, 1>} : memref<500x16xf32, #tpu.memory_space<vmem>>, vector<250x16xf32>
    %42 = arith.maximumf %40, %41 : vector<250x16xf32>
    %cst_33 = arith.constant 0.000000e+00 : f32
    %43 = vector.broadcast %cst_33 : f32 to vector<2x16xf32>
    %c0_34 = arith.constant 0 : index
    %c0_35 = arith.constant 0 : index
    %44 = vector.load %arg11[%c0_34, %c0_35] : memref<254x16xf32, #tpu.memory_space<vmem>>, vector<2x16xf32>
    tpu.vector_store %arg11[%c0_34, %c0_35], %43 {strides = array<i32>} : memref<254x16xf32, #tpu.memory_space<vmem>>, vector<2x16xf32>,
    %cst_36 = arith.constant 0.000000e+00 : f32
    %45 = vector.broadcast %cst_36 : f32 to vector<2x16xf32>
    %c252 = arith.constant 252 : index
    %c0_37 = arith.constant 0 : index
    %46 = vector.load %arg11[%c252, %c0_37] : memref<254x16xf32, #tpu.memory_space<vmem>>, vector<2x16xf32>
    tpu.vector_store %arg11[%c252, %c0_37], %45 {strides = array<i32>} : memref<254x16xf32, #tpu.memory_space<vmem>>, vector<2x16xf32>,
    %c2_38 = arith.constant 2 : index
    %c0_39 = arith.constant 0 : index
    %47 = vector.load %arg11[%c2_38, %c0_39] : memref<254x16xf32, #tpu.memory_space<vmem>>, vector<250x16xf32>
    tpu.vector_store %arg11[%c2_38, %c0_39], %42 {strides = array<i32>} : memref<254x16xf32, #tpu.memory_space<vmem>>, vector<250x16xf32>,
    %c0_40 = arith.constant 0 : index
    %c0_41 = arith.constant 0 : index
    %48 = vector.load %arg11[%c0_40, %c0_41] : memref<254x16xf32, #tpu.memory_space<vmem>>, vector<250x16xf32>
    %c1_42 = arith.constant 1 : index
    %c0_43 = arith.constant 0 : index
    %49 = vector.load %arg11[%c1_42, %c0_43] : memref<254x16xf32, #tpu.memory_space<vmem>>, vector<250x16xf32>
    %c2_44 = arith.constant 2 : index
    %c0_45 = arith.constant 0 : index
    %50 = vector.load %arg11[%c2_44, %c0_45] : memref<254x16xf32, #tpu.memory_space<vmem>>, vector<250x16xf32>
    %c3_46 = arith.constant 3 : index
    %c0_47 = arith.constant 0 : index
    %51 = vector.load %arg11[%c3_46, %c0_47] : memref<254x16xf32, #tpu.memory_space<vmem>>, vector<250x16xf32>
    %c4_48 = arith.constant 4 : index
    %c0_49 = arith.constant 0 : index
    %52 = vector.load %arg11[%c4_48, %c0_49] : memref<254x16xf32, #tpu.memory_space<vmem>>, vector<250x16xf32>
    %53 = tpu.concatenate %48, %49, %50, %51, %52 in 1 : vector<250x16xf32>, vector<250x16xf32>, vector<250x16xf32>, vector<250x16xf32>, vector<250x16xf32> -> vector<250x80xf32>
    %c0_50 = arith.constant 0 : index
    %c0_51 = arith.constant 0 : index
    %54 = vector.load %arg4[%c0_50, %c0_51] : memref<80x32xf32, #tpu.memory_space<vmem>>, vector<80x32xf32>
    %cst_52 = arith.constant dense<0.000000e+00> : vector<250x32xf32>
    %55 = tpu.matmul %53, %54, %cst_52 {dimension_numbers = #tpu.dot_dimension_numbers<[1], [0], [0], [1], [0, 0, 1, 1], [], []>} : vector<250x80xf32>, vector<80x32xf32>, vector<250x32xf32> -> vector<250x32xf32>
    %c0_53 = arith.constant 0 : index
    %c0_54 = arith.constant 0 : index
    %56 = vector.load %arg5[%c0_53, %c0_54] : memref<1x32xf32, #tpu.memory_space<vmem>>, vector<1x32xf32>
    %57 = vector.broadcast %56 : vector<1x32xf32> to vector<250x32xf32>
    %58 = arith.addf %55, %57 : vector<250x32xf32>
    %cst_55 = arith.constant 0.000000e+00 : f32
    %59 = vector.broadcast %cst_55 : f32 to vector<250x32xf32>
    %60 = arith.maximumf %58, %59 : vector<250x32xf32>
    %c0_56 = arith.constant 0 : index
    %c0_57 = arith.constant 0 : index
    %61 = vector.load %arg12[%c0_56, %c0_57] : memref<250x32xf32, #tpu.memory_space<vmem>>, vector<250x32xf32>
    tpu.vector_store %arg12[%c0_56, %c0_57], %60 {strides = array<i32>} : memref<250x32xf32, #tpu.memory_space<vmem>>, vector<250x32xf32>,
    %c0_58 = arith.constant 0 : index
    %c0_59 = arith.constant 0 : index
    %62 = tpu.strided_load %arg12[%c0_58, %c0_59] {strides = array<i32: 2, 1>} : memref<250x32xf32, #tpu.memory_space<vmem>>, vector<125x32xf32>
    %c1_60 = arith.constant 1 : index
    %c0_61 = arith.constant 0 : index
    %63 = tpu.strided_load %arg12[%c1_60, %c0_61] {strides = array<i32: 2, 1>} : memref<250x32xf32, #tpu.memory_space<vmem>>, vector<125x32xf32>
    %64 = arith.maximumf %62, %63 : vector<125x32xf32>
    %cst_62 = arith.constant 0.000000e+00 : f32
    %65 = vector.broadcast %cst_62 : f32 to vector<1x32xf32>
    %c0_63 = arith.constant 0 : index
    %c0_64 = arith.constant 0 : index
    %66 = vector.load %arg13[%c0_63, %c0_64] : memref<127x32xf32, #tpu.memory_space<vmem>>, vector<1x32xf32>
    tpu.vector_store %arg13[%c0_63, %c0_64], %65 {strides = array<i32>} : memref<127x32xf32, #tpu.memory_space<vmem>>, vector<1x32xf32>,
    %cst_65 = arith.constant 0.000000e+00 : f32
    %67 = vector.broadcast %cst_65 : f32 to vector<1x32xf32>
    %c126 = arith.constant 126 : index
    %c0_66 = arith.constant 0 : index
    %68 = vector.load %arg13[%c126, %c0_66] : memref<127x32xf32, #tpu.memory_space<vmem>>, vector<1x32xf32>
    tpu.vector_store %arg13[%c126, %c0_66], %67 {strides = array<i32>} : memref<127x32xf32, #tpu.memory_space<vmem>>, vector<1x32xf32>,
    %c1_67 = arith.constant 1 : index
    %c0_68 = arith.constant 0 : index
    %69 = vector.load %arg13[%c1_67, %c0_68] : memref<127x32xf32, #tpu.memory_space<vmem>>, vector<125x32xf32>
    tpu.vector_store %arg13[%c1_67, %c0_68], %64 {strides = array<i32>} : memref<127x32xf32, #tpu.memory_space<vmem>>, vector<125x32xf32>,
    %c0_69 = arith.constant 0 : index
    %c0_70 = arith.constant 0 : index
    %70 = vector.load %arg13[%c0_69, %c0_70] : memref<127x32xf32, #tpu.memory_space<vmem>>, vector<125x32xf32>
    %c1_71 = arith.constant 1 : index
    %c0_72 = arith.constant 0 : index
    %71 = vector.load %arg13[%c1_71, %c0_72] : memref<127x32xf32, #tpu.memory_space<vmem>>, vector<125x32xf32>
    %c2_73 = arith.constant 2 : index
    %c0_74 = arith.constant 0 : index
    %72 = vector.load %arg13[%c2_73, %c0_74] : memref<127x32xf32, #tpu.memory_space<vmem>>, vector<125x32xf32>
    %73 = tpu.concatenate %70, %71, %72 in 1 : vector<125x32xf32>, vector<125x32xf32>, vector<125x32xf32> -> vector<125x96xf32>
    %c0_75 = arith.constant 0 : index
    %c0_76 = arith.constant 0 : index
    %74 = vector.load %arg6[%c0_75, %c0_76] : memref<96x64xf32, #tpu.memory_space<vmem>>, vector<96x64xf32>
    %cst_77 = arith.constant dense<0.000000e+00> : vector<125x64xf32>
    %75 = tpu.matmul %73, %74, %cst_77 {dimension_numbers = #tpu.dot_dimension_numbers<[1], [0], [0], [1], [0, 0, 1, 1], [], []>} : vector<125x96xf32>, vector<96x64xf32>, vector<125x64xf32> -> vector<125x64xf32>
    %c0_78 = arith.constant 0 : index
    %c0_79 = arith.constant 0 : index
    %76 = vector.load %arg7[%c0_78, %c0_79] : memref<1x64xf32, #tpu.memory_space<vmem>>, vector<1x64xf32>
    %77 = vector.broadcast %76 : vector<1x64xf32> to vector<125x64xf32>
    %78 = arith.addf %75, %77 : vector<125x64xf32>
    %cst_80 = arith.constant 0.000000e+00 : f32
    %79 = vector.broadcast %cst_80 : f32 to vector<125x64xf32>
    %80 = arith.maximumf %78, %79 : vector<125x64xf32>
    %c0_81 = arith.constant 0 : index
    %c0_82 = arith.constant 0 : index
    %81 = vector.load %arg14[%c0_81, %c0_82] : memref<125x64xf32, #tpu.memory_space<vmem>>, vector<125x64xf32>
    tpu.vector_store %arg14[%c0_81, %c0_82], %80 {strides = array<i32>} : memref<125x64xf32, #tpu.memory_space<vmem>>, vector<125x64xf32>,
    %c0_83 = arith.constant 0 : index
    %c0_84 = arith.constant 0 : index
    %82 = tpu.strided_load %arg14[%c0_83, %c0_84] {strides = array<i32: 5, 1>} : memref<125x64xf32, #tpu.memory_space<vmem>>, vector<25x64xf32>
    %c1_85 = arith.constant 1 : index
    %c0_86 = arith.constant 0 : index
    %83 = tpu.strided_load %arg14[%c1_85, %c0_86] {strides = array<i32: 5, 1>} : memref<125x64xf32, #tpu.memory_space<vmem>>, vector<25x64xf32>
    %84 = arith.maximumf %82, %83 : vector<25x64xf32>
    %c2_87 = arith.constant 2 : index
    %c0_88 = arith.constant 0 : index
    %85 = tpu.strided_load %arg14[%c2_87, %c0_88] {strides = array<i32: 5, 1>} : memref<125x64xf32, #tpu.memory_space<vmem>>, vector<25x64xf32>
    %86 = arith.maximumf %84, %85 : vector<25x64xf32>
    %c3_89 = arith.constant 3 : index
    %c0_90 = arith.constant 0 : index
    %87 = tpu.strided_load %arg14[%c3_89, %c0_90] {strides = array<i32: 5, 1>} : memref<125x64xf32, #tpu.memory_space<vmem>>, vector<25x64xf32>
    %88 = arith.maximumf %86, %87 : vector<25x64xf32>
    %c4_91 = arith.constant 4 : index
    %c0_92 = arith.constant 0 : index
    %89 = tpu.strided_load %arg14[%c4_91, %c0_92] {strides = array<i32: 5, 1>} : memref<125x64xf32, #tpu.memory_space<vmem>>, vector<25x64xf32>
    %90 = arith.maximumf %88, %89 : vector<25x64xf32>
    %c0_93 = arith.constant 0 : index
    %c0_94 = arith.constant 0 : index
    %c0_95 = arith.constant 0 : index
    %91 = vector.load %arg8[%c0_93, %c0_94, %c0_95] : memref<1x25x64xf32, #tpu.memory_space<vmem>>, vector<1x25x64xf32>
    %92 = vector.shape_cast %91 : vector<1x25x64xf32> to vector<25x64xf32>
    %93 = vector.shape_cast %90 : vector<25x64xf32> to vector<1x25x64xf32>
    tpu.vector_store %arg8[%c0_93, %c0_94, %c0_95], %93 {strides = array<i32>} : memref<1x25x64xf32, #tpu.memory_space<vmem>>, vector<1x25x64xf32>,
    return
  }
  func.func @transform_0(%arg0: i32) -> (i32, i32, i32) {
    %c0_i32 = arith.constant 0 : i32
    %c0_i32_0 = arith.constant 0 : i32
    %c0_i32_1 = arith.constant 0 : i32
    return %arg0, %c0_i32, %c0_i32_0 : i32, i32, i32
  }
  func.func @transform_1(%arg0: i32) -> (i32, i32) {
    %c0_i32 = arith.constant 0 : i32
    %c0_i32_0 = arith.constant 0 : i32
    %c0_i32_1 = arith.constant 0 : i32
    return %c0_i32, %c0_i32_0 : i32, i32
  }
  func.func @transform_2(%arg0: i32) -> (i32, i32) {
    %c0_i32 = arith.constant 0 : i32
    %c0_i32_0 = arith.constant 0 : i32
    %c0_i32_1 = arith.constant 0 : i32
    return %c0_i32, %c0_i32_0 : i32, i32
  }
  func.func @transform_3(%arg0: i32) -> (i32, i32) {
    %c0_i32 = arith.constant 0 : i32
    %c0_i32_0 = arith.constant 0 : i32
    %c0_i32_1 = arith.constant 0 : i32
    return %c0_i32, %c0_i32_0 : i32, i32
  }
  func.func @transform_4(%arg0: i32) -> (i32, i32) {
    %c0_i32 = arith.constant 0 : i32
    %c0_i32_0 = arith.constant 0 : i32
    %c0_i32_1 = arith.constant 0 : i32
    return %c0_i32, %c0_i32_0 : i32, i32
  }
  func.func @transform_5(%arg0: i32) -> (i32, i32) {
    %c0_i32 = arith.constant 0 : i32
    %c0_i32_0 = arith.constant 0 : i32
    %c0_i32_1 = arith.constant 0 : i32
    return %c0_i32, %c0_i32_0 : i32, i32
  }
  func.func @transform_6(%arg0: i32) -> (i32, i32) {
    %c0_i32 = arith.constant 0 : i32
    %c0_i32_0 = arith.constant 0 : i32
    %c0_i32_1 = arith.constant 0 : i32
    return %c0_i32, %c0_i32_0 : i32, i32
  }
  func.func @transform_7(%arg0: i32) -> (i32, i32, i32) {
    %c0_i32 = arith.constant 0 : i32
    %c0_i32_0 = arith.constant 0 : i32
    %c0_i32_1 = arith.constant 0 : i32
    return %arg0, %c0_i32, %c0_i32_0 : i32, i32, i32
  }
}

</mosaic_0001>

<llo_original>
// kernel: tpu_custom_call.1
$region0: #{tpu_custom_call.1}
  #allocation0 [shape = 'u32[]', space=smem, size = 0x4, offset = 0x4, fixed_abs, tag = 'smem constant byte address 0x4 - core index']
  #allocation1 [shape = 'u32[72,128]{1,0:T(1,128)}', space=vmem, size = 0x9000, scoped, tag = 'internal scratch']
  #allocation2 [shape = 'f32[506,1]{1,0:T(8,128)}', space=vmem, size = 0x40000, scoped, tag = 'scratch operand']
  #allocation3 [shape = 'f32[500,16]{1,0:T(8,128)}', space=vmem, size = 0x3f000, scoped, tag = 'scratch operand']
  #allocation4 [shape = 'f32[254,16]{1,0:T(8,128)}', space=vmem, size = 0x20000, scoped, tag = 'scratch operand']
  #allocation5 [shape = 'f32[250,32]{1,0:T(8,128)}', space=vmem, size = 0x20000, scoped, tag = 'scratch operand']
  #allocation6 [shape = 'f32[127,32]{1,0:T(8,128)}', space=vmem, size = 0x10000, scoped, tag = 'scratch operand']
  #allocation7 [shape = 'f32[125,64]{1,0:T(8,128)}', space=vmem, size = 0x10000, scoped, tag = 'scratch operand']
  %s0 = inlined_call_operand.vmem [shape: f32[8,500,1], index: 0, kind: input, shape index: {}]
  %s1 = inlined_call_operand.vmem [shape: f32[7,16], index: 1, kind: input, shape index: {}]
  %s2 = inlined_call_operand.vmem [shape: f32[1,16], index: 2, kind: input, shape index: {}]
  %s3 = inlined_call_operand.vmem [shape: f32[80,32], index: 3, kind: input, shape index: {}]
  %s4 = inlined_call_operand.vmem [shape: f32[1,32], index: 4, kind: input, shape index: {}]
  %s5 = inlined_call_operand.vmem [shape: f32[96,64], index: 5, kind: input, shape index: {}]
  %s6 = inlined_call_operand.vmem [shape: f32[1,64], index: 6, kind: input, shape index: {}]
  %s7 = inlined_call_operand.vmem [shape: f32[8,25,64], index: 7, kind: output, shape index: {}]
  %s8 = sld [smem:[#allocation0]]
  $region61: #{tpu_custom_call.1} parent=0
    _
  %s10 = ssub.s32 1, %s8
  %s11 = scalar_select 0, %s10, %s8
  loop: start=0, step=1, limit=10
  $region2: #{tpu_custom_call.1} parent=0 // loop_pre_header
    _
  $region3: #{tpu_custom_call.1} parent=0 // loop_header
    %s13 = sphi 0, %s17
    %p14 = scmp.ge.s32.totalorder %s13, 10
    %s23 = sphi 0, %s25
    %s26 = sphi 0, %s23
    %s27 = sphi 0, %s26
    %s43 = sphi 0, %s27
    %s47 = sphi 0, %s47
    %s49 = sphi 0, %s47
    %s50 = sphi 0, %s49
    %s64 = sphi 0, %s50
    %s68 = sphi 0, %s68
    %s70 = sphi 0, %s68
    %s71 = sphi 0, %s70
    %s85 = sphi 0, %s71
    %s89 = sphi 0, %s89
    %s91 = sphi 0, %s89
    %s92 = sphi 0, %s91
    %s106 = sphi 0, %s92
    %s110 = sphi 0, %s110
    %s112 = sphi 0, %s110
    %s113 = sphi 0, %s112
    %s127 = sphi 0, %s113
    %s131 = sphi 0, %s131
    %s133 = sphi 0, %s131
    %s134 = sphi 0, %s133
    %s148 = sphi 0, %s134
    %s152 = sphi 0, %s152
    %s154 = sphi 0, %s152
    %s155 = sphi 0, %s154
    %s169 = sphi 0, %s155
    %s175 = sphi 0, %s177
    %s178 = sphi 0, %s175
    %s179 = sphi 0, %s178
    %s195 = sphi 0, %s179
  $region4: #{tpu_custom_call.1} parent=0 // loop_header_branch
    %16 = sbr.rel (%p14) target = $region8
  $region5: #{tpu_custom_call.1} parent=0 // loop_body
    %s18 = ssub.s32 %s13, 1
    %s19 = ssub.s32 %s13, 2
    %s20 = sadd.s32 %s13, 1
    %s21 = ssub.s32 %s13, %s20
    %p22 = scmp.eq.s32.totalorder %s21, 0
    %s24 = sadd.s32 %s23, 1
    %s25 = scalar_select %p22, %s23, %s24
    %p28 = pneg %p22
    %p29 = scmp.eq.s32.totalorder %s13, 7
    %p30 = por %p28, %p29
    %p31 = scmp.ne.s32.totalorder %s23, %s26
    %p32 = scmp.eq.s32.totalorder %s13, 0
    %p33 = por %p31, %p32
    %p34 = scmp.ne.s32.totalorder %s23, %s26
    %p35 = scmp.eq.s32.totalorder %s18, 7
    %p36 = por %p34, %p35
    %p37 = scmp.ne.s32.totalorder %s26, %s27
    %p38 = scmp.eq.s32.totalorder %s18, 0
    %p39 = por %p37, %p38
    %p40 = scmp.ne.s32.totalorder %s26, %s27
    %p41 = scmp.eq.s32.totalorder %s19, 7
    %p42 = por %p40, %p41
    %p44 = scmp.ne.s32.totalorder %s27, %s43
    %p45 = scmp.eq.s32.totalorder %s19, 0
    %p46 = por %p44, %p45
    %s48 = sadd.s32 %s47, 1
    %p51 = scmp.eq.s32.totalorder %s13, 7
    %p52 = scmp.ne.s32.totalorder %s47, %s49
    %p53 = scmp.eq.s32.totalorder %s13, 0
    %p54 = por %p52, %p53
    %p55 = scmp.ne.s32.totalorder %s47, %s49
    %p56 = scmp.eq.s32.totalorder %s18, 7
    %p57 = por %p55, %p56
    %p58 = scmp.ne.s32.totalorder %s49, %s50
    %p59 = scmp.eq.s32.totalorder %s18, 0
    %p60 = por %p58, %p59
    %p61 = scmp.ne.s32.totalorder %s49, %s50
    %p62 = scmp.eq.s32.totalorder %s19, 7
    %p63 = por %p61, %p62
    %p65 = scmp.ne.s32.totalorder %s50, %s64
    %p66 = scmp.eq.s32.totalorder %s19, 0
    %p67 = por %p65, %p66
    %s69 = sadd.s32 %s68, 1
    %p72 = scmp.eq.s32.totalorder %s13, 7
    %p73 = scmp.ne.s32.totalorder %s68, %s70
    %p74 = scmp.eq.s32.totalorder %s13, 0
    %p75 = por %p73, %p74
    %p76 = scmp.ne.s32.totalorder %s68, %s70
    %p77 = scmp.eq.s32.totalorder %s18, 7
    %p78 = por %p76, %p77
    %p79 = scmp.ne.s32.totalorder %s70, %s71
    %p80 = scmp.eq.s32.totalorder %s18, 0
    %p81 = por %p79, %p80
    %p82 = scmp.ne.s32.totalorder %s70, %s71
    %p83 = scmp.eq.s32.totalorder %s19, 7
    %p84 = por %p82, %p83
    %p86 = scmp.ne.s32.totalorder %s71, %s85
    %p87 = scmp.eq.s32.totalorder %s19, 0
    %p88 = por %p86, %p87
    %s90 = sadd.s32 %s89, 1
    %p93 = scmp.eq.s32.totalorder %s13, 7
    %p94 = scmp.ne.s32.totalorder %s89, %s91
    %p95 = scmp.eq.s32.totalorder %s13, 0
    %p96 = por %p94, %p95
    %p97 = scmp.ne.s32.totalorder %s89, %s91
    %p98 = scmp.eq.s32.totalorder %s18, 7
    %p99 = por %p97, %p98
    %p100 = scmp.ne.s32.totalorder %s91, %s92
    %p101 = scmp.eq.s32.totalorder %s18, 0
    %p102 = por %p100, %p101
    %p103 = scmp.ne.s32.totalorder %s91, %s92
    %p104 = scmp.eq.s32.totalorder %s19, 7
    %p105 = por %p103, %p104
    %p107 = scmp.ne.s32.totalorder %s92, %s106
    %p108 = scmp.eq.s32.totalorder %s19, 0
    %p109 = por %p107, %p108
    %s111 = sadd.s32 %s110, 1
    %p114 = scmp.eq.s32.totalorder %s13, 7
    %p115 = scmp.ne.s32.totalorder %s110, %s112
    %p116 = scmp.eq.s32.totalorder %s13, 0
    %p117 = por %p115, %p116
    %p118 = scmp.ne.s32.totalorder %s110, %s112
    %p119 = scmp.eq.s32.totalorder %s18, 7
    %p120 = por %p118, %p119
    %p121 = scmp.ne.s32.totalorder %s112, %s113
    %p122 = scmp.eq.s32.totalorder %s18, 0
    %p123 = por %p121, %p122
    %p124 = scmp.ne.s32.totalorder %s112, %s113
    %p125 = scmp.eq.s32.totalorder %s19, 7
    %p126 = por %p124, %p125
    %p128 = scmp.ne.s32.totalorder %s113, %s127
    %p129 = scmp.eq.s32.totalorder %s19, 0
    %p130 = por %p128, %p129
    %s132 = sadd.s32 %s131, 1
    %p135 = scmp.eq.s32.totalorder %s13, 7
    %p136 = scmp.ne.s32.totalorder %s131, %s133
    %p137 = scmp.eq.s32.totalorder %s13, 0
    %p138 = por %p136, %p137
    %p139 = scmp.ne.s32.totalorder %s131, %s133
    %p140 = scmp.eq.s32.totalorder %s18, 7
    %p141 = por %p139, %p140
    %p142 = scmp.ne.s32.totalorder %s133, %s134
    %p143 = scmp.eq.s32.totalorder %s18, 0
    %p144 = por %p142, %p143
    %p145 = scmp.ne.s32.totalorder %s133, %s134
    %p146 = scmp.eq.s32.totalorder %s19, 7
    %p147 = por %p145, %p146
    %p149 = scmp.ne.s32.totalorder %s134, %s148
    %p150 = scmp.eq.s32.totalorder %s19, 0
    %p151 = por %p149, %p150
    %s153 = sadd.s32 %s152, 1
    %p156 = scmp.eq.s32.totalorder %s13, 7
    %p157 = scmp.ne.s32.totalorder %s152, %s154
    %p158 = scmp.eq.s32.totalorder %s13, 0
    %p159 = por %p157, %p158
    %p160 = scmp.ne.s32.totalorder %s152, %s154
    %p161 = scmp.eq.s32.totalorder %s18, 7
    %p162 = por %p160, %p161
    %p163 = scmp.ne.s32.totalorder %s154, %s155
    %p164 = scmp.eq.s32.totalorder %s18, 0
    %p165 = por %p163, %p164
    %p166 = scmp.ne.s32.totalorder %s154, %s155
    %p167 = scmp.eq.s32.totalorder %s19, 7
    %p168 = por %p166, %p167
    %p170 = scmp.ne.s32.totalorder %s155, %s169
    %p171 = scmp.eq.s32.totalorder %s19, 0
    %p172 = por %p170, %p171
    %s173 = ssub.s32 %s13, %s20
    %p174 = scmp.eq.s32.totalorder %s173, 0
    %s176 = sadd.s32 %s175, 1
    %s177 = scalar_select %p174, %s175, %s176
    %p180 = pneg %p174
    %p181 = scmp.eq.s32.totalorder %s13, 7
    %p182 = por %p180, %p181
    %p183 = scmp.ne.s32.totalorder %s175, %s178
    %p184 = scmp.eq.s32.totalorder %s13, 0
    %p185 = por %p183, %p184
    %p186 = scmp.ne.s32.totalorder %s175, %s178
    %p187 = scmp.eq.s32.totalorder %s18, 7
    %p188 = por %p186, %p187
    %p189 = scmp.ne.s32.totalorder %s178, %s179
    %p190 = scmp.eq.s32.totalorder %s18, 0
    %p191 = por %p189, %p190
    %p192 = scmp.ne.s32.totalorder %s178, %s179
    %p193 = scmp.eq.s32.totalorder %s19, 7
    %p194 = por %p192, %p193
    %p196 = scmp.ne.s32.totalorder %s179, %s195
    %p197 = scmp.eq.s32.totalorder %s19, 0
    %p198 = por %p196, %p197
    %p199 = scmp.le.s32.totalorder 1, %s13
    %p200 = scmp.lt.s32.totalorder %s13, 9
    %p201 = pnand %p199, %p200
    %p202 = pneg %p201
    // Predicated region
    $region9: #{tpu_custom_call.1} parent=5 // pred_check
      _
    $region10: #{tpu_custom_call.1} parent=5 // pred_check_branch
      %204 = sbr.rel (%p201) target = $region12
    $region11: #{tpu_custom_call.1} parent=5 // pred_region
      %s205 = ssub.s32 %s13, 1
      // Predicated region
      $region13: #{tpu_custom_call.1} parent=11 // pred_check
        %p206 = pneg %p60
      $region14: #{tpu_custom_call.1} parent=11 // pred_check_branch
        %208 = sbr.rel (%p206) target = $region16
      $region15: #{tpu_custom_call.1} parent=11 // pred_region
        _
      $region16: #{tpu_custom_call.1} parent=11 // pred_fallthru
        _
      // Predicated region
      $region17: #{tpu_custom_call.1} parent=11 // pred_check
        %p209 = pneg %p81
      $region18: #{tpu_custom_call.1} parent=11 // pred_check_branch
        %211 = sbr.rel (%p209) target = $region20
      $region19: #{tpu_custom_call.1} parent=11 // pred_region
        _
      $region20: #{tpu_custom_call.1} parent=11 // pred_fallthru
        _
      // Predicated region
      $region21: #{tpu_custom_call.1} parent=11 // pred_check
        %p212 = pneg %p102
      $region22: #{tpu_custom_call.1} parent=11 // pred_check_branch
        %214 = sbr.rel (%p212) target = $region24
      $region23: #{tpu_custom_call.1} parent=11 // pred_region
        _
      $region24: #{tpu_custom_call.1} parent=11 // pred_fallthru
        _
      // Predicated region
      $region25: #{tpu_custom_call.1} parent=11 // pred_check
        %p215 = pneg %p123
      $region26: #{tpu_custom_call.1} parent=11 // pred_check_branch
        %217 = sbr.rel (%p215) target = $region28
      $region27: #{tpu_custom_call.1} parent=11 // pred_region
        _
      $region28: #{tpu_custom_call.1} parent=11 // pred_fallthru
        _
      // Predicated region
      $region29: #{tpu_custom_call.1} parent=11 // pred_check
        %p218 = pneg %p144
      $region30: #{tpu_custom_call.1} parent=11 // pred_check_branch
        %220 = sbr.rel (%p218) target = $region32
      $region31: #{tpu_custom_call.1} parent=11 // pred_region
        _
      $region32: #{tpu_custom_call.1} parent=11 // pred_fallthru
        _
      // Predicated region
      $region33: #{tpu_custom_call.1} parent=11 // pred_check
        %p221 = pneg %p165
      $region34: #{tpu_custom_call.1} parent=11 // pred_check_branch
        %223 = sbr.rel (%p221) target = $region36
      $region35: #{tpu_custom_call.1} parent=11 // pred_region
        _
      $region36: #{tpu_custom_call.1} parent=11 // pred_fallthru
        _
    $region12: #{tpu_custom_call.1} parent=5 // pred_fallthru
      _
    %p224 = scmp.lt.s32.totalorder %s13, 8
    // Predicated region
    $region37: #{tpu_custom_call.1} parent=5 // pred_check
      %p225 = pneg %p224
    $region38: #{tpu_custom_call.1} parent=5 // pred_check_branch
      %227 = sbr.rel (%p225) target = $region40
    $region39: #{tpu_custom_call.1} parent=5 // pred_region
      // Predicated region
      $region41: #{tpu_custom_call.1} parent=39 // pred_check
        %p228 = pneg %p33
      $region42: #{tpu_custom_call.1} parent=39 // pred_check_branch
        %230 = sbr.rel (%p228) target = $region44
      $region43: #{tpu_custom_call.1} parent=39 // pred_region
        %p231 = scmp.lt.s32.totalorder %s13, 7
        %s232 = scalar_select %p231, %s13, 7
        %s233 = smul.addr %s232, 63
        %s234 = smul.addr %s233, 8
        %s235 = scalar_lea.vmem %s0, %s234
      $region44: #{tpu_custom_call.1} parent=39 // pred_fallthru
        _
    $region40: #{tpu_custom_call.1} parent=5 // pred_fallthru
      _
    %p236 = scmp.le.s32.totalorder 1, %s13
    %p237 = scmp.lt.s32.totalorder %s13, 9
    %p238 = pnand %p236, %p237
    %p239 = pneg %p238
    // Predicated region
    $region45: #{tpu_custom_call.1} parent=5 // pred_check
      _
    $region46: #{tpu_custom_call.1} parent=5 // pred_check_branch
      %241 = sbr.rel (%p238) target = $region48
    $region47: #{tpu_custom_call.1} parent=5 // pred_region
      %s242 = ssub.s32 %s13, 1
      %p243 = scmp.lt.s32.totalorder %s18, 7
      %s244 = scalar_select %p243, %s18, 7
      %s245 = smul.addr %s244, 63
      %s246 = smul.addr %s245, 8
      %s247 = scalar_lea.vmem %s0, %s246
      %p248 = pneg %p39
      %p249 = pneg %p36
      %p250 = pneg %p60
      %p251 = pneg %p57
      %p252 = pneg %p81
      %p253 = pneg %p78
      %p254 = pneg %p102
      %p255 = pneg %p99
      %p256 = pneg %p123
      %p257 = pneg %p120
      %p258 = pneg %p144
      %p259 = pneg %p141
      %p260 = pneg %p165
      %p261 = pneg %p162
      %p262 = pneg %p191
      %p263 = pneg %p188
      %p264 = scmp.lt.s32.totalorder %s18, 7
      %s265 = scalar_select %p264, %s18, 7
      %s266 = smul.addr %s265, 4
      %s267 = smul.addr %s266, 8
      %s268 = scalar_lea.vmem %s7, %s267
      %p269 = scmp.lt.s32.totalorder %s18, 7
      %s270 = scalar_select %p269, %s18, 7
      %s271 = smul.addr %s270, 63
      %s272 = smul.addr %s271, 8
      %s273 = scalar_lea.vmem %s0, %s272
      %p274 = scmp.lt.s32.totalorder %s18, 7
      %s275 = scalar_select %p274, %s18, 7
      %s276 = smul.addr %s275, 4
      %s277 = smul.addr %s276, 8
      %s278 = scalar_lea.vmem %s7, %s277
      %v279 = vld [vmem:[%s273] sm:$0xff]
      %v280 = vld [vmem:[%s273 + $0x8] sm:$0xff]
      %v281 = vld [vmem:[%s273 + $0x10] sm:$0xff]
      %v282 = vld [vmem:[%s273 + $0x18] sm:$0xff]
      %v283 = vld [vmem:[%s273 + $0x20] sm:$0xff]
      %v284 = vld [vmem:[%s273 + $0x28] sm:$0xff]
      %v285 = vld [vmem:[%s273 + $0x30] sm:$0xff]
      %v286 = vld [vmem:[%s273 + $0x38] sm:$0xff]
      %v287 = vld [vmem:[%s273 + $0x40] sm:$0xff]
      %v288 = vld [vmem:[%s273 + $0x48] sm:$0xff]
      %v289 = vld [vmem:[%s273 + $0x50] sm:$0xff]
      %v290 = vld [vmem:[%s273 + $0x58] sm:$0xff]
      %v291 = vld [vmem:[%s273 + $0x60] sm:$0xff]
      %v292 = vld [vmem:[%s273 + $0x68] sm:$0xff]
      %v293 = vld [vmem:[%s273 + $0x70] sm:$0xff]
      %v294 = vld [vmem:[%s273 + $0x78] sm:$0xff]
      %v295 = vld [vmem:[%s273 + $0x80] sm:$0xff]
      %v296 = vld [vmem:[%s273 + $0x88] sm:$0xff]
      %v297 = vld [vmem:[%s273 + $0x90] sm:$0xff]
      %v298 = vld [vmem:[%s273 + $0x98] sm:$0xff]
      %v299 = vld [vmem:[%s273 + $0xa0] sm:$0xff]
      %v300 = vld [vmem:[%s273 + $0xa8] sm:$0xff]
      %v301 = vld [vmem:[%s273 + $0xb0] sm:$0xff]
      %v302 = vld [vmem:[%s273 + $0xb8] sm:$0xff]
      %v303 = vld [vmem:[%s273 + $0xc0] sm:$0xff]
      %v304 = vld [vmem:[%s273 + $0xc8] sm:$0xff]
      %v305 = vld [vmem:[%s273 + $0xd0] sm:$0xff]
      %v306 = vld [vmem:[%s273 + $0xd8] sm:$0xff]
      %v307 = vld [vmem:[%s273 + $0xe0] sm:$0xff]
      %v308 = vld [vmem:[%s273 + $0xe8] sm:$0xff]
      %v309 = vld [vmem:[%s273 + $0xf0] sm:$0xff]
      %v310 = vld [vmem:[%s273 + $0xf8] sm:$0xff]
      %v311 = vld [vmem:[%s273 + $0x100] sm:$0xff]
      %v312 = vld [vmem:[%s273 + $0x108] sm:$0xff]
      %v313 = vld [vmem:[%s273 + $0x110] sm:$0xff]
      %v314 = vld [vmem:[%s273 + $0x118] sm:$0xff]
      %v315 = vld [vmem:[%s273 + $0x120] sm:$0xff]
      %v316 = vld [vmem:[%s273 + $0x128] sm:$0xff]
      %v317 = vld [vmem:[%s273 + $0x130] sm:$0xff]
      %v318 = vld [vmem:[%s273 + $0x138] sm:$0xff]
      %v319 = vld [vmem:[%s273 + $0x140] sm:$0xff]
      %v320 = vld [vmem:[%s273 + $0x148] sm:$0xff]
      %v321 = vld [vmem:[%s273 + $0x150] sm:$0xff]
      %v322 = vld [vmem:[%s273 + $0x158] sm:$0xff]
      %v323 = vld [vmem:[%s273 + $0x160] sm:$0xff]
      %v324 = vld [vmem:[%s273 + $0x168] sm:$0xff]
      %v325 = vld [vmem:[%s273 + $0x170] sm:$0xff]
      %v326 = vld [vmem:[%s273 + $0x178] sm:$0xff]
      %v327 = vld [vmem:[%s273 + $0x180] sm:$0xff]
      %v328 = vld [vmem:[%s273 + $0x188] sm:$0xff]
      %v329 = vld [vmem:[%s273 + $0x190] sm:$0xff]
      %v330 = vld [vmem:[%s273 + $0x198] sm:$0xff]
      %v331 = vld [vmem:[%s273 + $0x1a0] sm:$0xff]
      %v332 = vld [vmem:[%s273 + $0x1a8] sm:$0xff]
      %v333 = vld [vmem:[%s273 + $0x1b0] sm:$0xff]
      %v334 = vld [vmem:[%s273 + $0x1b8] sm:$0xff]
      %v335 = vld [vmem:[%s273 + $0x1c0] sm:$0xff]
      %v336 = vld [vmem:[%s273 + $0x1c8] sm:$0xff]
      %v337 = vld [vmem:[%s273 + $0x1d0] sm:$0xff]
      %v338 = vld [vmem:[%s273 + $0x1d8] sm:$0xff]
      %v339 = vld [vmem:[%s273 + $0x1e0] sm:$0xff]
      %v340 = vld [vmem:[%s273 + $0x1e8] sm:$0xff]
      %v341 = vld [vmem:[%s273 + $0x1f0] sm:$0xf]
      %vm342 = vcmask 7168
      %v343 = vsel %vm342, %v279, 0.0
      %v344 = vsel %vm342, %v280, 0.0
      %v345 = vadd.f32 %v343, %v344
      %v346 = vsel %vm342, %v281, 0.0
      %v347 = vadd.f32 %v345, %v346
      %v348 = vsel %vm342, %v282, 0.0
      %v349 = vadd.f32 %v347, %v348
      %v350 = vsel %vm342, %v283, 0.0
      %v351 = vadd.f32 %v349, %v350
      %v352 = vsel %vm342, %v284, 0.0
      %v353 = vadd.f32 %v351, %v352
      %v354 = vsel %vm342, %v285, 0.0
      %v355 = vadd.f32 %v353, %v354
      %v356 = vsel %vm342, %v286, 0.0
      %v357 = vadd.f32 %v355, %v356
      %v358 = vsel %vm342, %v287, 0.0
      %v359 = vadd.f32 %v357, %v358
      %v360 = vsel %vm342, %v288, 0.0
      %v361 = vadd.f32 %v359, %v360
      %v362 = vsel %vm342, %v289, 0.0
      %v363 = vadd.f32 %v361, %v362
      %v364 = vsel %vm342, %v290, 0.0
      %v365 = vadd.f32 %v363, %v364
      %v366 = vsel %vm342, %v291, 0.0
      %v367 = vadd.f32 %v365, %v366
      %v368 = vsel %vm342, %v292, 0.0
      %v369 = vadd.f32 %v367, %v368
      %v370 = vsel %vm342, %v293, 0.0
      %v371 = vadd.f32 %v369, %v370
      %v372 = vsel %vm342, %v294, 0.0
      %v373 = vadd.f32 %v371, %v372
      %v374 = vsel %vm342, %v295, 0.0
      %v375 = vadd.f32 %v373, %v374
      %v376 = vsel %vm342, %v296, 0.0
      %v377 = vadd.f32 %v375, %v376
      %v378 = vsel %vm342, %v297, 0.0
      %v379 = vadd.f32 %v377, %v378
      %v380 = vsel %vm342, %v298, 0.0
      %v381 = vadd.f32 %v379, %v380
      %v382 = vsel %vm342, %v299, 0.0
      %v383 = vadd.f32 %v381, %v382
      %v384 = vsel %vm342, %v300, 0.0
      %v385 = vadd.f32 %v383, %v384
      %v386 = vsel %vm342, %v301, 0.0
      %v387 = vadd.f32 %v385, %v386
      %v388 = vsel %vm342, %v302, 0.0
      %v389 = vadd.f32 %v387, %v388
      %v390 = vsel %vm342, %v303, 0.0
      %v391 = vadd.f32 %v389, %v390
      %v392 = vsel %vm342, %v304, 0.0
      %v393 = vadd.f32 %v391, %v392
      %v394 = vsel %vm342, %v305, 0.0
      %v395 = vadd.f32 %v393, %v394
      %v396 = vsel %vm342, %v306, 0.0
      %v397 = vadd.f32 %v395, %v396
      %v398 = vsel %vm342, %v307, 0.0
      %v399 = vadd.f32 %v397, %v398
      %v400 = vsel %vm342, %v308, 0.0
      %v401 = vadd.f32 %v399, %v400
      %v402 = vsel %vm342, %v309, 0.0
      %v403 = vadd.f32 %v401, %v402
      %v404 = vsel %vm342, %v310, 0.0
      %v405 = vadd.f32 %v403, %v404
      %v406 = vsel %vm342, %v311, 0.0
      %v407 = vadd.f32 %v405, %v406
      %v408 = vsel %vm342, %v312, 0.0
      %v409 = vadd.f32 %v407, %v408
      %v410 = vsel %vm342, %v313, 0.0
      %v411 = vadd.f32 %v409, %v410
      %v412 = vsel %vm342, %v314, 0.0
      %v413 = vadd.f32 %v411, %v412
      %v414 = vsel %vm342, %v315, 0.0
      %v415 = vadd.f32 %v413, %v414
      %v416 = vsel %vm342, %v316, 0.0
      %v417 = vadd.f32 %v415, %v416
      %v418 = vsel %vm342, %v317, 0.0
      %v419 = vadd.f32 %v417, %v418
      %v420 = vsel %vm342, %v318, 0.0
      %v421 = vadd.f32 %v419, %v420
      %v422 = vsel %vm342, %v319, 0.0
      %v423 = vadd.f32 %v421, %v422
      %v424 = vsel %vm342, %v320, 0.0
      %v425 = vadd.f32 %v423, %v424
      %v426 = vsel %vm342, %v321, 0.0
      %v427 = vadd.f32 %v425, %v426
      %v428 = vsel %vm342, %v322, 0.0
      %v429 = vadd.f32 %v427, %v428
      %v430 = vsel %vm342, %v323, 0.0
      %v431 = vadd.f32 %v429, %v430
      %v432 = vsel %vm342, %v324, 0.0
      %v433 = vadd.f32 %v431, %v432
      %v434 = vsel %vm342, %v325, 0.0
      %v435 = vadd.f32 %v433, %v434
      %v436 = vsel %vm342, %v326, 0.0
      %v437 = vadd.f32 %v435, %v436
      %v438 = vsel %vm342, %v327, 0.0
      %v439 = vadd.f32 %v437, %v438
      %v440 = vsel %vm342, %v328, 0.0
      %v441 = vadd.f32 %v439, %v440
      %v442 = vsel %vm342, %v329, 0.0
      %v443 = vadd.f32 %v441, %v442
      %v444 = vsel %vm342, %v330, 0.0
      %v445 = vadd.f32 %v443, %v444
      %v446 = vsel %vm342, %v331, 0.0
      %v447 = vadd.f32 %v445, %v446
      %v448 = vsel %vm342, %v332, 0.0
      %v449 = vadd.f32 %v447, %v448
      %v450 = vsel %vm342, %v333, 0.0
      %v451 = vadd.f32 %v449, %v450
      %v452 = vsel %vm342, %v334, 0.0
      %v453 = vadd.f32 %v451, %v452
      %v454 = vsel %vm342, %v335, 0.0
      %v455 = vadd.f32 %v453, %v454
      %v456 = vsel %vm342, %v336, 0.0
      %v457 = vadd.f32 %v455, %v456
      %v458 = vsel %vm342, %v337, 0.0
      %v459 = vadd.f32 %v457, %v458
      %v460 = vsel %vm342, %v338, 0.0
      %v461 = vadd.f32 %v459, %v460
      %v462 = vsel %vm342, %v339, 0.0
      %v463 = vadd.f32 %v461, %v462
      %v464 = vsel %vm342, %v340, 0.0
      %v465 = vadd.f32 %v463, %v464
      %vm466 = vcmask 3072
      %v467 = vsel %vm466, %v341, 0.0
      %v468 = vadd.f32 %v465, %v467
      %469 = vadd.xlane.f32.xlu0 %v468
      %v470 = vpop.xlane.xlu0 %469
      %v471 = vrot.slane %v470, 4
      %v472 = vadd.f32 %v470, %v471
      %v473 = vrot.slane %v472, 2
      %v474 = vadd.f32 %v472, %v473
      %v475 = vrot.slane %v474, 1
      %v476 = vadd.f32 %v474, %v475
      %s477 = vtos %v476
      %v478 = vrcp.pop 500.0
      %v479 = vmul.f32 500.0, %v478
      %v480 = vsub.f32 1.0, %v479
      %v481 = vmul.f32 %v478, %v480
      %v482 = vadd.f32 %v478, %v481
      %vm483 = vweird.f32 %v478
      %v484 = vsel %vm483, %v478, %v482
      %s485 = vtos %v484
      %s486 = smul.f32 %s477, %s485
      %v487 = vstv %s486
      %v488 = vsub.f32 %v279, %v487
      %v489 = vsub.f32 %v280, %v487
      %v490 = vsub.f32 %v281, %v487
      %v491 = vsub.f32 %v282, %v487
      %v492 = vsub.f32 %v283, %v487
      %v493 = vsub.f32 %v284, %v487
      %v494 = vsub.f32 %v285, %v487
      %v495 = vsub.f32 %v286, %v487
      %v496 = vsub.f32 %v287, %v487
      %v497 = vsub.f32 %v288, %v487
      %v498 = vsub.f32 %v289, %v487
      %v499 = vsub.f32 %v290, %v487
      %v500 = vsub.f32 %v291, %v487
      %v501 = vsub.f32 %v292, %v487
      %v502 = vsub.f32 %v293, %v487
      %v503 = vsub.f32 %v294, %v487
      %v504 = vsub.f32 %v295, %v487
      %v505 = vsub.f32 %v296, %v487
      %v506 = vsub.f32 %v297, %v487
      %v507 = vsub.f32 %v298, %v487
      %v508 = vsub.f32 %v299, %v487
      %v509 = vsub.f32 %v300, %v487
      %v510 = vsub.f32 %v301, %v487
      %v511 = vsub.f32 %v302, %v487
      %v512 = vsub.f32 %v303, %v487
      %v513 = vsub.f32 %v304, %v487
      %v514 = vsub.f32 %v305, %v487
      %v515 = vsub.f32 %v306, %v487
      %v516 = vsub.f32 %v307, %v487
      %v517 = vsub.f32 %v308, %v487
      %v518 = vsub.f32 %v309, %v487
      %v519 = vsub.f32 %v310, %v487
      %v520 = vsub.f32 %v311, %v487
      %v521 = vsub.f32 %v312, %v487
      %v522 = vsub.f32 %v313, %v487
      %v523 = vsub.f32 %v314, %v487
      %v524 = vsub.f32 %v315, %v487
      %v525 = vsub.f32 %v316, %v487
      %v526 = vsub.f32 %v317, %v487
      %v527 = vsub.f32 %v318, %v487
      %v528 = vsub.f32 %v319, %v487
      %v529 = vsub.f32 %v320, %v487
      %v530 = vsub.f32 %v321, %v487
      %v531 = vsub.f32 %v322, %v487
      %v532 = vsub.f32 %v323, %v487
      %v533 = vsub.f32 %v324, %v487
      %v534 = vsub.f32 %v325, %v487
      %v535 = vsub.f32 %v326, %v487
      %v536 = vsub.f32 %v327, %v487
      %v537 = vsub.f32 %v328, %v487
      %v538 = vsub.f32 %v329, %v487
      %v539 = vsub.f32 %v330, %v487
      %v540 = vsub.f32 %v331, %v487
      %v541 = vsub.f32 %v332, %v487
      %v542 = vsub.f32 %v333, %v487
      %v543 = vsub.f32 %v334, %v487
      %v544 = vsub.f32 %v335, %v487
      %v545 = vsub.f32 %v336, %v487
      %v546 = vsub.f32 %v337, %v487
      %v547 = vsub.f32 %v338, %v487
      %v548 = vsub.f32 %v339, %v487
      %v549 = vsub.f32 %v340, %v487
      %v550 = vsub.f32 %v341, %v487
      %v551 = vmul.f32 %v488, %v488
      %v552 = vmul.f32 %v489, %v489
      %v553 = vmul.f32 %v490, %v490
      %v554 = vmul.f32 %v491, %v491
      %v555 = vmul.f32 %v492, %v492
      %v556 = vmul.f32 %v493, %v493
      %v557 = vmul.f32 %v494, %v494
      %v558 = vmul.f32 %v495, %v495
      %v559 = vmul.f32 %v496, %v496
      %v560 = vmul.f32 %v497, %v497
      %v561 = vmul.f32 %v498, %v498
      %v562 = vmul.f32 %v499, %v499
      %v563 = vmul.f32 %v500, %v500
      %v564 = vmul.f32 %v501, %v501
      %v565 = vmul.f32 %v502, %v502
      %v566 = vmul.f32 %v503, %v503
      %v567 = vmul.f32 %v504, %v504
      %v568 = vmul.f32 %v505, %v505
      %v569 = vmul.f32 %v506, %v506
      %v570 = vmul.f32 %v507, %v507
      %v571 = vmul.f32 %v508, %v508
      %v572 = vmul.f32 %v509, %v509
      %v573 = vmul.f32 %v510, %v510
      %v574 = vmul.f32 %v511, %v511
      %v575 = vmul.f32 %v512, %v512
      %v576 = vmul.f32 %v513, %v513
      %v577 = vmul.f32 %v514, %v514
      %v578 = vmul.f32 %v515, %v515
      %v579 = vmul.f32 %v516, %v516
      %v580 = vmul.f32 %v517, %v517
      %v581 = vmul.f32 %v518, %v518
      %v582 = vmul.f32 %v519, %v519
      %v583 = vmul.f32 %v520, %v520
      %v584 = vmul.f32 %v521, %v521
      %v585 = vmul.f32 %v522, %v522
      %v586 = vmul.f32 %v523, %v523
      %v587 = vmul.f32 %v524, %v524
      %v588 = vmul.f32 %v525, %v525
      %v589 = vmul.f32 %v526, %v526
      %v590 = vmul.f32 %v527, %v527
      %v591 = vmul.f32 %v528, %v528
      %v592 = vmul.f32 %v529, %v529
      %v593 = vmul.f32 %v530, %v530
      %v594 = vmul.f32 %v531, %v531
      %v595 = vmul.f32 %v532, %v532
      %v596 = vmul.f32 %v533, %v533
      %v597 = vmul.f32 %v534, %v534
      %v598 = vmul.f32 %v535, %v535
      %v599 = vmul.f32 %v536, %v536
      %v600 = vmul.f32 %v537, %v537
      %v601 = vmul.f32 %v538, %v538
      %v602 = vmul.f32 %v539, %v539
      %v603 = vmul.f32 %v540, %v540
      %v604 = vmul.f32 %v541, %v541
      %v605 = vmul.f32 %v542, %v542
      %v606 = vmul.f32 %v543, %v543
      %v607 = vmul.f32 %v544, %v544
      %v608 = vmul.f32 %v545, %v545
      %v609 = vmul.f32 %v546, %v546
      %v610 = vmul.f32 %v547, %v547
      %v611 = vmul.f32 %v548, %v548
      %v612 = vmul.f32 %v549, %v549
      %v613 = vmul.f32 %v550, %v550
      %v614 = vsel %vm342, %v551, 0.0
      %v615 = vsel %vm342, %v552, 0.0
      %v616 = vadd.f32 %v614, %v615
      %v617 = vsel %vm342, %v553, 0.0
      %v618 = vadd.f32 %v616, %v617
      %v619 = vsel %vm342, %v554, 0.0
      %v620 = vadd.f32 %v618, %v619
      %v621 = vsel %vm342, %v555, 0.0
      %v622 = vadd.f32 %v620, %v621
      %v623 = vsel %vm342, %v556, 0.0
      %v624 = vadd.f32 %v622, %v623
      %v625 = vsel %vm342, %v557, 0.0
      %v626 = vadd.f32 %v624, %v625
      %v627 = vsel %vm342, %v558, 0.0
      %v628 = vadd.f32 %v626, %v627
      %v629 = vsel %vm342, %v559, 0.0
      %v630 = vadd.f32 %v628, %v629
      %v631 = vsel %vm342, %v560, 0.0
      %v632 = vadd.f32 %v630, %v631
      %v633 = vsel %vm342, %v561, 0.0
      %v634 = vadd.f32 %v632, %v633
      %v635 = vsel %vm342, %v562, 0.0
      %v636 = vadd.f32 %v634, %v635
      %v637 = vsel %vm342, %v563, 0.0
      %v638 = vadd.f32 %v636, %v637
      %v639 = vsel %vm342, %v564, 0.0
      %v640 = vadd.f32 %v638, %v639
      %v641 = vsel %vm342, %v565, 0.0
      %v642 = vadd.f32 %v640, %v641
      %v643 = vsel %vm342, %v566, 0.0
      %v644 = vadd.f32 %v642, %v643
      %v645 = vsel %vm342, %v567, 0.0
      %v646 = vadd.f32 %v644, %v645
      %v647 = vsel %vm342, %v568, 0.0
      %v648 = vadd.f32 %v646, %v647
      %v649 = vsel %vm342, %v569, 0.0
      %v650 = vadd.f32 %v648, %v649
      %v651 = vsel %vm342, %v570, 0.0
      %v652 = vadd.f32 %v650, %v651
      %v653 = vsel %vm342, %v571, 0.0
      %v654 = vadd.f32 %v652, %v653
      %v655 = vsel %vm342, %v572, 0.0
      %v656 = vadd.f32 %v654, %v655
      %v657 = vsel %vm342, %v573, 0.0
      %v658 = vadd.f32 %v656, %v657
      %v659 = vsel %vm342, %v574, 0.0
      %v660 = vadd.f32 %v658, %v659
      %v661 = vsel %vm342, %v575, 0.0
      %v662 = vadd.f32 %v660, %v661
      %v663 = vsel %vm342, %v576, 0.0
      %v664 = vadd.f32 %v662, %v663
      %v665 = vsel %vm342, %v577, 0.0
      %v666 = vadd.f32 %v664, %v665
      %v667 = vsel %vm342, %v578, 0.0
      %v668 = vadd.f32 %v666, %v667
      %v669 = vsel %vm342, %v579, 0.0
      %v670 = vadd.f32 %v668, %v669
      %v671 = vsel %vm342, %v580, 0.0
      %v672 = vadd.f32 %v670, %v671
      %v673 = vsel %vm342, %v581, 0.0
      %v674 = vadd.f32 %v672, %v673
      %v675 = vsel %vm342, %v582, 0.0
      %v676 = vadd.f32 %v674, %v675
      %v677 = vsel %vm342, %v583, 0.0
      %v678 = vadd.f32 %v676, %v677
      %v679 = vsel %vm342, %v584, 0.0
      %v680 = vadd.f32 %v678, %v679
      %v681 = vsel %vm342, %v585, 0.0
      %v682 = vadd.f32 %v680, %v681
      %v683 = vsel %vm342, %v586, 0.0
      %v684 = vadd.f32 %v682, %v683
      %v685 = vsel %vm342, %v587, 0.0
      %v686 = vadd.f32 %v684, %v685
      %v687 = vsel %vm342, %v588, 0.0
      %v688 = vadd.f32 %v686, %v687
      %v689 = vsel %vm342, %v589, 0.0
      %v690 = vadd.f32 %v688, %v689
      %v691 = vsel %vm342, %v590, 0.0
      %v692 = vadd.f32 %v690, %v691
      %v693 = vsel %vm342, %v591, 0.0
      %v694 = vadd.f32 %v692, %v693
      %v695 = vsel %vm342, %v592, 0.0
      %v696 = vadd.f32 %v694, %v695
      %v697 = vsel %vm342, %v593, 0.0
      %v698 = vadd.f32 %v696, %v697
      %v699 = vsel %vm342, %v594, 0.0
      %v700 = vadd.f32 %v698, %v699
      %v701 = vsel %vm342, %v595, 0.0
      %v702 = vadd.f32 %v700, %v701
      %v703 = vsel %vm342, %v596, 0.0
      %v704 = vadd.f32 %v702, %v703
      %v705 = vsel %vm342, %v597, 0.0
      %v706 = vadd.f32 %v704, %v705
      %v707 = vsel %vm342, %v598, 0.0
      %v708 = vadd.f32 %v706, %v707
      %v709 = vsel %vm342, %v599, 0.0
      %v710 = vadd.f32 %v708, %v709
      %v711 = vsel %vm342, %v600, 0.0
      %v712 = vadd.f32 %v710, %v711
      %v713 = vsel %vm342, %v601, 0.0
      %v714 = vadd.f32 %v712, %v713
      %v715 = vsel %vm342, %v602, 0.0
      %v716 = vadd.f32 %v714, %v715
      %v717 = vsel %vm342, %v603, 0.0
      %v718 = vadd.f32 %v716, %v717
      %v719 = vsel %vm342, %v604, 0.0
      %v720 = vadd.f32 %v718, %v719
      %v721 = vsel %vm342, %v605, 0.0
      %v722 = vadd.f32 %v720, %v721
      %v723 = vsel %vm342, %v606, 0.0
      %v724 = vadd.f32 %v722, %v723
      %v725 = vsel %vm342, %v607, 0.0
      %v726 = vadd.f32 %v724, %v725
      %v727 = vsel %vm342, %v608, 0.0
      %v728 = vadd.f32 %v726, %v727
      %v729 = vsel %vm342, %v609, 0.0
      %v730 = vadd.f32 %v728, %v729
      %v731 = vsel %vm342, %v610, 0.0
      %v732 = vadd.f32 %v730, %v731
      %v733 = vsel %vm342, %v611, 0.0
      %v734 = vadd.f32 %v732, %v733
      %v735 = vsel %vm342, %v612, 0.0
      %v736 = vadd.f32 %v734, %v735
      %v737 = vsel %vm466, %v613, 0.0
      %v738 = vadd.f32 %v736, %v737
      %739 = vadd.xlane.f32.xlu0 %v738
      %v740 = vpop.xlane.xlu0 %739
      %v741 = vrot.slane %v740, 4
      %v742 = vadd.f32 %v740, %v741
      %v743 = vrot.slane %v742, 2
      %v744 = vadd.f32 %v742, %v743
      %v745 = vrot.slane %v744, 1
      %v746 = vadd.f32 %v744, %v745
      %s747 = vtos %v746
      %v748 = vrcp.pop 499.0
      %v749 = vmul.f32 499.0, %v748
      %v750 = vsub.f32 1.0, %v749
      %v751 = vmul.f32 %v748, %v750
      %v752 = vadd.f32 %v748, %v751
      %vm753 = vweird.f32 %v748
      %v754 = vsel %vm753, %v748, %v752
      %s755 = vtos %v754
      %s756 = smul.f32 %s747, %s755
      %v757 = vstv %s756
      %v758 = vrsqrt.pop %v757
      %v759 = vmul.f32 %v758, %v757
      %v760 = vmul.f32 %v759, %v758
      %v761 = vmul.f32 0.5, %v760
      %v762 = vsub.f32 1.5, %v761
      %v763 = vmul.f32 %v758, %v762
      %v764 = vmul.f32 %v757, %v763
      %vm765 = vcmp.eq.f32.partialorder %v757, inf
      %v766 = vsel %vm765, %v757, %v764
      %vm767 = vcmp.eq.f32.partialorder %v757, 0.0
      %v768 = vand.u32 %v757, 2147483648
      %v769 = vsel %vm767, %v768, %v766
      %s770 = vtos %v769
      %s771 = sadd.f32 %s770, 1e-06
      %v772 = vstv %s771
      %v773 = vrcp.pop %v772
      %v774 = vmul.f32 %v772, %v773
      %v775 = vsub.f32 1.0, %v774
      %v776 = vmul.f32 %v773, %v775
      %v777 = vadd.f32 %v773, %v776
      %vm778 = vweird.f32 %v772
      %vm779 = vweird.f32 %v773
      %vm780 = vmor %vm778, %vm779
      %v781 = vsel %vm780, %v773, %v777
      %v782 = vand.u32 2147483647, %v772
      %vm783 = vcmp.eq.f32.partialorder %v782, 8.507059e+37
      %v784 = vand.u32 %v772, 2147483648
      %v785 = vor.u32 1.1754944e-38, %v784
      %v786 = vsel %vm783, %v785, %v781
      %v787 = vmul.f32 %v488, %v786
      %v788 = vmul.f32 %v489, %v786
      %v789 = vmul.f32 %v490, %v786
      %v790 = vmul.f32 %v491, %v786
      %v791 = vmul.f32 %v492, %v786
      %v792 = vmul.f32 %v493, %v786
      %v793 = vmul.f32 %v494, %v786
      %v794 = vmul.f32 %v495, %v786
      %v795 = vmul.f32 %v496, %v786
      %v796 = vmul.f32 %v497, %v786
      %v797 = vmul.f32 %v498, %v786
      %v798 = vmul.f32 %v499, %v786
      %v799 = vmul.f32 %v500, %v786
      %v800 = vmul.f32 %v501, %v786
      %v801 = vmul.f32 %v502, %v786
      %v802 = vmul.f32 %v503, %v786
      %v803 = vmul.f32 %v504, %v786
      %v804 = vmul.f32 %v505, %v786
      %v805 = vmul.f32 %v506, %v786
      %v806 = vmul.f32 %v507, %v786
      %v807 = vmul.f32 %v508, %v786
      %v808 = vmul.f32 %v509, %v786
      %v809 = vmul.f32 %v510, %v786
      %v810 = vmul.f32 %v511, %v786
      %v811 = vmul.f32 %v512, %v786
      %v812 = vmul.f32 %v513, %v786
      %v813 = vmul.f32 %v514, %v786
      %v814 = vmul.f32 %v515, %v786
      %v815 = vmul.f32 %v516, %v786
      %v816 = vmul.f32 %v517, %v786
      %v817 = vmul.f32 %v518, %v786
      %v818 = vmul.f32 %v519, %v786
      %v819 = vmul.f32 %v520, %v786
      %v820 = vmul.f32 %v521, %v786
      %v821 = vmul.f32 %v522, %v786
      %v822 = vmul.f32 %v523, %v786
      %v823 = vmul.f32 %v524, %v786
      %v824 = vmul.f32 %v525, %v786
      %v825 = vmul.f32 %v526, %v786
      %v826 = vmul.f32 %v527, %v786
      %v827 = vmul.f32 %v528, %v786
      %v828 = vmul.f32 %v529, %v786
      %v829 = vmul.f32 %v530, %v786
      %v830 = vmul.f32 %v531, %v786
      %v831 = vmul.f32 %v532, %v786
      %v832 = vmul.f32 %v533, %v786
      %v833 = vmul.f32 %v534, %v786
      %v834 = vmul.f32 %v535, %v786
      %v835 = vmul.f32 %v536, %v786
      %v836 = vmul.f32 %v537, %v786
      %v837 = vmul.f32 %v538, %v786
      %v838 = vmul.f32 %v539, %v786
      %v839 = vmul.f32 %v540, %v786
      %v840 = vmul.f32 %v541, %v786
      %v841 = vmul.f32 %v542, %v786
      %v842 = vmul.f32 %v543, %v786
      %v843 = vmul.f32 %v544, %v786
      %v844 = vmul.f32 %v545, %v786
      %v845 = vmul.f32 %v546, %v786
      %v846 = vmul.f32 %v547, %v786
      %v847 = vmul.f32 %v548, %v786
      %v848 = vmul.f32 %v549, %v786
      %v849 = vmul.f32 %v550, %v786
      %vm850 = vcmask 2048
      %851 = vst.msk [vmem:[#allocation2] sm:$0x7] %vm850, 0.0
      %852 = vst.msk [vmem:[#allocation2 + $0x1f7] sm:$0x7] %vm850, 0.0
      %853 = vst.msk [vmem:[#allocation2 + $0x3] sm:$0xff] %vm342, %v787
      %854 = vst.msk [vmem:[#allocation2 + $0xb] sm:$0xff] %vm342, %v788
      %855 = vst.msk [vmem:[#allocation2 + $0x13] sm:$0xff] %vm342, %v789
      %856 = vst.msk [vmem:[#allocation2 + $0x1b] sm:$0xff] %vm342, %v790
      %857 = vst.msk [vmem:[#allocation2 + $0x23] sm:$0xff] %vm342, %v791
      %858 = vst.msk [vmem:[#allocation2 + $0x2b] sm:$0xff] %vm342, %v792
      %859 = vst.msk [vmem:[#allocation2 + $0x33] sm:$0xff] %vm342, %v793
      %860 = vst.msk [vmem:[#allocation2 + $0x3b] sm:$0xff] %vm342, %v794
      %861 = vst.msk [vmem:[#allocation2 + $0x43] sm:$0xff] %vm342, %v795
      %862 = vst.msk [vmem:[#allocation2 + $0x4b] sm:$0xff] %vm342, %v796
      %863 = vst.msk [vmem:[#allocation2 + $0x53] sm:$0xff] %vm342, %v797
      %864 = vst.msk [vmem:[#allocation2 + $0x5b] sm:$0xff] %vm342, %v798
      %865 = vst.msk [vmem:[#allocation2 + $0x63] sm:$0xff] %vm342, %v799
      %866 = vst.msk [vmem:[#allocation2 + $0x6b] sm:$0xff] %vm342, %v800
      %867 = vst.msk [vmem:[#allocation2 + $0x73] sm:$0xff] %vm342, %v801
      %868 = vst.msk [vmem:[#allocation2 + $0x7b] sm:$0xff] %vm342, %v802
      %869 = vst.msk [vmem:[#allocation2 + $0x83] sm:$0xff] %vm342, %v803
      %870 = vst.msk [vmem:[#allocation2 + $0x8b] sm:$0xff] %vm342, %v804
      %871 = vst.msk [vmem:[#allocation2 + $0x93] sm:$0xff] %vm342, %v805
      %872 = vst.msk [vmem:[#allocation2 + $0x9b] sm:$0xff] %vm342, %v806
      %873 = vst.msk [vmem:[#allocation2 + $0xa3] sm:$0xff] %vm342, %v807
      %874 = vst.msk [vmem:[#allocation2 + $0xab] sm:$0xff] %vm342, %v808
      %875 = vst.msk [vmem:[#allocation2 + $0xb3] sm:$0xff] %vm342, %v809
      %876 = vst.msk [vmem:[#allocation2 + $0xbb] sm:$0xff] %vm342, %v810
      %877 = vst.msk [vmem:[#allocation2 + $0xc3] sm:$0xff] %vm342, %v811
      %878 = vst.msk [vmem:[#allocation2 + $0xcb] sm:$0xff] %vm342, %v812
      %879 = vst.msk [vmem:[#allocation2 + $0xd3] sm:$0xff] %vm342, %v813
      %880 = vst.msk [vmem:[#allocation2 + $0xdb] sm:$0xff] %vm342, %v814
      %881 = vst.msk [vmem:[#allocation2 + $0xe3] sm:$0xff] %vm342, %v815
      %882 = vst.msk [vmem:[#allocation2 + $0xeb] sm:$0xff] %vm342, %v816
      %883 = vst.msk [vmem:[#allocation2 + $0xf3] sm:$0xff] %vm342, %v817
      %884 = vst.msk [vmem:[#allocation2 + $0xfb] sm:$0xff] %vm342, %v818
      %885 = vst.msk [vmem:[#allocation2 + $0x103] sm:$0xff] %vm342, %v819
      %886 = vst.msk [vmem:[#allocation2 + $0x10b] sm:$0xff] %vm342, %v820
      %887 = vst.msk [vmem:[#allocation2 + $0x113] sm:$0xff] %vm342, %v821
      %888 = vst.msk [vmem:[#allocation2 + $0x11b] sm:$0xff] %vm342, %v822
      %889 = vst.msk [vmem:[#allocation2 + $0x123] sm:$0xff] %vm342, %v823
      %890 = vst.msk [vmem:[#allocation2 + $0x12b] sm:$0xff] %vm342, %v824
      %891 = vst.msk [vmem:[#allocation2 + $0x133] sm:$0xff] %vm342, %v825
      %892 = vst.msk [vmem:[#allocation2 + $0x13b] sm:$0xff] %vm342, %v826
      %893 = vst.msk [vmem:[#allocation2 + $0x143] sm:$0xff] %vm342, %v827
      %894 = vst.msk [vmem:[#allocation2 + $0x14b] sm:$0xff] %vm342, %v828
      %895 = vst.msk [vmem:[#allocation2 + $0x153] sm:$0xff] %vm342, %v829
      %896 = vst.msk [vmem:[#allocation2 + $0x15b] sm:$0xff] %vm342, %v830
      %897 = vst.msk [vmem:[#allocation2 + $0x163] sm:$0xff] %vm342, %v831
      %898 = vst.msk [vmem:[#allocation2 + $0x16b] sm:$0xff] %vm342, %v832
      %899 = vst.msk [vmem:[#allocation2 + $0x173] sm:$0xff] %vm342, %v833
      %900 = vst.msk [vmem:[#allocation2 + $0x17b] sm:$0xff] %vm342, %v834
      %901 = vst.msk [vmem:[#allocation2 + $0x183] sm:$0xff] %vm342, %v835
      %902 = vst.msk [vmem:[#allocation2 + $0x18b] sm:$0xff] %vm342, %v836
      %903 = vst.msk [vmem:[#allocation2 + $0x193] sm:$0xff] %vm342, %v837
      %904 = vst.msk [vmem:[#allocation2 + $0x19b] sm:$0xff] %vm342, %v838
      %905 = vst.msk [vmem:[#allocation2 + $0x1a3] sm:$0xff] %vm342, %v839
      %906 = vst.msk [vmem:[#allocation2 + $0x1ab] sm:$0xff] %vm342, %v840
      %907 = vst.msk [vmem:[#allocation2 + $0x1b3] sm:$0xff] %vm342, %v841
      %908 = vst.msk [vmem:[#allocation2 + $0x1bb] sm:$0xff] %vm342, %v842
      %909 = vst.msk [vmem:[#allocation2 + $0x1c3] sm:$0xff] %vm342, %v843
      %910 = vst.msk [vmem:[#allocation2 + $0x1cb] sm:$0xff] %vm342, %v844
      %911 = vst.msk [vmem:[#allocation2 + $0x1d3] sm:$0xff] %vm342, %v845
      %912 = vst.msk [vmem:[#allocation2 + $0x1db] sm:$0xff] %vm342, %v846
      %913 = vst.msk [vmem:[#allocation2 + $0x1e3] sm:$0xff] %vm342, %v847
      %914 = vst.msk [vmem:[#allocation2 + $0x1eb] sm:$0xff] %vm342, %v848
      %915 = vst.msk [vmem:[#allocation2 + $0x1f3] sm:$0xf] %vm466, %v849
      %v916 = vld [vmem:[#allocation2] sm:$0xff]
      %v917 = vld [vmem:[#allocation2 + $0x8] sm:$0xff]
      %v918 = vld [vmem:[#allocation2 + $0x10] sm:$0xff]
      %v919 = vld [vmem:[#allocation2 + $0x18] sm:$0xff]
      %v920 = vld [vmem:[#allocation2 + $0x20] sm:$0xff]
      %v921 = vld [vmem:[#allocation2 + $0x28] sm:$0xff]
      %v922 = vld [vmem:[#allocation2 + $0x30] sm:$0xff]
      %v923 = vld [vmem:[#allocation2 + $0x38] sm:$0xff]
      %v924 = vld [vmem:[#allocation2 + $0x40] sm:$0xff]
      %v925 = vld [vmem:[#allocation2 + $0x48] sm:$0xff]
      %v926 = vld [vmem:[#allocation2 + $0x50] sm:$0xff]
      %v927 = vld [vmem:[#allocation2 + $0x58] sm:$0xff]
      %v928 = vld [vmem:[#allocation2 + $0x60] sm:$0xff]
      %v929 = vld [vmem:[#allocation2 + $0x68] sm:$0xff]
      %v930 = vld [vmem:[#allocation2 + $0x70] sm:$0xff]
      %v931 = vld [vmem:[#allocation2 + $0x78] sm:$0xff]
      %v932 = vld [vmem:[#allocation2 + $0x80] sm:$0xff]
      %v933 = vld [vmem:[#allocation2 + $0x88] sm:$0xff]
      %v934 = vld [vmem:[#allocation2 + $0x90] sm:$0xff]
      %v935 = vld [vmem:[#allocation2 + $0x98] sm:$0xff]
      %v936 = vld [vmem:[#allocation2 + $0xa0] sm:$0xff]
      %v937 = vld [vmem:[#allocation2 + $0xa8] sm:$0xff]
      %v938 = vld [vmem:[#allocation2 + $0xb0] sm:$0xff]
      %v939 = vld [vmem:[#allocation2 + $0xb8] sm:$0xff]
      %v940 = vld [vmem:[#allocation2 + $0xc0] sm:$0xff]
      %v941 = vld [vmem:[#allocation2 + $0xc8] sm:$0xff]
      %v942 = vld [vmem:[#allocation2 + $0xd0] sm:$0xff]
      %v943 = vld [vmem:[#allocation2 + $0xd8] sm:$0xff]
      %v944 = vld [vmem:[#allocation2 + $0xe0] sm:$0xff]
      %v945 = vld [vmem:[#allocation2 + $0xe8] sm:$0xff]
      %v946 = vld [vmem:[#allocation2 + $0xf0] sm:$0xff]
      %v947 = vld [vmem:[#allocation2 + $0xf8] sm:$0xff]
      %v948 = vld [vmem:[#allocation2 + $0x100] sm:$0xff]
      %v949 = vld [vmem:[#allocation2 + $0x108] sm:$0xff]
      %v950 = vld [vmem:[#allocation2 + $0x110] sm:$0xff]
      %v951 = vld [vmem:[#allocation2 + $0x118] sm:$0xff]
      %v952 = vld [vmem:[#allocation2 + $0x120] sm:$0xff]
      %v953 = vld [vmem:[#allocation2 + $0x128] sm:$0xff]
      %v954 = vld [vmem:[#allocation2 + $0x130] sm:$0xff]
      %v955 = vld [vmem:[#allocation2 + $0x138] sm:$0xff]
      %v956 = vld [vmem:[#allocation2 + $0x140] sm:$0xff]
      %v957 = vld [vmem:[#allocation2 + $0x148] sm:$0xff]
      %v958 = vld [vmem:[#allocation2 + $0x150] sm:$0xff]
      %v959 = vld [vmem:[#allocation2 + $0x158] sm:$0xff]
      %v960 = vld [vmem:[#allocation2 + $0x160] sm:$0xff]
      %v961 = vld [vmem:[#allocation2 + $0x168] sm:$0xff]
      %v962 = vld [vmem:[#allocation2 + $0x170] sm:$0xff]
      %v963 = vld [vmem:[#allocation2 + $0x178] sm:$0xff]
      %v964 = vld [vmem:[#allocation2 + $0x180] sm:$0xff]
      %v965 = vld [vmem:[#allocation2 + $0x188] sm:$0xff]
      %v966 = vld [vmem:[#allocation2 + $0x190] sm:$0xff]
      %v967 = vld [vmem:[#allocation2 + $0x198] sm:$0xff]
      %v968 = vld [vmem:[#allocation2 + $0x1a0] sm:$0xff]
      %v969 = vld [vmem:[#allocation2 + $0x1a8] sm:$0xff]
      %v970 = vld [vmem:[#allocation2 + $0x1b0] sm:$0xff]
      %v971 = vld [vmem:[#allocation2 + $0x1b8] sm:$0xff]
      %v972 = vld [vmem:[#allocation2 + $0x1c0] sm:$0xff]
      %v973 = vld [vmem:[#allocation2 + $0x1c8] sm:$0xff]
      %v974 = vld [vmem:[#allocation2 + $0x1d0] sm:$0xff]
      %v975 = vld [vmem:[#allocation2 + $0x1d8] sm:$0xff]
      %v976 = vld [vmem:[#allocation2 + $0x1e0] sm:$0xff]
      %v977 = vld [vmem:[#allocation2 + $0x1e8] sm:$0xff]
      %v978 = vld [vmem:[#allocation2 + $0x1f0] sm:$0xf]
      %v979 = vld [vmem:[#allocation2 + $0x1] sm:$0xff]
      %v980 = vld [vmem:[#allocation2 + $0x9] sm:$0xff]
      %v981 = vld [vmem:[#allocation2 + $0x11] sm:$0xff]
      %v982 = vld [vmem:[#allocation2 + $0x19] sm:$0xff]
      %v983 = vld [vmem:[#allocation2 + $0x21] sm:$0xff]
      %v984 = vld [vmem:[#allocation2 + $0x29] sm:$0xff]
      %v985 = vld [vmem:[#allocation2 + $0x31] sm:$0xff]
      %v986 = vld [vmem:[#allocation2 + $0x39] sm:$0xff]
      %v987 = vld [vmem:[#allocation2 + $0x41] sm:$0xff]
      %v988 = vld [vmem:[#allocation2 + $0x49] sm:$0xff]
      %v989 = vld [vmem:[#allocation2 + $0x51] sm:$0xff]
      %v990 = vld [vmem:[#allocation2 + $0x59] sm:$0xff]
      %v991 = vld [vmem:[#allocation2 + $0x61] sm:$0xff]
      %v992 = vld [vmem:[#allocation2 + $0x69] sm:$0xff]
      %v993 = vld [vmem:[#allocation2 + $0x71] sm:$0xff]
      %v994 = vld [vmem:[#allocation2 + $0x79] sm:$0xff]
      %v995 = vld [vmem:[#allocation2 + $0x81] sm:$0xff]
      %v996 = vld [vmem:[#allocation2 + $0x89] sm:$0xff]
      %v997 = vld [vmem:[#allocation2 + $0x91] sm:$0xff]
      %v998 = vld [vmem:[#allocation2 + $0x99] sm:$0xff]
      %v999 = vld [vmem:[#allocation2 + $0xa1] sm:$0xff]
      %v1000 = vld [vmem:[#allocation2 + $0xa9] sm:$0xff]
      %v1001 = vld [vmem:[#allocation2 + $0xb1] sm:$0xff]
      %v1002 = vld [vmem:[#allocation2 + $0xb9] sm:$0xff]
      %v1003 = vld [vmem:[#allocation2 + $0xc1] sm:$0xff]
      %v1004 = vld [vmem:[#allocation2 + $0xc9] sm:$0xff]
      %v1005 = vld [vmem:[#allocation2 + $0xd1] sm:$0xff]
      %v1006 = vld [vmem:[#allocation2 + $0xd9] sm:$0xff]
      %v1007 = vld [vmem:[#allocation2 + $0xe1] sm:$0xff]
      %v1008 = vld [vmem:[#allocation2 + $0xe9] sm:$0xff]
      %v1009 = vld [vmem:[#allocation2 + $0xf1] sm:$0xff]
      %v1010 = vld [vmem:[#allocation2 + $0xf9] sm:$0xff]
      %v1011 = vld [vmem:[#allocation2 + $0x101] sm:$0xff]
      %v1012 = vld [vmem:[#allocation2 + $0x109] sm:$0xff]
      %v1013 = vld [vmem:[#allocation2 + $0x111] sm:$0xff]
      %v1014 = vld [vmem:[#allocation2 + $0x119] sm:$0xff]
      %v1015 = vld [vmem:[#allocation2 + $0x121] sm:$0xff]
      %v1016 = vld [vmem:[#allocation2 + $0x129] sm:$0xff]
      %v1017 = vld [vmem:[#allocation2 + $0x131] sm:$0xff]
      %v1018 = vld [vmem:[#allocation2 + $0x139] sm:$0xff]
      %v1019 = vld [vmem:[#allocation2 + $0x141] sm:$0xff]
      %v1020 = vld [vmem:[#allocation2 + $0x149] sm:$0xff]
      %v1021 = vld [vmem:[#allocation2 + $0x151] sm:$0xff]
      %v1022 = vld [vmem:[#allocation2 + $0x159] sm:$0xff]
      %v1023 = vld [vmem:[#allocation2 + $0x161] sm:$0xff]
      %v1024 = vld [vmem:[#allocation2 + $0x169] sm:$0xff]
      %v1025 = vld [vmem:[#allocation2 + $0x171] sm:$0xff]
      %v1026 = vld [vmem:[#allocation2 + $0x179] sm:$0xff]
      %v1027 = vld [vmem:[#allocation2 + $0x181] sm:$0xff]
      %v1028 = vld [vmem:[#allocation2 + $0x189] sm:$0xff]
      %v1029 = vld [vmem:[#allocation2 + $0x191] sm:$0xff]
      %v1030 = vld [vmem:[#allocation2 + $0x199] sm:$0xff]
      %v1031 = vld [vmem:[#allocation2 + $0x1a1] sm:$0xff]
      %v1032 = vld [vmem:[#allocation2 + $0x1a9] sm:$0xff]
      %v1033 = vld [vmem:[#allocation2 + $0x1b1] sm:$0xff]
      %v1034 = vld [vmem:[#allocation2 + $0x1b9] sm:$0xff]
      %v1035 = vld [vmem:[#allocation2 + $0x1c1] sm:$0xff]
      %v1036 = vld [vmem:[#allocation2 + $0x1c9] sm:$0xff]
      %v1037 = vld [vmem:[#allocation2 + $0x1d1] sm:$0xff]
      %v1038 = vld [vmem:[#allocation2 + $0x1d9] sm:$0xff]
      %v1039 = vld [vmem:[#allocation2 + $0x1e1] sm:$0xff]
      %v1040 = vld [vmem:[#allocation2 + $0x1e9] sm:$0xff]
      %v1041 = vld [vmem:[#allocation2 + $0x1f1] sm:$0xf]
      %v1042 = vld [vmem:[#allocation2 + $0x2] sm:$0xff]
      %v1043 = vld [vmem:[#allocation2 + $0xa] sm:$0xff]
      %v1044 = vld [vmem:[#allocation2 + $0x12] sm:$0xff]
      %v1045 = vld [vmem:[#allocation2 + $0x1a] sm:$0xff]
      %v1046 = vld [vmem:[#allocation2 + $0x22] sm:$0xff]
      %v1047 = vld [vmem:[#allocation2 + $0x2a] sm:$0xff]
      %v1048 = vld [vmem:[#allocation2 + $0x32] sm:$0xff]
      %v1049 = vld [vmem:[#allocation2 + $0x3a] sm:$0xff]
      %v1050 = vld [vmem:[#allocation2 + $0x42] sm:$0xff]
      %v1051 = vld [vmem:[#allocation2 + $0x4a] sm:$0xff]
      %v1052 = vld [vmem:[#allocation2 + $0x52] sm:$0xff]
      %v1053 = vld [vmem:[#allocation2 + $0x5a] sm:$0xff]
      %v1054 = vld [vmem:[#allocation2 + $0x62] sm:$0xff]
      %v1055 = vld [vmem:[#allocation2 + $0x6a] sm:$0xff]
      %v1056 = vld [vmem:[#allocation2 + $0x72] sm:$0xff]
      %v1057 = vld [vmem:[#allocation2 + $0x7a] sm:$0xff]
      %v1058 = vld [vmem:[#allocation2 + $0x82] sm:$0xff]
      %v1059 = vld [vmem:[#allocation2 + $0x8a] sm:$0xff]
      %v1060 = vld [vmem:[#allocation2 + $0x92] sm:$0xff]
      %v1061 = vld [vmem:[#allocation2 + $0x9a] sm:$0xff]
      %v1062 = vld [vmem:[#allocation2 + $0xa2] sm:$0xff]
      %v1063 = vld [vmem:[#allocation2 + $0xaa] sm:$0xff]
      %v1064 = vld [vmem:[#allocation2 + $0xb2] sm:$0xff]
      %v1065 = vld [vmem:[#allocation2 + $0xba] sm:$0xff]
      %v1066 = vld [vmem:[#allocation2 + $0xc2] sm:$0xff]
      %v1067 = vld [vmem:[#allocation2 + $0xca] sm:$0xff]
      %v1068 = vld [vmem:[#allocation2 + $0xd2] sm:$0xff]
      %v1069 = vld [vmem:[#allocation2 + $0xda] sm:$0xff]
      %v1070 = vld [vmem:[#allocation2 + $0xe2] sm:$0xff]
      %v1071 = vld [vmem:[#allocation2 + $0xea] sm:$0xff]
      %v1072 = vld [vmem:[#allocation2 + $0xf2] sm:$0xff]
      %v1073 = vld [vmem:[#allocation2 + $0xfa] sm:$0xff]
      %v1074 = vld [vmem:[#allocation2 + $0x102] sm:$0xff]
      %v1075 = vld [vmem:[#allocation2 + $0x10a] sm:$0xff]
      %v1076 = vld [vmem:[#allocation2 + $0x112] sm:$0xff]
      %v1077 = vld [vmem:[#allocation2 + $0x11a] sm:$0xff]
      %v1078 = vld [vmem:[#allocation2 + $0x122] sm:$0xff]
      %v1079 = vld [vmem:[#allocation2 + $0x12a] sm:$0xff]
      %v1080 = vld [vmem:[#allocation2 + $0x132] sm:$0xff]
      %v1081 = vld [vmem:[#allocation2 + $0x13a] sm:$0xff]
      %v1082 = vld [vmem:[#allocation2 + $0x142] sm:$0xff]
      %v1083 = vld [vmem:[#allocation2 + $0x14a] sm:$0xff]
      %v1084 = vld [vmem:[#allocation2 + $0x152] sm:$0xff]
      %v1085 = vld [vmem:[#allocation2 + $0x15a] sm:$0xff]
      %v1086 = vld [vmem:[#allocation2 + $0x162] sm:$0xff]
      %v1087 = vld [vmem:[#allocation2 + $0x16a] sm:$0xff]
      %v1088 = vld [vmem:[#allocation2 + $0x172] sm:$0xff]
      %v1089 = vld [vmem:[#allocation2 + $0x17a] sm:$0xff]
      %v1090 = vld [vmem:[#allocation2 + $0x182] sm:$0xff]
      %v1091 = vld [vmem:[#allocation2 + $0x18a] sm:$0xff]
      %v1092 = vld [vmem:[#allocation2 + $0x192] sm:$0xff]
      %v1093 = vld [vmem:[#allocation2 + $0x19a] sm:$0xff]
      %v1094 = vld [vmem:[#allocation2 + $0x1a2] sm:$0xff]
      %v1095 = vld [vmem:[#allocation2 + $0x1aa] sm:$0xff]
      %v1096 = vld [vmem:[#allocation2 + $0x1b2] sm:$0xff]
      %v1097 = vld [vmem:[#allocation2 + $0x1ba] sm:$0xff]
      %v1098 = vld [vmem:[#allocation2 + $0x1c2] sm:$0xff]
      %v1099 = vld [vmem:[#allocation2 + $0x1ca] sm:$0xff]
      %v1100 = vld [vmem:[#allocation2 + $0x1d2] sm:$0xff]
      %v1101 = vld [vmem:[#allocation2 + $0x1da] sm:$0xff]
      %v1102 = vld [vmem:[#allocation2 + $0x1e2] sm:$0xff]
      %v1103 = vld [vmem:[#allocation2 + $0x1ea] sm:$0xff]
      %v1104 = vld [vmem:[#allocation2 + $0x1f2] sm:$0xf]
      %v1105 = vld [vmem:[#allocation2 + $0x3] sm:$0xff]
      %v1106 = vld [vmem:[#allocation2 + $0xb] sm:$0xff]
      %v1107 = vld [vmem:[#allocation2 + $0x13] sm:$0xff]
      %v1108 = vld [vmem:[#allocation2 + $0x1b] sm:$0xff]
      %v1109 = vld [vmem:[#allocation2 + $0x23] sm:$0xff]
      %v1110 = vld [vmem:[#allocation2 + $0x2b] sm:$0xff]
      %v1111 = vld [vmem:[#allocation2 + $0x33] sm:$0xff]
      %v1112 = vld [vmem:[#allocation2 + $0x3b] sm:$0xff]
      %v1113 = vld [vmem:[#allocation2 + $0x43] sm:$0xff]
      %v1114 = vld [vmem:[#allocation2 + $0x4b] sm:$0xff]
      %v1115 = vld [vmem:[#allocation2 + $0x53] sm:$0xff]
      %v1116 = vld [vmem:[#allocation2 + $0x5b] sm:$0xff]
      %v1117 = vld [vmem:[#allocation2 + $0x63] sm:$0xff]
      %v1118 = vld [vmem:[#allocation2 + $0x6b] sm:$0xff]
      %v1119 = vld [vmem:[#allocation2 + $0x73] sm:$0xff]
      %v1120 = vld [vmem:[#allocation2 + $0x7b] sm:$0xff]
      %v1121 = vld [vmem:[#allocation2 + $0x83] sm:$0xff]
      %v1122 = vld [vmem:[#allocation2 + $0x8b] sm:$0xff]
      %v1123 = vld [vmem:[#allocation2 + $0x93] sm:$0xff]
      %v1124 = vld [vmem:[#allocation2 + $0x9b] sm:$0xff]
      %v1125 = vld [vmem:[#allocation2 + $0xa3] sm:$0xff]
      %v1126 = vld [vmem:[#allocation2 + $0xab] sm:$0xff]
      %v1127 = vld [vmem:[#allocation2 + $0xb3] sm:$0xff]
      %v1128 = vld [vmem:[#allocation2 + $0xbb] sm:$0xff]
      %v1129 = vld [vmem:[#allocation2 + $0xc3] sm:$0xff]
      %v1130 = vld [vmem:[#allocation2 + $0xcb] sm:$0xff]
      %v1131 = vld [vmem:[#allocation2 + $0xd3] sm:$0xff]
      %v1132 = vld [vmem:[#allocation2 + $0xdb] sm:$0xff]
      %v1133 = vld [vmem:[#allocation2 + $0xe3] sm:$0xff]
      %v1134 = vld [vmem:[#allocation2 + $0xeb] sm:$0xff]
      %v1135 = vld [vmem:[#allocation2 + $0xf3] sm:$0xff]
      %v1136 = vld [vmem:[#allocation2 + $0xfb] sm:$0xff]
      %v1137 = vld [vmem:[#allocation2 + $0x103] sm:$0xff]
      %v1138 = vld [vmem:[#allocation2 + $0x10b] sm:$0xff]
      %v1139 = vld [vmem:[#allocation2 + $0x113] sm:$0xff]
      %v1140 = vld [vmem:[#allocation2 + $0x11b] sm:$0xff]
      %v1141 = vld [vmem:[#allocation2 + $0x123] sm:$0xff]
      %v1142 = vld [vmem:[#allocation2 + $0x12b] sm:$0xff]
      %v1143 = vld [vmem:[#allocation2 + $0x133] sm:$0xff]
      %v1144 = vld [vmem:[#allocation2 + $0x13b] sm:$0xff]
      %v1145 = vld [vmem:[#allocation2 + $0x143] sm:$0xff]
      %v1146 = vld [vmem:[#allocation2 + $0x14b] sm:$0xff]
      %v1147 = vld [vmem:[#allocation2 + $0x153] sm:$0xff]
      %v1148 = vld [vmem:[#allocation2 + $0x15b] sm:$0xff]
      %v1149 = vld [vmem:[#allocation2 + $0x163] sm:$0xff]
      %v1150 = vld [vmem:[#allocation2 + $0x16b] sm:$0xff]
      %v1151 = vld [vmem:[#allocation2 + $0x173] sm:$0xff]
      %v1152 = vld [vmem:[#allocation2 + $0x17b] sm:$0xff]
      %v1153 = vld [vmem:[#allocation2 + $0x183] sm:$0xff]
      %v1154 = vld [vmem:[#allocation2 + $0x18b] sm:$0xff]
      %v1155 = vld [vmem:[#allocation2 + $0x193] sm:$0xff]
      %v1156 = vld [vmem:[#allocation2 + $0x19b] sm:$0xff]
      %v1157 = vld [vmem:[#allocation2 + $0x1a3] sm:$0xff]
      %v1158 = vld [vmem:[#allocation2 + $0x1ab] sm:$0xff]
      %v1159 = vld [vmem:[#allocation2 + $0x1b3] sm:$0xff]
      %v1160 = vld [vmem:[#allocation2 + $0x1bb] sm:$0xff]
      %v1161 = vld [vmem:[#allocation2 + $0x1c3] sm:$0xff]
      %v1162 = vld [vmem:[#allocation2 + $0x1cb] sm:$0xff]
      %v1163 = vld [vmem:[#allocation2 + $0x1d3] sm:$0xff]
      %v1164 = vld [vmem:[#allocation2 + $0x1db] sm:$0xff]
      %v1165 = vld [vmem:[#allocation2 + $0x1e3] sm:$0xff]
      %v1166 = vld [vmem:[#allocation2 + $0x1eb] sm:$0xff]
      %v1167 = vld [vmem:[#allocation2 + $0x1f3] sm:$0xf]
      %v1168 = vld [vmem:[#allocation2 + $0x4] sm:$0xff]
      %v1169 = vld [vmem:[#allocation2 + $0xc] sm:$0xff]
      %v1170 = vld [vmem:[#allocation2 + $0x14] sm:$0xff]
      %v1171 = vld [vmem:[#allocation2 + $0x1c] sm:$0xff]
      %v1172 = vld [vmem:[#allocation2 + $0x24] sm:$0xff]
      %v1173 = vld [vmem:[#allocation2 + $0x2c] sm:$0xff]
      %v1174 = vld [vmem:[#allocation2 + $0x34] sm:$0xff]
      %v1175 = vld [vmem:[#allocation2 + $0x3c] sm:$0xff]
      %v1176 = vld [vmem:[#allocation2 + $0x44] sm:$0xff]
      %v1177 = vld [vmem:[#allocation2 + $0x4c] sm:$0xff]
      %v1178 = vld [vmem:[#allocation2 + $0x54] sm:$0xff]
      %v1179 = vld [vmem:[#allocation2 + $0x5c] sm:$0xff]
      %v1180 = vld [vmem:[#allocation2 + $0x64] sm:$0xff]
      %v1181 = vld [vmem:[#allocation2 + $0x6c] sm:$0xff]
      %v1182 = vld [vmem:[#allocation2 + $0x74] sm:$0xff]
      %v1183 = vld [vmem:[#allocation2 + $0x7c] sm:$0xff]
      %v1184 = vld [vmem:[#allocation2 + $0x84] sm:$0xff]
      %v1185 = vld [vmem:[#allocation2 + $0x8c] sm:$0xff]
      %v1186 = vld [vmem:[#allocation2 + $0x94] sm:$0xff]
      %v1187 = vld [vmem:[#allocation2 + $0x9c] sm:$0xff]
      %v1188 = vld [vmem:[#allocation2 + $0xa4] sm:$0xff]
      %v1189 = vld [vmem:[#allocation2 + $0xac] sm:$0xff]
      %v1190 = vld [vmem:[#allocation2 + $0xb4] sm:$0xff]
      %v1191 = vld [vmem:[#allocation2 + $0xbc] sm:$0xff]
      %v1192 = vld [vmem:[#allocation2 + $0xc4] sm:$0xff]
      %v1193 = vld [vmem:[#allocation2 + $0xcc] sm:$0xff]
      %v1194 = vld [vmem:[#allocation2 + $0xd4] sm:$0xff]
      %v1195 = vld [vmem:[#allocation2 + $0xdc] sm:$0xff]
      %v1196 = vld [vmem:[#allocation2 + $0xe4] sm:$0xff]
      %v1197 = vld [vmem:[#allocation2 + $0xec] sm:$0xff]
      %v1198 = vld [vmem:[#allocation2 + $0xf4] sm:$0xff]
      %v1199 = vld [vmem:[#allocation2 + $0xfc] sm:$0xff]
      %v1200 = vld [vmem:[#allocation2 + $0x104] sm:$0xff]
      %v1201 = vld [vmem:[#allocation2 + $0x10c] sm:$0xff]
      %v1202 = vld [vmem:[#allocation2 + $0x114] sm:$0xff]
      %v1203 = vld [vmem:[#allocation2 + $0x11c] sm:$0xff]
      %v1204 = vld [vmem:[#allocation2 + $0x124] sm:$0xff]
      %v1205 = vld [vmem:[#allocation2 + $0x12c] sm:$0xff]
      %v1206 = vld [vmem:[#allocation2 + $0x134] sm:$0xff]
      %v1207 = vld [vmem:[#allocation2 + $0x13c] sm:$0xff]
      %v1208 = vld [vmem:[#allocation2 + $0x144] sm:$0xff]
      %v1209 = vld [vmem:[#allocation2 + $0x14c] sm:$0xff]
      %v1210 = vld [vmem:[#allocation2 + $0x154] sm:$0xff]
      %v1211 = vld [vmem:[#allocation2 + $0x15c] sm:$0xff]
      %v1212 = vld [vmem:[#allocation2 + $0x164] sm:$0xff]
      %v1213 = vld [vmem:[#allocation2 + $0x16c] sm:$0xff]
      %v1214 = vld [vmem:[#allocation2 + $0x174] sm:$0xff]
      %v1215 = vld [vmem:[#allocation2 + $0x17c] sm:$0xff]
      %v1216 = vld [vmem:[#allocation2 + $0x184] sm:$0xff]
      %v1217 = vld [vmem:[#allocation2 + $0x18c] sm:$0xff]
      %v1218 = vld [vmem:[#allocation2 + $0x194] sm:$0xff]
      %v1219 = vld [vmem:[#allocation2 + $0x19c] sm:$0xff]
      %v1220 = vld [vmem:[#allocation2 + $0x1a4] sm:$0xff]
      %v1221 = vld [vmem:[#allocation2 + $0x1ac] sm:$0xff]
      %v1222 = vld [vmem:[#allocation2 + $0x1b4] sm:$0xff]
      %v1223 = vld [vmem:[#allocation2 + $0x1bc] sm:$0xff]
      %v1224 = vld [vmem:[#allocation2 + $0x1c4] sm:$0xff]
      %v1225 = vld [vmem:[#allocation2 + $0x1cc] sm:$0xff]
      %v1226 = vld [vmem:[#allocation2 + $0x1d4] sm:$0xff]
      %v1227 = vld [vmem:[#allocation2 + $0x1dc] sm:$0xff]
      %v1228 = vld [vmem:[#allocation2 + $0x1e4] sm:$0xff]
      %v1229 = vld [vmem:[#allocation2 + $0x1ec] sm:$0xff]
      %v1230 = vld [vmem:[#allocation2 + $0x1f4] sm:$0xf]
      %v1231 = vld [vmem:[#allocation2 + $0x5] sm:$0xff]
      %v1232 = vld [vmem:[#allocation2 + $0xd] sm:$0xff]
      %v1233 = vld [vmem:[#allocation2 + $0x15] sm:$0xff]
      %v1234 = vld [vmem:[#allocation2 + $0x1d] sm:$0xff]
      %v1235 = vld [vmem:[#allocation2 + $0x25] sm:$0xff]
      %v1236 = vld [vmem:[#allocation2 + $0x2d] sm:$0xff]
      %v1237 = vld [vmem:[#allocation2 + $0x35] sm:$0xff]
      %v1238 = vld [vmem:[#allocation2 + $0x3d] sm:$0xff]
      %v1239 = vld [vmem:[#allocation2 + $0x45] sm:$0xff]
      %v1240 = vld [vmem:[#allocation2 + $0x4d] sm:$0xff]
      %v1241 = vld [vmem:[#allocation2 + $0x55] sm:$0xff]
      %v1242 = vld [vmem:[#allocation2 + $0x5d] sm:$0xff]
      %v1243 = vld [vmem:[#allocation2 + $0x65] sm:$0xff]
      %v1244 = vld [vmem:[#allocation2 + $0x6d] sm:$0xff]
      %v1245 = vld [vmem:[#allocation2 + $0x75] sm:$0xff]
      %v1246 = vld [vmem:[#allocation2 + $0x7d] sm:$0xff]
      %v1247 = vld [vmem:[#allocation2 + $0x85] sm:$0xff]
      %v1248 = vld [vmem:[#allocation2 + $0x8d] sm:$0xff]
      %v1249 = vld [vmem:[#allocation2 + $0x95] sm:$0xff]
      %v1250 = vld [vmem:[#allocation2 + $0x9d] sm:$0xff]
      %v1251 = vld [vmem:[#allocation2 + $0xa5] sm:$0xff]
      %v1252 = vld [vmem:[#allocation2 + $0xad] sm:$0xff]
      %v1253 = vld [vmem:[#allocation2 + $0xb5] sm:$0xff]
      %v1254 = vld [vmem:[#allocation2 + $0xbd] sm:$0xff]
      %v1255 = vld [vmem:[#allocation2 + $0xc5] sm:$0xff]
      %v1256 = vld [vmem:[#allocation2 + $0xcd] sm:$0xff]
      %v1257 = vld [vmem:[#allocation2 + $0xd5] sm:$0xff]
      %v1258 = vld [vmem:[#allocation2 + $0xdd] sm:$0xff]
      %v1259 = vld [vmem:[#allocation2 + $0xe5] sm:$0xff]
      %v1260 = vld [vmem:[#allocation2 + $0xed] sm:$0xff]
      %v1261 = vld [vmem:[#allocation2 + $0xf5] sm:$0xff]
      %v1262 = vld [vmem:[#allocation2 + $0xfd] sm:$0xff]
      %v1263 = vld [vmem:[#allocation2 + $0x105] sm:$0xff]
      %v1264 = vld [vmem:[#allocation2 + $0x10d] sm:$0xff]
      %v1265 = vld [vmem:[#allocation2 + $0x115] sm:$0xff]
      %v1266 = vld [vmem:[#allocation2 + $0x11d] sm:$0xff]
      %v1267 = vld [vmem:[#allocation2 + $0x125] sm:$0xff]
      %v1268 = vld [vmem:[#allocation2 + $0x12d] sm:$0xff]
      %v1269 = vld [vmem:[#allocation2 + $0x135] sm:$0xff]
      %v1270 = vld [vmem:[#allocation2 + $0x13d] sm:$0xff]
      %v1271 = vld [vmem:[#allocation2 + $0x145] sm:$0xff]
      %v1272 = vld [vmem:[#allocation2 + $0x14d] sm:$0xff]
      %v1273 = vld [vmem:[#allocation2 + $0x155] sm:$0xff]
      %v1274 = vld [vmem:[#allocation2 + $0x15d] sm:$0xff]
      %v1275 = vld [vmem:[#allocation2 + $0x165] sm:$0xff]
      %v1276 = vld [vmem:[#allocation2 + $0x16d] sm:$0xff]
      %v1277 = vld [vmem:[#allocation2 + $0x175] sm:$0xff]
      %v1278 = vld [vmem:[#allocation2 + $0x17d] sm:$0xff]
      %v1279 = vld [vmem:[#allocation2 + $0x185] sm:$0xff]
      %v1280 = vld [vmem:[#allocation2 + $0x18d] sm:$0xff]
      %v1281 = vld [vmem:[#allocation2 + $0x195] sm:$0xff]
      %v1282 = vld [vmem:[#allocation2 + $0x19d] sm:$0xff]
      %v1283 = vld [vmem:[#allocation2 + $0x1a5] sm:$0xff]
      %v1284 = vld [vmem:[#allocation2 + $0x1ad] sm:$0xff]
      %v1285 = vld [vmem:[#allocation2 + $0x1b5] sm:$0xff]
      %v1286 = vld [vmem:[#allocation2 + $0x1bd] sm:$0xff]
      %v1287 = vld [vmem:[#allocation2 + $0x1c5] sm:$0xff]
      %v1288 = vld [vmem:[#allocation2 + $0x1cd] sm:$0xff]
      %v1289 = vld [vmem:[#allocation2 + $0x1d5] sm:$0xff]
      %v1290 = vld [vmem:[#allocation2 + $0x1dd] sm:$0xff]
      %v1291 = vld [vmem:[#allocation2 + $0x1e5] sm:$0xff]
      %v1292 = vld [vmem:[#allocation2 + $0x1ed] sm:$0xff]
      %v1293 = vld [vmem:[#allocation2 + $0x1f5] sm:$0xf]
      %v1294 = vld [vmem:[#allocation2 + $0x6] sm:$0xff]
      %v1295 = vld [vmem:[#allocation2 + $0xe] sm:$0xff]
      %v1296 = vld [vmem:[#allocation2 + $0x16] sm:$0xff]
      %v1297 = vld [vmem:[#allocation2 + $0x1e] sm:$0xff]
      %v1298 = vld [vmem:[#allocation2 + $0x26] sm:$0xff]
      %v1299 = vld [vmem:[#allocation2 + $0x2e] sm:$0xff]
      %v1300 = vld [vmem:[#allocation2 + $0x36] sm:$0xff]
      %v1301 = vld [vmem:[#allocation2 + $0x3e] sm:$0xff]
      %v1302 = vld [vmem:[#allocation2 + $0x46] sm:$0xff]
      %v1303 = vld [vmem:[#allocation2 + $0x4e] sm:$0xff]
      %v1304 = vld [vmem:[#allocation2 + $0x56] sm:$0xff]
      %v1305 = vld [vmem:[#allocation2 + $0x5e] sm:$0xff]
      %v1306 = vld [vmem:[#allocation2 + $0x66] sm:$0xff]
      %v1307 = vld [vmem:[#allocation2 + $0x6e] sm:$0xff]
      %v1308 = vld [vmem:[#allocation2 + $0x76] sm:$0xff]
      %v1309 = vld [vmem:[#allocation2 + $0x7e] sm:$0xff]
      %v1310 = vld [vmem:[#allocation2 + $0x86] sm:$0xff]
      %v1311 = vld [vmem:[#allocation2 + $0x8e] sm:$0xff]
      %v1312 = vld [vmem:[#allocation2 + $0x96] sm:$0xff]
      %v1313 = vld [vmem:[#allocation2 + $0x9e] sm:$0xff]
      %v1314 = vld [vmem:[#allocation2 + $0xa6] sm:$0xff]
      %v1315 = vld [vmem:[#allocation2 + $0xae] sm:$0xff]
      %v1316 = vld [vmem:[#allocation2 + $0xb6] sm:$0xff]
      %v1317 = vld [vmem:[#allocation2 + $0xbe] sm:$0xff]
      %v1318 = vld [vmem:[#allocation2 + $0xc6] sm:$0xff]
      %v1319 = vld [vmem:[#allocation2 + $0xce] sm:$0xff]
      %v1320 = vld [vmem:[#allocation2 + $0xd6] sm:$0xff]
      %v1321 = vld [vmem:[#allocation2 + $0xde] sm:$0xff]
      %v1322 = vld [vmem:[#allocation2 + $0xe6] sm:$0xff]
      %v1323 = vld [vmem:[#allocation2 + $0xee] sm:$0xff]
      %v1324 = vld [vmem:[#allocation2 + $0xf6] sm:$0xff]
      %v1325 = vld [vmem:[#allocation2 + $0xfe] sm:$0xff]
      %v1326 = vld [vmem:[#allocation2 + $0x106] sm:$0xff]
      %v1327 = vld [vmem:[#allocation2 + $0x10e] sm:$0xff]
      %v1328 = vld [vmem:[#allocation2 + $0x116] sm:$0xff]
      %v1329 = vld [vmem:[#allocation2 + $0x11e] sm:$0xff]
      %v1330 = vld [vmem:[#allocation2 + $0x126] sm:$0xff]
      %v1331 = vld [vmem:[#allocation2 + $0x12e] sm:$0xff]
      %v1332 = vld [vmem:[#allocation2 + $0x136] sm:$0xff]
      %v1333 = vld [vmem:[#allocation2 + $0x13e] sm:$0xff]
      %v1334 = vld [vmem:[#allocation2 + $0x146] sm:$0xff]
      %v1335 = vld [vmem:[#allocation2 + $0x14e] sm:$0xff]
      %v1336 = vld [vmem:[#allocation2 + $0x156] sm:$0xff]
      %v1337 = vld [vmem:[#allocation2 + $0x15e] sm:$0xff]
      %v1338 = vld [vmem:[#allocation2 + $0x166] sm:$0xff]
      %v1339 = vld [vmem:[#allocation2 + $0x16e] sm:$0xff]
      %v1340 = vld [vmem:[#allocation2 + $0x176] sm:$0xff]
      %v1341 = vld [vmem:[#allocation2 + $0x17e] sm:$0xff]
      %v1342 = vld [vmem:[#allocation2 + $0x186] sm:$0xff]
      %v1343 = vld [vmem:[#allocation2 + $0x18e] sm:$0xff]
      %v1344 = vld [vmem:[#allocation2 + $0x196] sm:$0xff]
      %v1345 = vld [vmem:[#allocation2 + $0x19e] sm:$0xff]
      %v1346 = vld [vmem:[#allocation2 + $0x1a6] sm:$0xff]
      %v1347 = vld [vmem:[#allocation2 + $0x1ae] sm:$0xff]
      %v1348 = vld [vmem:[#allocation2 + $0x1b6] sm:$0xff]
      %v1349 = vld [vmem:[#allocation2 + $0x1be] sm:$0xff]
      %v1350 = vld [vmem:[#allocation2 + $0x1c6] sm:$0xff]
      %v1351 = vld [vmem:[#allocation2 + $0x1ce] sm:$0xff]
      %v1352 = vld [vmem:[#allocation2 + $0x1d6] sm:$0xff]
      %v1353 = vld [vmem:[#allocation2 + $0x1de] sm:$0xff]
      %v1354 = vld [vmem:[#allocation2 + $0x1e6] sm:$0xff]
      %v1355 = vld [vmem:[#allocation2 + $0x1ee] sm:$0xff]
      %v1356 = vld [vmem:[#allocation2 + $0x1f6] sm:$0xf]
      %1420 = vrot.lane.b32.xlu0 %v979, 1
      %v1421 = vpop.permute.xlu0 %1420
      %1422 = vrot.lane.b32.xlu0 %v980, 1
      %v1423 = vpop.permute.xlu0 %1422
      %1424 = vrot.lane.b32.xlu0 %v981, 1
      %v1425 = vpop.permute.xlu0 %1424
      %1426 = vrot.lane.b32.xlu0 %v982, 1
      %v1427 = vpop.permute.xlu0 %1426
      %1428 = vrot.lane.b32.xlu0 %v983, 1
      %v1429 = vpop.permute.xlu0 %1428
      %1430 = vrot.lane.b32.xlu0 %v984, 1
      %v1431 = vpop.permute.xlu0 %1430
      %1432 = vrot.lane.b32.xlu0 %v985, 1
      %v1433 = vpop.permute.xlu0 %1432
      %1434 = vrot.lane.b32.xlu0 %v986, 1
      %v1435 = vpop.permute.xlu0 %1434
      %1436 = vrot.lane.b32.xlu0 %v987, 1
      %v1437 = vpop.permute.xlu0 %1436
      %1438 = vrot.lane.b32.xlu0 %v988, 1
      %v1439 = vpop.permute.xlu0 %1438
      %1440 = vrot.lane.b32.xlu0 %v989, 1
      %v1441 = vpop.permute.xlu0 %1440
      %1442 = vrot.lane.b32.xlu0 %v990, 1
      %v1443 = vpop.permute.xlu0 %1442
      %1444 = vrot.lane.b32.xlu0 %v991, 1
      %v1445 = vpop.permute.xlu0 %1444
      %1446 = vrot.lane.b32.xlu0 %v992, 1
      %v1447 = vpop.permute.xlu0 %1446
      %1448 = vrot.lane.b32.xlu0 %v993, 1
      %v1449 = vpop.permute.xlu0 %1448
      %1450 = vrot.lane.b32.xlu0 %v994, 1
      %v1451 = vpop.permute.xlu0 %1450
      %1452 = vrot.lane.b32.xlu0 %v995, 1
      %v1453 = vpop.permute.xlu0 %1452
      %1454 = vrot.lane.b32.xlu0 %v996, 1
      %v1455 = vpop.permute.xlu0 %1454
      %1456 = vrot.lane.b32.xlu0 %v997, 1
      %v1457 = vpop.permute.xlu0 %1456
      %1458 = vrot.lane.b32.xlu0 %v998, 1
      %v1459 = vpop.permute.xlu0 %1458
      %1460 = vrot.lane.b32.xlu0 %v999, 1
      %v1461 = vpop.permute.xlu0 %1460
      %1462 = vrot.lane.b32.xlu0 %v1000, 1
      %v1463 = vpop.permute.xlu0 %1462
      %1464 = vrot.lane.b32.xlu0 %v1001, 1
      %v1465 = vpop.permute.xlu0 %1464
      %1466 = vrot.lane.b32.xlu0 %v1002, 1
      %v1467 = vpop.permute.xlu0 %1466
      %1468 = vrot.lane.b32.xlu0 %v1003, 1
      %v1469 = vpop.permute.xlu0 %1468
      %1470 = vrot.lane.b32.xlu0 %v1004, 1
      %v1471 = vpop.permute.xlu0 %1470
      %1472 = vrot.lane.b32.xlu0 %v1005, 1
      %v1473 = vpop.permute.xlu0 %1472
      %1474 = vrot.lane.b32.xlu0 %v1006, 1
      %v1475 = vpop.permute.xlu0 %1474
      %1476 = vrot.lane.b32.xlu0 %v1007, 1
      %v1477 = vpop.permute.xlu0 %1476
      %1478 = vrot.lane.b32.xlu0 %v1008, 1
      %v1479 = vpop.permute.xlu0 %1478
      %1480 = vrot.lane.b32.xlu0 %v1009, 1
      %v1481 = vpop.permute.xlu0 %1480
      %1482 = vrot.lane.b32.xlu0 %v1010, 1
      %v1483 = vpop.permute.xlu0 %1482
      %1484 = vrot.lane.b32.xlu0 %v1011, 1
      %v1485 = vpop.permute.xlu0 %1484
      %1486 = vrot.lane.b32.xlu0 %v1012, 1
      %v1487 = vpop.permute.xlu0 %1486
      %1488 = vrot.lane.b32.xlu0 %v1013, 1
      %v1489 = vpop.permute.xlu0 %1488
      %1490 = vrot.lane.b32.xlu0 %v1014, 1
      %v1491 = vpop.permute.xlu0 %1490
      %1492 = vrot.lane.b32.xlu0 %v1015, 1
      %v1493 = vpop.permute.xlu0 %1492
      %1494 = vrot.lane.b32.xlu0 %v1016, 1
      %v1495 = vpop.permute.xlu0 %1494
      %1496 = vrot.lane.b32.xlu0 %v1017, 1
      %v1497 = vpop.permute.xlu0 %1496
      %1498 = vrot.lane.b32.xlu0 %v1018, 1
      %v1499 = vpop.permute.xlu0 %1498
      %1500 = vrot.lane.b32.xlu0 %v1019, 1
      %v1501 = vpop.permute.xlu0 %1500
      %1502 = vrot.lane.b32.xlu0 %v1020, 1
      %v1503 = vpop.permute.xlu0 %1502
      %1504 = vrot.lane.b32.xlu0 %v1021, 1
      %v1505 = vpop.permute.xlu0 %1504
      %1506 = vrot.lane.b32.xlu0 %v1022, 1
      %v1507 = vpop.permute.xlu0 %1506
      %1508 = vrot.lane.b32.xlu0 %v1023, 1
      %v1509 = vpop.permute.xlu0 %1508
      %1510 = vrot.lane.b32.xlu0 %v1024, 1
      %v1511 = vpop.permute.xlu0 %1510
      %1512 = vrot.lane.b32.xlu0 %v1025, 1
      %v1513 = vpop.permute.xlu0 %1512
      %1514 = vrot.lane.b32.xlu0 %v1026, 1
      %v1515 = vpop.permute.xlu0 %1514
      %1516 = vrot.lane.b32.xlu0 %v1027, 1
      %v1517 = vpop.permute.xlu0 %1516
      %1518 = vrot.lane.b32.xlu0 %v1028, 1
      %v1519 = vpop.permute.xlu0 %1518
      %1520 = vrot.lane.b32.xlu0 %v1029, 1
      %v1521 = vpop.permute.xlu0 %1520
      %1522 = vrot.lane.b32.xlu0 %v1030, 1
      %v1523 = vpop.permute.xlu0 %1522
      %1524 = vrot.lane.b32.xlu0 %v1031, 1
      %v1525 = vpop.permute.xlu0 %1524
      %1526 = vrot.lane.b32.xlu0 %v1032, 1
      %v1527 = vpop.permute.xlu0 %1526
      %1528 = vrot.lane.b32.xlu0 %v1033, 1
      %v1529 = vpop.permute.xlu0 %1528
      %1530 = vrot.lane.b32.xlu0 %v1034, 1
      %v1531 = vpop.permute.xlu0 %1530
      %1532 = vrot.lane.b32.xlu0 %v1035, 1
      %v1533 = vpop.permute.xlu0 %1532
      %1534 = vrot.lane.b32.xlu0 %v1036, 1
      %v1535 = vpop.permute.xlu0 %1534
      %1536 = vrot.lane.b32.xlu0 %v1037, 1
      %v1537 = vpop.permute.xlu0 %1536
      %1538 = vrot.lane.b32.xlu0 %v1038, 1
      %v1539 = vpop.permute.xlu0 %1538
      %1540 = vrot.lane.b32.xlu0 %v1039, 1
      %v1541 = vpop.permute.xlu0 %1540
      %1542 = vrot.lane.b32.xlu0 %v1040, 1
      %v1543 = vpop.permute.xlu0 %1542
      %1544 = vrot.lane.b32.xlu0 %v1041, 1
      %v1545 = vpop.permute.xlu0 %1544
      %1672 = vrot.lane.b32.xlu0 %v1042, 2
      %v1673 = vpop.permute.xlu0 %1672
      %1674 = vrot.lane.b32.xlu0 %v1043, 2
      %v1675 = vpop.permute.xlu0 %1674
      %1676 = vrot.lane.b32.xlu0 %v1044, 2
      %v1677 = vpop.permute.xlu0 %1676
      %1678 = vrot.lane.b32.xlu0 %v1045, 2
      %v1679 = vpop.permute.xlu0 %1678
      %1680 = vrot.lane.b32.xlu0 %v1046, 2
      %v1681 = vpop.permute.xlu0 %1680
      %1682 = vrot.lane.b32.xlu0 %v1047, 2
      %v1683 = vpop.permute.xlu0 %1682
      %1684 = vrot.lane.b32.xlu0 %v1048, 2
      %v1685 = vpop.permute.xlu0 %1684
      %1686 = vrot.lane.b32.xlu0 %v1049, 2
      %v1687 = vpop.permute.xlu0 %1686
      %1688 = vrot.lane.b32.xlu0 %v1050, 2
      %v1689 = vpop.permute.xlu0 %1688
      %1690 = vrot.lane.b32.xlu0 %v1051, 2
      %v1691 = vpop.permute.xlu0 %1690
      %1692 = vrot.lane.b32.xlu0 %v1052, 2
      %v1693 = vpop.permute.xlu0 %1692
      %1694 = vrot.lane.b32.xlu0 %v1053, 2
      %v1695 = vpop.permute.xlu0 %1694
      %1696 = vrot.lane.b32.xlu0 %v1054, 2
      %v1697 = vpop.permute.xlu0 %1696
      %1698 = vrot.lane.b32.xlu0 %v1055, 2
      %v1699 = vpop.permute.xlu0 %1698
      %1700 = vrot.lane.b32.xlu0 %v1056, 2
      %v1701 = vpop.permute.xlu0 %1700
      %1702 = vrot.lane.b32.xlu0 %v1057, 2
      %v1703 = vpop.permute.xlu0 %1702
      %1704 = vrot.lane.b32.xlu0 %v1058, 2
      %v1705 = vpop.permute.xlu0 %1704
      %1706 = vrot.lane.b32.xlu0 %v1059, 2
      %v1707 = vpop.permute.xlu0 %1706
      %1708 = vrot.lane.b32.xlu0 %v1060, 2
      %v1709 = vpop.permute.xlu0 %1708
      %1710 = vrot.lane.b32.xlu0 %v1061, 2
      %v1711 = vpop.permute.xlu0 %1710
      %1712 = vrot.lane.b32.xlu0 %v1062, 2
      %v1713 = vpop.permute.xlu0 %1712
      %1714 = vrot.lane.b32.xlu0 %v1063, 2
      %v1715 = vpop.permute.xlu0 %1714
      %1716 = vrot.lane.b32.xlu0 %v1064, 2
      %v1717 = vpop.permute.xlu0 %1716
      %1718 = vrot.lane.b32.xlu0 %v1065, 2
      %v1719 = vpop.permute.xlu0 %1718
      %1720 = vrot.lane.b32.xlu0 %v1066, 2
      %v1721 = vpop.permute.xlu0 %1720
      %1722 = vrot.lane.b32.xlu0 %v1067, 2
      %v1723 = vpop.permute.xlu0 %1722
      %1724 = vrot.lane.b32.xlu0 %v1068, 2
      %v1725 = vpop.permute.xlu0 %1724
      %1726 = vrot.lane.b32.xlu0 %v1069, 2
      %v1727 = vpop.permute.xlu0 %1726
      %1728 = vrot.lane.b32.xlu0 %v1070, 2
      %v1729 = vpop.permute.xlu0 %1728
      %1730 = vrot.lane.b32.xlu0 %v1071, 2
      %v1731 = vpop.permute.xlu0 %1730
      %1732 = vrot.lane.b32.xlu0 %v1072, 2
      %v1733 = vpop.permute.xlu0 %1732
      %1734 = vrot.lane.b32.xlu0 %v1073, 2
      %v1735 = vpop.permute.xlu0 %1734
      %1736 = vrot.lane.b32.xlu0 %v1074, 2
      %v1737 = vpop.permute.xlu0 %1736
      %1738 = vrot.lane.b32.xlu0 %v1075, 2
      %v1739 = vpop.permute.xlu0 %1738
      %1740 = vrot.lane.b32.xlu0 %v1076, 2
      %v1741 = vpop.permute.xlu0 %1740
      %1742 = vrot.lane.b32.xlu0 %v1077, 2
      %v1743 = vpop.permute.xlu0 %1742
      %1744 = vrot.lane.b32.xlu0 %v1078, 2
      %v1745 = vpop.permute.xlu0 %1744
      %1746 = vrot.lane.b32.xlu0 %v1079, 2
      %v1747 = vpop.permute.xlu0 %1746
      %1748 = vrot.lane.b32.xlu0 %v1080, 2
      %v1749 = vpop.permute.xlu0 %1748
      %1750 = vrot.lane.b32.xlu0 %v1081, 2
      %v1751 = vpop.permute.xlu0 %1750
      %1752 = vrot.lane.b32.xlu0 %v1082, 2
      %v1753 = vpop.permute.xlu0 %1752
      %1754 = vrot.lane.b32.xlu0 %v1083, 2
      %v1755 = vpop.permute.xlu0 %1754
      %1756 = vrot.lane.b32.xlu0 %v1084, 2
      %v1757 = vpop.permute.xlu0 %1756
      %1758 = vrot.lane.b32.xlu0 %v1085, 2
      %v1759 = vpop.permute.xlu0 %1758
      %1760 = vrot.lane.b32.xlu0 %v1086, 2
      %v1761 = vpop.permute.xlu0 %1760
      %1762 = vrot.lane.b32.xlu0 %v1087, 2
      %v1763 = vpop.permute.xlu0 %1762
      %1764 = vrot.lane.b32.xlu0 %v1088, 2
      %v1765 = vpop.permute.xlu0 %1764
      %1766 = vrot.lane.b32.xlu0 %v1089, 2
      %v1767 = vpop.permute.xlu0 %1766
      %1768 = vrot.lane.b32.xlu0 %v1090, 2
      %v1769 = vpop.permute.xlu0 %1768
      %1770 = vrot.lane.b32.xlu0 %v1091, 2
      %v1771 = vpop.permute.xlu0 %1770
      %1772 = vrot.lane.b32.xlu0 %v1092, 2
      %v1773 = vpop.permute.xlu0 %1772
      %1774 = vrot.lane.b32.xlu0 %v1093, 2
      %v1775 = vpop.permute.xlu0 %1774
      %1776 = vrot.lane.b32.xlu0 %v1094, 2
      %v1777 = vpop.permute.xlu0 %1776
      %1778 = vrot.lane.b32.xlu0 %v1095, 2
      %v1779 = vpop.permute.xlu0 %1778
      %1780 = vrot.lane.b32.xlu0 %v1096, 2
      %v1781 = vpop.permute.xlu0 %1780
      %1782 = vrot.lane.b32.xlu0 %v1097, 2
      %v1783 = vpop.permute.xlu0 %1782
      %1784 = vrot.lane.b32.xlu0 %v1098, 2
      %v1785 = vpop.permute.xlu0 %1784
      %1786 = vrot.lane.b32.xlu0 %v1099, 2
      %v1787 = vpop.permute.xlu0 %1786
      %1788 = vrot.lane.b32.xlu0 %v1100, 2
      %v1789 = vpop.permute.xlu0 %1788
      %1790 = vrot.lane.b32.xlu0 %v1101, 2
      %v1791 = vpop.permute.xlu0 %1790
      %1792 = vrot.lane.b32.xlu0 %v1102, 2
      %v1793 = vpop.permute.xlu0 %1792
      %1794 = vrot.lane.b32.xlu0 %v1103, 2
      %v1795 = vpop.permute.xlu0 %1794
      %1796 = vrot.lane.b32.xlu0 %v1104, 2
      %v1797 = vpop.permute.xlu0 %1796
      %1924 = vrot.lane.b32.xlu0 %v1105, 3
      %v1925 = vpop.permute.xlu0 %1924
      %1926 = vrot.lane.b32.xlu0 %v1106, 3
      %v1927 = vpop.permute.xlu0 %1926
      %1928 = vrot.lane.b32.xlu0 %v1107, 3
      %v1929 = vpop.permute.xlu0 %1928
      %1930 = vrot.lane.b32.xlu0 %v1108, 3
      %v1931 = vpop.permute.xlu0 %1930
      %1932 = vrot.lane.b32.xlu0 %v1109, 3
      %v1933 = vpop.permute.xlu0 %1932
      %1934 = vrot.lane.b32.xlu0 %v1110, 3
      %v1935 = vpop.permute.xlu0 %1934
      %1936 = vrot.lane.b32.xlu0 %v1111, 3
      %v1937 = vpop.permute.xlu0 %1936
      %1938 = vrot.lane.b32.xlu0 %v1112, 3
      %v1939 = vpop.permute.xlu0 %1938
      %1940 = vrot.lane.b32.xlu0 %v1113, 3
      %v1941 = vpop.permute.xlu0 %1940
      %1942 = vrot.lane.b32.xlu0 %v1114, 3
      %v1943 = vpop.permute.xlu0 %1942
      %1944 = vrot.lane.b32.xlu0 %v1115, 3
      %v1945 = vpop.permute.xlu0 %1944
      %1946 = vrot.lane.b32.xlu0 %v1116, 3
      %v1947 = vpop.permute.xlu0 %1946
      %1948 = vrot.lane.b32.xlu0 %v1117, 3
      %v1949 = vpop.permute.xlu0 %1948
      %1950 = vrot.lane.b32.xlu0 %v1118, 3
      %v1951 = vpop.permute.xlu0 %1950
      %1952 = vrot.lane.b32.xlu0 %v1119, 3
      %v1953 = vpop.permute.xlu0 %1952
      %1954 = vrot.lane.b32.xlu0 %v1120, 3
      %v1955 = vpop.permute.xlu0 %1954
      %1956 = vrot.lane.b32.xlu0 %v1121, 3
      %v1957 = vpop.permute.xlu0 %1956
      %1958 = vrot.lane.b32.xlu0 %v1122, 3
      %v1959 = vpop.permute.xlu0 %1958
      %1960 = vrot.lane.b32.xlu0 %v1123, 3
      %v1961 = vpop.permute.xlu0 %1960
      %1962 = vrot.lane.b32.xlu0 %v1124, 3
      %v1963 = vpop.permute.xlu0 %1962
      %1964 = vrot.lane.b32.xlu0 %v1125, 3
      %v1965 = vpop.permute.xlu0 %1964
      %1966 = vrot.lane.b32.xlu0 %v1126, 3
      %v1967 = vpop.permute.xlu0 %1966
      %1968 = vrot.lane.b32.xlu0 %v1127, 3
      %v1969 = vpop.permute.xlu0 %1968
      %1970 = vrot.lane.b32.xlu0 %v1128, 3
      %v1971 = vpop.permute.xlu0 %1970
      %1972 = vrot.lane.b32.xlu0 %v1129, 3
      %v1973 = vpop.permute.xlu0 %1972
      %1974 = vrot.lane.b32.xlu0 %v1130, 3
      %v1975 = vpop.permute.xlu0 %1974
      %1976 = vrot.lane.b32.xlu0 %v1131, 3
      %v1977 = vpop.permute.xlu0 %1976
      %1978 = vrot.lane.b32.xlu0 %v1132, 3
      %v1979 = vpop.permute.xlu0 %1978
      %1980 = vrot.lane.b32.xlu0 %v1133, 3
      %v1981 = vpop.permute.xlu0 %1980
      %1982 = vrot.lane.b32.xlu0 %v1134, 3
      %v1983 = vpop.permute.xlu0 %1982
      %1984 = vrot.lane.b32.xlu0 %v1135, 3
      %v1985 = vpop.permute.xlu0 %1984
      %1986 = vrot.lane.b32.xlu0 %v1136, 3
      %v1987 = vpop.permute.xlu0 %1986
      %1988 = vrot.lane.b32.xlu0 %v1137, 3
      %v1989 = vpop.permute.xlu0 %1988
      %1990 = vrot.lane.b32.xlu0 %v1138, 3
      %v1991 = vpop.permute.xlu0 %1990
      %1992 = vrot.lane.b32.xlu0 %v1139, 3
      %v1993 = vpop.permute.xlu0 %1992
      %1994 = vrot.lane.b32.xlu0 %v1140, 3
      %v1995 = vpop.permute.xlu0 %1994
      %1996 = vrot.lane.b32.xlu0 %v1141, 3
      %v1997 = vpop.permute.xlu0 %1996
      %1998 = vrot.lane.b32.xlu0 %v1142, 3
      %v1999 = vpop.permute.xlu0 %1998
      %2000 = vrot.lane.b32.xlu0 %v1143, 3
      %v2001 = vpop.permute.xlu0 %2000
      %2002 = vrot.lane.b32.xlu0 %v1144, 3
      %v2003 = vpop.permute.xlu0 %2002
      %2004 = vrot.lane.b32.xlu0 %v1145, 3
      %v2005 = vpop.permute.xlu0 %2004
      %2006 = vrot.lane.b32.xlu0 %v1146, 3
      %v2007 = vpop.permute.xlu0 %2006
      %2008 = vrot.lane.b32.xlu0 %v1147, 3
      %v2009 = vpop.permute.xlu0 %2008
      %2010 = vrot.lane.b32.xlu0 %v1148, 3
      %v2011 = vpop.permute.xlu0 %2010
      %2012 = vrot.lane.b32.xlu0 %v1149, 3
      %v2013 = vpop.permute.xlu0 %2012
      %2014 = vrot.lane.b32.xlu0 %v1150, 3
      %v2015 = vpop.permute.xlu0 %2014
      %2016 = vrot.lane.b32.xlu0 %v1151, 3
      %v2017 = vpop.permute.xlu0 %2016
      %2018 = vrot.lane.b32.xlu0 %v1152, 3
      %v2019 = vpop.permute.xlu0 %2018
      %2020 = vrot.lane.b32.xlu0 %v1153, 3
      %v2021 = vpop.permute.xlu0 %2020
      %2022 = vrot.lane.b32.xlu0 %v1154, 3
      %v2023 = vpop.permute.xlu0 %2022
      %2024 = vrot.lane.b32.xlu0 %v1155, 3
      %v2025 = vpop.permute.xlu0 %2024
      %2026 = vrot.lane.b32.xlu0 %v1156, 3
      %v2027 = vpop.permute.xlu0 %2026
      %2028 = vrot.lane.b32.xlu0 %v1157, 3
      %v2029 = vpop.permute.xlu0 %2028
      %2030 = vrot.lane.b32.xlu0 %v1158, 3
      %v2031 = vpop.permute.xlu0 %2030
      %2032 = vrot.lane.b32.xlu0 %v1159, 3
      %v2033 = vpop.permute.xlu0 %2032
      %2034 = vrot.lane.b32.xlu0 %v1160, 3
      %v2035 = vpop.permute.xlu0 %2034
      %2036 = vrot.lane.b32.xlu0 %v1161, 3
      %v2037 = vpop.permute.xlu0 %2036
      %2038 = vrot.lane.b32.xlu0 %v1162, 3
      %v2039 = vpop.permute.xlu0 %2038
      %2040 = vrot.lane.b32.xlu0 %v1163, 3
      %v2041 = vpop.permute.xlu0 %2040
      %2042 = vrot.lane.b32.xlu0 %v1164, 3
      %v2043 = vpop.permute.xlu0 %2042
      %2044 = vrot.lane.b32.xlu0 %v1165, 3
      %v2045 = vpop.permute.xlu0 %2044
      %2046 = vrot.lane.b32.xlu0 %v1166, 3
      %v2047 = vpop.permute.xlu0 %2046
      %2048 = vrot.lane.b32.xlu0 %v1167, 3
      %v2049 = vpop.permute.xlu0 %2048
      %2176 = vrot.lane.b32.xlu0 %v1168, 4
      %v2177 = vpop.permute.xlu0 %2176
      %2178 = vrot.lane.b32.xlu0 %v1169, 4
      %v2179 = vpop.permute.xlu0 %2178
      %2180 = vrot.lane.b32.xlu0 %v1170, 4
      %v2181 = vpop.permute.xlu0 %2180
      %2182 = vrot.lane.b32.xlu0 %v1171, 4
      %v2183 = vpop.permute.xlu0 %2182
      %2184 = vrot.lane.b32.xlu0 %v1172, 4
      %v2185 = vpop.permute.xlu0 %2184
      %2186 = vrot.lane.b32.xlu0 %v1173, 4
      %v2187 = vpop.permute.xlu0 %2186
      %2188 = vrot.lane.b32.xlu0 %v1174, 4
      %v2189 = vpop.permute.xlu0 %2188
      %2190 = vrot.lane.b32.xlu0 %v1175, 4
      %v2191 = vpop.permute.xlu0 %2190
      %2192 = vrot.lane.b32.xlu0 %v1176, 4
      %v2193 = vpop.permute.xlu0 %2192
      %2194 = vrot.lane.b32.xlu0 %v1177, 4
      %v2195 = vpop.permute.xlu0 %2194
      %2196 = vrot.lane.b32.xlu0 %v1178, 4
      %v2197 = vpop.permute.xlu0 %2196
      %2198 = vrot.lane.b32.xlu0 %v1179, 4
      %v2199 = vpop.permute.xlu0 %2198
      %2200 = vrot.lane.b32.xlu0 %v1180, 4
      %v2201 = vpop.permute.xlu0 %2200
      %2202 = vrot.lane.b32.xlu0 %v1181, 4
      %v2203 = vpop.permute.xlu0 %2202
      %2204 = vrot.lane.b32.xlu0 %v1182, 4
      %v2205 = vpop.permute.xlu0 %2204
      %2206 = vrot.lane.b32.xlu0 %v1183, 4
      %v2207 = vpop.permute.xlu0 %2206
      %2208 = vrot.lane.b32.xlu0 %v1184, 4
      %v2209 = vpop.permute.xlu0 %2208
      %2210 = vrot.lane.b32.xlu0 %v1185, 4
      %v2211 = vpop.permute.xlu0 %2210
      %2212 = vrot.lane.b32.xlu0 %v1186, 4
      %v2213 = vpop.permute.xlu0 %2212
      %2214 = vrot.lane.b32.xlu0 %v1187, 4
      %v2215 = vpop.permute.xlu0 %2214
      %2216 = vrot.lane.b32.xlu0 %v1188, 4
      %v2217 = vpop.permute.xlu0 %2216
      %2218 = vrot.lane.b32.xlu0 %v1189, 4
      %v2219 = vpop.permute.xlu0 %2218
      %2220 = vrot.lane.b32.xlu0 %v1190, 4
      %v2221 = vpop.permute.xlu0 %2220
      %2222 = vrot.lane.b32.xlu0 %v1191, 4
      %v2223 = vpop.permute.xlu0 %2222
      %2224 = vrot.lane.b32.xlu0 %v1192, 4
      %v2225 = vpop.permute.xlu0 %2224
      %2226 = vrot.lane.b32.xlu0 %v1193, 4
      %v2227 = vpop.permute.xlu0 %2226
      %2228 = vrot.lane.b32.xlu0 %v1194, 4
      %v2229 = vpop.permute.xlu0 %2228
      %2230 = vrot.lane.b32.xlu0 %v1195, 4
      %v2231 = vpop.permute.xlu0 %2230
      %2232 = vrot.lane.b32.xlu0 %v1196, 4
      %v2233 = vpop.permute.xlu0 %2232
      %2234 = vrot.lane.b32.xlu0 %v1197, 4
      %v2235 = vpop.permute.xlu0 %2234
      %2236 = vrot.lane.b32.xlu0 %v1198, 4
      %v2237 = vpop.permute.xlu0 %2236
      %2238 = vrot.lane.b32.xlu0 %v1199, 4
      %v2239 = vpop.permute.xlu0 %2238
      %2240 = vrot.lane.b32.xlu0 %v1200, 4
      %v2241 = vpop.permute.xlu0 %2240
      %2242 = vrot.lane.b32.xlu0 %v1201, 4
      %v2243 = vpop.permute.xlu0 %2242
      %2244 = vrot.lane.b32.xlu0 %v1202, 4
      %v2245 = vpop.permute.xlu0 %2244
      %2246 = vrot.lane.b32.xlu0 %v1203, 4
      %v2247 = vpop.permute.xlu0 %2246
      %2248 = vrot.lane.b32.xlu0 %v1204, 4
      %v2249 = vpop.permute.xlu0 %2248
      %2250 = vrot.lane.b32.xlu0 %v1205, 4
      %v2251 = vpop.permute.xlu0 %2250
      %2252 = vrot.lane.b32.xlu0 %v1206, 4
      %v2253 = vpop.permute.xlu0 %2252
      %2254 = vrot.lane.b32.xlu0 %v1207, 4
      %v2255 = vpop.permute.xlu0 %2254
      %2256 = vrot.lane.b32.xlu0 %v1208, 4
      %v2257 = vpop.permute.xlu0 %2256
      %2258 = vrot.lane.b32.xlu0 %v1209, 4
      %v2259 = vpop.permute.xlu0 %2258
      %2260 = vrot.lane.b32.xlu0 %v1210, 4
      %v2261 = vpop.permute.xlu0 %2260
      %2262 = vrot.lane.b32.xlu0 %v1211, 4
      %v2263 = vpop.permute.xlu0 %2262
      %2264 = vrot.lane.b32.xlu0 %v1212, 4
      %v2265 = vpop.permute.xlu0 %2264
      %2266 = vrot.lane.b32.xlu0 %v1213, 4
      %v2267 = vpop.permute.xlu0 %2266
      %2268 = vrot.lane.b32.xlu0 %v1214, 4
      %v2269 = vpop.permute.xlu0 %2268
      %2270 = vrot.lane.b32.xlu0 %v1215, 4
      %v2271 = vpop.permute.xlu0 %2270
      %2272 = vrot.lane.b32.xlu0 %v1216, 4
      %v2273 = vpop.permute.xlu0 %2272
      %2274 = vrot.lane.b32.xlu0 %v1217, 4
      %v2275 = vpop.permute.xlu0 %2274
      %2276 = vrot.lane.b32.xlu0 %v1218, 4
      %v2277 = vpop.permute.xlu0 %2276
      %2278 = vrot.lane.b32.xlu0 %v1219, 4
      %v2279 = vpop.permute.xlu0 %2278
      %2280 = vrot.lane.b32.xlu0 %v1220, 4
      %v2281 = vpop.permute.xlu0 %2280
      %2282 = vrot.lane.b32.xlu0 %v1221, 4
      %v2283 = vpop.permute.xlu0 %2282
      %2284 = vrot.lane.b32.xlu0 %v1222, 4
      %v2285 = vpop.permute.xlu0 %2284
      %2286 = vrot.lane.b32.xlu0 %v1223, 4
      %v2287 = vpop.permute.xlu0 %2286
      %2288 = vrot.lane.b32.xlu0 %v1224, 4
      %v2289 = vpop.permute.xlu0 %2288
      %2290 = vrot.lane.b32.xlu0 %v1225, 4
      %v2291 = vpop.permute.xlu0 %2290
      %2292 = vrot.lane.b32.xlu0 %v1226, 4
      %v2293 = vpop.permute.xlu0 %2292
      %2294 = vrot.lane.b32.xlu0 %v1227, 4
      %v2295 = vpop.permute.xlu0 %2294
      %2296 = vrot.lane.b32.xlu0 %v1228, 4
      %v2297 = vpop.permute.xlu0 %2296
      %2298 = vrot.lane.b32.xlu0 %v1229, 4
      %v2299 = vpop.permute.xlu0 %2298
      %2300 = vrot.lane.b32.xlu0 %v1230, 4
      %v2301 = vpop.permute.xlu0 %2300
      %2428 = vrot.lane.b32.xlu0 %v1231, 5
      %v2429 = vpop.permute.xlu0 %2428
      %2430 = vrot.lane.b32.xlu0 %v1232, 5
      %v2431 = vpop.permute.xlu0 %2430
      %2432 = vrot.lane.b32.xlu0 %v1233, 5
      %v2433 = vpop.permute.xlu0 %2432
      %2434 = vrot.lane.b32.xlu0 %v1234, 5
      %v2435 = vpop.permute.xlu0 %2434
      %2436 = vrot.lane.b32.xlu0 %v1235, 5
      %v2437 = vpop.permute.xlu0 %2436
      %2438 = vrot.lane.b32.xlu0 %v1236, 5
      %v2439 = vpop.permute.xlu0 %2438
      %2440 = vrot.lane.b32.xlu0 %v1237, 5
      %v2441 = vpop.permute.xlu0 %2440
      %2442 = vrot.lane.b32.xlu0 %v1238, 5
      %v2443 = vpop.permute.xlu0 %2442
      %2444 = vrot.lane.b32.xlu0 %v1239, 5
      %v2445 = vpop.permute.xlu0 %2444
      %2446 = vrot.lane.b32.xlu0 %v1240, 5
      %v2447 = vpop.permute.xlu0 %2446
      %2448 = vrot.lane.b32.xlu0 %v1241, 5
      %v2449 = vpop.permute.xlu0 %2448
      %2450 = vrot.lane.b32.xlu0 %v1242, 5
      %v2451 = vpop.permute.xlu0 %2450
      %2452 = vrot.lane.b32.xlu0 %v1243, 5
      %v2453 = vpop.permute.xlu0 %2452
      %2454 = vrot.lane.b32.xlu0 %v1244, 5
      %v2455 = vpop.permute.xlu0 %2454
      %2456 = vrot.lane.b32.xlu0 %v1245, 5
      %v2457 = vpop.permute.xlu0 %2456
      %2458 = vrot.lane.b32.xlu0 %v1246, 5
      %v2459 = vpop.permute.xlu0 %2458
      %2460 = vrot.lane.b32.xlu0 %v1247, 5
      %v2461 = vpop.permute.xlu0 %2460
      %2462 = vrot.lane.b32.xlu0 %v1248, 5
      %v2463 = vpop.permute.xlu0 %2462
      %2464 = vrot.lane.b32.xlu0 %v1249, 5
      %v2465 = vpop.permute.xlu0 %2464
      %2466 = vrot.lane.b32.xlu0 %v1250, 5
      %v2467 = vpop.permute.xlu0 %2466
      %2468 = vrot.lane.b32.xlu0 %v1251, 5
      %v2469 = vpop.permute.xlu0 %2468
      %2470 = vrot.lane.b32.xlu0 %v1252, 5
      %v2471 = vpop.permute.xlu0 %2470
      %2472 = vrot.lane.b32.xlu0 %v1253, 5
      %v2473 = vpop.permute.xlu0 %2472
      %2474 = vrot.lane.b32.xlu0 %v1254, 5
      %v2475 = vpop.permute.xlu0 %2474
      %2476 = vrot.lane.b32.xlu0 %v1255, 5
      %v2477 = vpop.permute.xlu0 %2476
      %2478 = vrot.lane.b32.xlu0 %v1256, 5
      %v2479 = vpop.permute.xlu0 %2478
      %2480 = vrot.lane.b32.xlu0 %v1257, 5
      %v2481 = vpop.permute.xlu0 %2480
      %2482 = vrot.lane.b32.xlu0 %v1258, 5
      %v2483 = vpop.permute.xlu0 %2482
      %2484 = vrot.lane.b32.xlu0 %v1259, 5
      %v2485 = vpop.permute.xlu0 %2484
      %2486 = vrot.lane.b32.xlu0 %v1260, 5
      %v2487 = vpop.permute.xlu0 %2486
      %2488 = vrot.lane.b32.xlu0 %v1261, 5
      %v2489 = vpop.permute.xlu0 %2488
      %2490 = vrot.lane.b32.xlu0 %v1262, 5
      %v2491 = vpop.permute.xlu0 %2490
      %2492 = vrot.lane.b32.xlu0 %v1263, 5
      %v2493 = vpop.permute.xlu0 %2492
      %2494 = vrot.lane.b32.xlu0 %v1264, 5
      %v2495 = vpop.permute.xlu0 %2494
      %2496 = vrot.lane.b32.xlu0 %v1265, 5
      %v2497 = vpop.permute.xlu0 %2496
      %2498 = vrot.lane.b32.xlu0 %v1266, 5
      %v2499 = vpop.permute.xlu0 %2498
      %2500 = vrot.lane.b32.xlu0 %v1267, 5
      %v2501 = vpop.permute.xlu0 %2500
      %2502 = vrot.lane.b32.xlu0 %v1268, 5
      %v2503 = vpop.permute.xlu0 %2502
      %2504 = vrot.lane.b32.xlu0 %v1269, 5
      %v2505 = vpop.permute.xlu0 %2504
      %2506 = vrot.lane.b32.xlu0 %v1270, 5
      %v2507 = vpop.permute.xlu0 %2506
      %2508 = vrot.lane.b32.xlu0 %v1271, 5
      %v2509 = vpop.permute.xlu0 %2508
      %2510 = vrot.lane.b32.xlu0 %v1272, 5
      %v2511 = vpop.permute.xlu0 %2510
      %2512 = vrot.lane.b32.xlu0 %v1273, 5
      %v2513 = vpop.permute.xlu0 %2512
      %2514 = vrot.lane.b32.xlu0 %v1274, 5
      %v2515 = vpop.permute.xlu0 %2514
      %2516 = vrot.lane.b32.xlu0 %v1275, 5
      %v2517 = vpop.permute.xlu0 %2516
      %2518 = vrot.lane.b32.xlu0 %v1276, 5
      %v2519 = vpop.permute.xlu0 %2518
      %2520 = vrot.lane.b32.xlu0 %v1277, 5
      %v2521 = vpop.permute.xlu0 %2520
      %2522 = vrot.lane.b32.xlu0 %v1278, 5
      %v2523 = vpop.permute.xlu0 %2522
      %2524 = vrot.lane.b32.xlu0 %v1279, 5
      %v2525 = vpop.permute.xlu0 %2524
      %2526 = vrot.lane.b32.xlu0 %v1280, 5
      %v2527 = vpop.permute.xlu0 %2526
      %2528 = vrot.lane.b32.xlu0 %v1281, 5
      %v2529 = vpop.permute.xlu0 %2528
      %2530 = vrot.lane.b32.xlu0 %v1282, 5
      %v2531 = vpop.permute.xlu0 %2530
      %2532 = vrot.lane.b32.xlu0 %v1283, 5
      %v2533 = vpop.permute.xlu0 %2532
      %2534 = vrot.lane.b32.xlu0 %v1284, 5
      %v2535 = vpop.permute.xlu0 %2534
      %2536 = vrot.lane.b32.xlu0 %v1285, 5
      %v2537 = vpop.permute.xlu0 %2536
      %2538 = vrot.lane.b32.xlu0 %v1286, 5
      %v2539 = vpop.permute.xlu0 %2538
      %2540 = vrot.lane.b32.xlu0 %v1287, 5
      %v2541 = vpop.permute.xlu0 %2540
      %2542 = vrot.lane.b32.xlu0 %v1288, 5
      %v2543 = vpop.permute.xlu0 %2542
      %2544 = vrot.lane.b32.xlu0 %v1289, 5
      %v2545 = vpop.permute.xlu0 %2544
      %2546 = vrot.lane.b32.xlu0 %v1290, 5
      %v2547 = vpop.permute.xlu0 %2546
      %2548 = vrot.lane.b32.xlu0 %v1291, 5
      %v2549 = vpop.permute.xlu0 %2548
      %2550 = vrot.lane.b32.xlu0 %v1292, 5
      %v2551 = vpop.permute.xlu0 %2550
      %2552 = vrot.lane.b32.xlu0 %v1293, 5
      %v2553 = vpop.permute.xlu0 %2552
      %2680 = vrot.lane.b32.xlu0 %v1294, 6
      %v2681 = vpop.permute.xlu0 %2680
      %2682 = vrot.lane.b32.xlu0 %v1295, 6
      %v2683 = vpop.permute.xlu0 %2682
      %2684 = vrot.lane.b32.xlu0 %v1296, 6
      %v2685 = vpop.permute.xlu0 %2684
      %2686 = vrot.lane.b32.xlu0 %v1297, 6
      %v2687 = vpop.permute.xlu0 %2686
      %2688 = vrot.lane.b32.xlu0 %v1298, 6
      %v2689 = vpop.permute.xlu0 %2688
      %2690 = vrot.lane.b32.xlu0 %v1299, 6
      %v2691 = vpop.permute.xlu0 %2690
      %2692 = vrot.lane.b32.xlu0 %v1300, 6
      %v2693 = vpop.permute.xlu0 %2692
      %2694 = vrot.lane.b32.xlu0 %v1301, 6
      %v2695 = vpop.permute.xlu0 %2694
      %2696 = vrot.lane.b32.xlu0 %v1302, 6
      %v2697 = vpop.permute.xlu0 %2696
      %2698 = vrot.lane.b32.xlu0 %v1303, 6
      %v2699 = vpop.permute.xlu0 %2698
      %2700 = vrot.lane.b32.xlu0 %v1304, 6
      %v2701 = vpop.permute.xlu0 %2700
      %2702 = vrot.lane.b32.xlu0 %v1305, 6
      %v2703 = vpop.permute.xlu0 %2702
      %2704 = vrot.lane.b32.xlu0 %v1306, 6
      %v2705 = vpop.permute.xlu0 %2704
      %2706 = vrot.lane.b32.xlu0 %v1307, 6
      %v2707 = vpop.permute.xlu0 %2706
      %2708 = vrot.lane.b32.xlu0 %v1308, 6
      %v2709 = vpop.permute.xlu0 %2708
      %2710 = vrot.lane.b32.xlu0 %v1309, 6
      %v2711 = vpop.permute.xlu0 %2710
      %2712 = vrot.lane.b32.xlu0 %v1310, 6
      %v2713 = vpop.permute.xlu0 %2712
      %2714 = vrot.lane.b32.xlu0 %v1311, 6
      %v2715 = vpop.permute.xlu0 %2714
      %2716 = vrot.lane.b32.xlu0 %v1312, 6
      %v2717 = vpop.permute.xlu0 %2716
      %2718 = vrot.lane.b32.xlu0 %v1313, 6
      %v2719 = vpop.permute.xlu0 %2718
      %2720 = vrot.lane.b32.xlu0 %v1314, 6
      %v2721 = vpop.permute.xlu0 %2720
      %2722 = vrot.lane.b32.xlu0 %v1315, 6
      %v2723 = vpop.permute.xlu0 %2722
      %2724 = vrot.lane.b32.xlu0 %v1316, 6
      %v2725 = vpop.permute.xlu0 %2724
      %2726 = vrot.lane.b32.xlu0 %v1317, 6
      %v2727 = vpop.permute.xlu0 %2726
      %2728 = vrot.lane.b32.xlu0 %v1318, 6
      %v2729 = vpop.permute.xlu0 %2728
      %2730 = vrot.lane.b32.xlu0 %v1319, 6
      %v2731 = vpop.permute.xlu0 %2730
      %2732 = vrot.lane.b32.xlu0 %v1320, 6
      %v2733 = vpop.permute.xlu0 %2732
      %2734 = vrot.lane.b32.xlu0 %v1321, 6
      %v2735 = vpop.permute.xlu0 %2734
      %2736 = vrot.lane.b32.xlu0 %v1322, 6
      %v2737 = vpop.permute.xlu0 %2736
      %2738 = vrot.lane.b32.xlu0 %v1323, 6
      %v2739 = vpop.permute.xlu0 %2738
      %2740 = vrot.lane.b32.xlu0 %v1324, 6
      %v2741 = vpop.permute.xlu0 %2740
      %2742 = vrot.lane.b32.xlu0 %v1325, 6
      %v2743 = vpop.permute.xlu0 %2742
      %2744 = vrot.lane.b32.xlu0 %v1326, 6
      %v2745 = vpop.permute.xlu0 %2744
      %2746 = vrot.lane.b32.xlu0 %v1327, 6
      %v2747 = vpop.permute.xlu0 %2746
      %2748 = vrot.lane.b32.xlu0 %v1328, 6
      %v2749 = vpop.permute.xlu0 %2748
      %2750 = vrot.lane.b32.xlu0 %v1329, 6
      %v2751 = vpop.permute.xlu0 %2750
      %2752 = vrot.lane.b32.xlu0 %v1330, 6
      %v2753 = vpop.permute.xlu0 %2752
      %2754 = vrot.lane.b32.xlu0 %v1331, 6
      %v2755 = vpop.permute.xlu0 %2754
      %2756 = vrot.lane.b32.xlu0 %v1332, 6
      %v2757 = vpop.permute.xlu0 %2756
      %2758 = vrot.lane.b32.xlu0 %v1333, 6
      %v2759 = vpop.permute.xlu0 %2758
      %2760 = vrot.lane.b32.xlu0 %v1334, 6
      %v2761 = vpop.permute.xlu0 %2760
      %2762 = vrot.lane.b32.xlu0 %v1335, 6
      %v2763 = vpop.permute.xlu0 %2762
      %2764 = vrot.lane.b32.xlu0 %v1336, 6
      %v2765 = vpop.permute.xlu0 %2764
      %2766 = vrot.lane.b32.xlu0 %v1337, 6
      %v2767 = vpop.permute.xlu0 %2766
      %2768 = vrot.lane.b32.xlu0 %v1338, 6
      %v2769 = vpop.permute.xlu0 %2768
      %2770 = vrot.lane.b32.xlu0 %v1339, 6
      %v2771 = vpop.permute.xlu0 %2770
      %2772 = vrot.lane.b32.xlu0 %v1340, 6
      %v2773 = vpop.permute.xlu0 %2772
      %2774 = vrot.lane.b32.xlu0 %v1341, 6
      %v2775 = vpop.permute.xlu0 %2774
      %2776 = vrot.lane.b32.xlu0 %v1342, 6
      %v2777 = vpop.permute.xlu0 %2776
      %2778 = vrot.lane.b32.xlu0 %v1343, 6
      %v2779 = vpop.permute.xlu0 %2778
      %2780 = vrot.lane.b32.xlu0 %v1344, 6
      %v2781 = vpop.permute.xlu0 %2780
      %2782 = vrot.lane.b32.xlu0 %v1345, 6
      %v2783 = vpop.permute.xlu0 %2782
      %2784 = vrot.lane.b32.xlu0 %v1346, 6
      %v2785 = vpop.permute.xlu0 %2784
      %2786 = vrot.lane.b32.xlu0 %v1347, 6
      %v2787 = vpop.permute.xlu0 %2786
      %2788 = vrot.lane.b32.xlu0 %v1348, 6
      %v2789 = vpop.permute.xlu0 %2788
      %2790 = vrot.lane.b32.xlu0 %v1349, 6
      %v2791 = vpop.permute.xlu0 %2790
      %2792 = vrot.lane.b32.xlu0 %v1350, 6
      %v2793 = vpop.permute.xlu0 %2792
      %2794 = vrot.lane.b32.xlu0 %v1351, 6
      %v2795 = vpop.permute.xlu0 %2794
      %2796 = vrot.lane.b32.xlu0 %v1352, 6
      %v2797 = vpop.permute.xlu0 %2796
      %2798 = vrot.lane.b32.xlu0 %v1353, 6
      %v2799 = vpop.permute.xlu0 %2798
      %2800 = vrot.lane.b32.xlu0 %v1354, 6
      %v2801 = vpop.permute.xlu0 %2800
      %2802 = vrot.lane.b32.xlu0 %v1355, 6
      %v2803 = vpop.permute.xlu0 %2802
      %2804 = vrot.lane.b32.xlu0 %v1356, 6
      %v2805 = vpop.permute.xlu0 %2804
      %v2869 = vsel %vm342, %v916, %v1421
      %v2870 = vsel %vm342, %v917, %v1423
      %v2871 = vsel %vm342, %v918, %v1425
      %v2872 = vsel %vm342, %v919, %v1427
      %v2873 = vsel %vm342, %v920, %v1429
      %v2874 = vsel %vm342, %v921, %v1431
      %v2875 = vsel %vm342, %v922, %v1433
      %v2876 = vsel %vm342, %v923, %v1435
      %v2877 = vsel %vm342, %v924, %v1437
      %v2878 = vsel %vm342, %v925, %v1439
      %v2879 = vsel %vm342, %v926, %v1441
      %v2880 = vsel %vm342, %v927, %v1443
      %v2881 = vsel %vm342, %v928, %v1445
      %v2882 = vsel %vm342, %v929, %v1447
      %v2883 = vsel %vm342, %v930, %v1449
      %v2884 = vsel %vm342, %v931, %v1451
      %v2885 = vsel %vm342, %v932, %v1453
      %v2886 = vsel %vm342, %v933, %v1455
      %v2887 = vsel %vm342, %v934, %v1457
      %v2888 = vsel %vm342, %v935, %v1459
      %v2889 = vsel %vm342, %v936, %v1461
      %v2890 = vsel %vm342, %v937, %v1463
      %v2891 = vsel %vm342, %v938, %v1465
      %v2892 = vsel %vm342, %v939, %v1467
      %v2893 = vsel %vm342, %v940, %v1469
      %v2894 = vsel %vm342, %v941, %v1471
      %v2895 = vsel %vm342, %v942, %v1473
      %v2896 = vsel %vm342, %v943, %v1475
      %v2897 = vsel %vm342, %v944, %v1477
      %v2898 = vsel %vm342, %v945, %v1479
      %v2899 = vsel %vm342, %v946, %v1481
      %v2900 = vsel %vm342, %v947, %v1483
      %v2901 = vsel %vm342, %v948, %v1485
      %v2902 = vsel %vm342, %v949, %v1487
      %v2903 = vsel %vm342, %v950, %v1489
      %v2904 = vsel %vm342, %v951, %v1491
      %v2905 = vsel %vm342, %v952, %v1493
      %v2906 = vsel %vm342, %v953, %v1495
      %v2907 = vsel %vm342, %v954, %v1497
      %v2908 = vsel %vm342, %v955, %v1499
      %v2909 = vsel %vm342, %v956, %v1501
      %v2910 = vsel %vm342, %v957, %v1503
      %v2911 = vsel %vm342, %v958, %v1505
      %v2912 = vsel %vm342, %v959, %v1507
      %v2913 = vsel %vm342, %v960, %v1509
      %v2914 = vsel %vm342, %v961, %v1511
      %v2915 = vsel %vm342, %v962, %v1513
      %v2916 = vsel %vm342, %v963, %v1515
      %v2917 = vsel %vm342, %v964, %v1517
      %v2918 = vsel %vm342, %v965, %v1519
      %v2919 = vsel %vm342, %v966, %v1521
      %v2920 = vsel %vm342, %v967, %v1523
      %v2921 = vsel %vm342, %v968, %v1525
      %v2922 = vsel %vm342, %v969, %v1527
      %v2923 = vsel %vm342, %v970, %v1529
      %v2924 = vsel %vm342, %v971, %v1531
      %v2925 = vsel %vm342, %v972, %v1533
      %v2926 = vsel %vm342, %v973, %v1535
      %v2927 = vsel %vm342, %v974, %v1537
      %v2928 = vsel %vm342, %v975, %v1539
      %v2929 = vsel %vm342, %v976, %v1541
      %v2930 = vsel %vm342, %v977, %v1543
      %v2931 = vsel %vm342, %v978, %v1545
      %vm2932 = vcmask 15360
      %v2933 = vsel %vm2932, %v2869, %v1673
      %v2934 = vsel %vm2932, %v2870, %v1675
      %v2935 = vsel %vm2932, %v2871, %v1677
      %v2936 = vsel %vm2932, %v2872, %v1679
      %v2937 = vsel %vm2932, %v2873, %v1681
      %v2938 = vsel %vm2932, %v2874, %v1683
      %v2939 = vsel %vm2932, %v2875, %v1685
      %v2940 = vsel %vm2932, %v2876, %v1687
      %v2941 = vsel %vm2932, %v2877, %v1689
      %v2942 = vsel %vm2932, %v2878, %v1691
      %v2943 = vsel %vm2932, %v2879, %v1693
      %v2944 = vsel %vm2932, %v2880, %v1695
      %v2945 = vsel %vm2932, %v2881, %v1697
      %v2946 = vsel %vm2932, %v2882, %v1699
      %v2947 = vsel %vm2932, %v2883, %v1701
      %v2948 = vsel %vm2932, %v2884, %v1703
      %v2949 = vsel %vm2932, %v2885, %v1705
      %v2950 = vsel %vm2932, %v2886, %v1707
      %v2951 = vsel %vm2932, %v2887, %v1709
      %v2952 = vsel %vm2932, %v2888, %v1711
      %v2953 = vsel %vm2932, %v2889, %v1713
      %v2954 = vsel %vm2932, %v2890, %v1715
      %v2955 = vsel %vm2932, %v2891, %v1717
      %v2956 = vsel %vm2932, %v2892, %v1719
      %v2957 = vsel %vm2932, %v2893, %v1721
      %v2958 = vsel %vm2932, %v2894, %v1723
      %v2959 = vsel %vm2932, %v2895, %v1725
      %v2960 = vsel %vm2932, %v2896, %v1727
      %v2961 = vsel %vm2932, %v2897, %v1729
      %v2962 = vsel %vm2932, %v2898, %v1731
      %v2963 = vsel %vm2932, %v2899, %v1733
      %v2964 = vsel %vm2932, %v2900, %v1735
      %v2965 = vsel %vm2932, %v2901, %v1737
      %v2966 = vsel %vm2932, %v2902, %v1739
      %v2967 = vsel %vm2932, %v2903, %v1741
      %v2968 = vsel %vm2932, %v2904, %v1743
      %v2969 = vsel %vm2932, %v2905, %v1745
      %v2970 = vsel %vm2932, %v2906, %v1747
      %v2971 = vsel %vm2932, %v2907, %v1749
      %v2972 = vsel %vm2932, %v2908, %v1751
      %v2973 = vsel %vm2932, %v2909, %v1753
      %v2974 = vsel %vm2932, %v2910, %v1755
      %v2975 = vsel %vm2932, %v2911, %v1757
      %v2976 = vsel %vm2932, %v2912, %v1759
      %v2977 = vsel %vm2932, %v2913, %v1761
      %v2978 = vsel %vm2932, %v2914, %v1763
      %v2979 = vsel %vm2932, %v2915, %v1765
      %v2980 = vsel %vm2932, %v2916, %v1767
      %v2981 = vsel %vm2932, %v2917, %v1769
      %v2982 = vsel %vm2932, %v2918, %v1771
      %v2983 = vsel %vm2932, %v2919, %v1773
      %v2984 = vsel %vm2932, %v2920, %v1775
      %v2985 = vsel %vm2932, %v2921, %v1777
      %v2986 = vsel %vm2932, %v2922, %v1779
      %v2987 = vsel %vm2932, %v2923, %v1781
      %v2988 = vsel %vm2932, %v2924, %v1783
      %v2989 = vsel %vm2932, %v2925, %v1785
      %v2990 = vsel %vm2932, %v2926, %v1787
      %v2991 = vsel %vm2932, %v2927, %v1789
      %v2992 = vsel %vm2932, %v2928, %v1791
      %v2993 = vsel %vm2932, %v2929, %v1793
      %v2994 = vsel %vm2932, %v2930, %v1795
      %v2995 = vsel %vm2932, %v2931, %v1797
      %vm2996 = vcmask 23552
      %v2997 = vsel %vm2996, %v2933, %v1925
      %v2998 = vsel %vm2996, %v2934, %v1927
      %v2999 = vsel %vm2996, %v2935, %v1929
      %v3000 = vsel %vm2996, %v2936, %v1931
      %v3001 = vsel %vm2996, %v2937, %v1933
      %v3002 = vsel %vm2996, %v2938, %v1935
      %v3003 = vsel %vm2996, %v2939, %v1937
      %v3004 = vsel %vm2996, %v2940, %v1939
      %v3005 = vsel %vm2996, %v2941, %v1941
      %v3006 = vsel %vm2996, %v2942, %v1943
      %v3007 = vsel %vm2996, %v2943, %v1945
      %v3008 = vsel %vm2996, %v2944, %v1947
      %v3009 = vsel %vm2996, %v2945, %v1949
      %v3010 = vsel %vm2996, %v2946, %v1951
      %v3011 = vsel %vm2996, %v2947, %v1953
      %v3012 = vsel %vm2996, %v2948, %v1955
      %v3013 = vsel %vm2996, %v2949, %v1957
      %v3014 = vsel %vm2996, %v2950, %v1959
      %v3015 = vsel %vm2996, %v2951, %v1961
      %v3016 = vsel %vm2996, %v2952, %v1963
      %v3017 = vsel %vm2996, %v2953, %v1965
      %v3018 = vsel %vm2996, %v2954, %v1967
      %v3019 = vsel %vm2996, %v2955, %v1969
      %v3020 = vsel %vm2996, %v2956, %v1971
      %v3021 = vsel %vm2996, %v2957, %v1973
      %v3022 = vsel %vm2996, %v2958, %v1975
      %v3023 = vsel %vm2996, %v2959, %v1977
      %v3024 = vsel %vm2996, %v2960, %v1979
      %v3025 = vsel %vm2996, %v2961, %v1981
      %v3026 = vsel %vm2996, %v2962, %v1983
      %v3027 = vsel %vm2996, %v2963, %v1985
      %v3028 = vsel %vm2996, %v2964, %v1987
      %v3029 = vsel %vm2996, %v2965, %v1989
      %v3030 = vsel %vm2996, %v2966, %v1991
      %v3031 = vsel %vm2996, %v2967, %v1993
      %v3032 = vsel %vm2996, %v2968, %v1995
      %v3033 = vsel %vm2996, %v2969, %v1997
      %v3034 = vsel %vm2996, %v2970, %v1999
      %v3035 = vsel %vm2996, %v2971, %v2001
      %v3036 = vsel %vm2996, %v2972, %v2003
      %v3037 = vsel %vm2996, %v2973, %v2005
      %v3038 = vsel %vm2996, %v2974, %v2007
      %v3039 = vsel %vm2996, %v2975, %v2009
      %v3040 = vsel %vm2996, %v2976, %v2011
      %v3041 = vsel %vm2996, %v2977, %v2013
      %v3042 = vsel %vm2996, %v2978, %v2015
      %v3043 = vsel %vm2996, %v2979, %v2017
      %v3044 = vsel %vm2996, %v2980, %v2019
      %v3045 = vsel %vm2996, %v2981, %v2021
      %v3046 = vsel %vm2996, %v2982, %v2023
      %v3047 = vsel %vm2996, %v2983, %v2025
      %v3048 = vsel %vm2996, %v2984, %v2027
      %v3049 = vsel %vm2996, %v2985, %v2029
      %v3050 = vsel %vm2996, %v2986, %v2031
      %v3051 = vsel %vm2996, %v2987, %v2033
      %v3052 = vsel %vm2996, %v2988, %v2035
      %v3053 = vsel %vm2996, %v2989, %v2037
      %v3054 = vsel %vm2996, %v2990, %v2039
      %v3055 = vsel %vm2996, %v2991, %v2041
      %v3056 = vsel %vm2996, %v2992, %v2043
      %v3057 = vsel %vm2996, %v2993, %v2045
      %v3058 = vsel %vm2996, %v2994, %v2047
      %v3059 = vsel %vm2996, %v2995, %v2049
      %vm3060 = vcmask 31744
      %v3061 = vsel %vm3060, %v2997, %v2177
      %v3062 = vsel %vm3060, %v2998, %v2179
      %v3063 = vsel %vm3060, %v2999, %v2181
      %v3064 = vsel %vm3060, %v3000, %v2183
      %v3065 = vsel %vm3060, %v3001, %v2185
      %v3066 = vsel %vm3060, %v3002, %v2187
      %v3067 = vsel %vm3060, %v3003, %v2189
      %v3068 = vsel %vm3060, %v3004, %v2191
      %v3069 = vsel %vm3060, %v3005, %v2193
      %v3070 = vsel %vm3060, %v3006, %v2195
      %v3071 = vsel %vm3060, %v3007, %v2197
      %v3072 = vsel %vm3060, %v3008, %v2199
      %v3073 = vsel %vm3060, %v3009, %v2201
      %v3074 = vsel %vm3060, %v3010, %v2203
      %v3075 = vsel %vm3060, %v3011, %v2205
      %v3076 = vsel %vm3060, %v3012, %v2207
      %v3077 = vsel %vm3060, %v3013, %v2209
      %v3078 = vsel %vm3060, %v3014, %v2211
      %v3079 = vsel %vm3060, %v3015, %v2213
      %v3080 = vsel %vm3060, %v3016, %v2215
      %v3081 = vsel %vm3060, %v3017, %v2217
      %v3082 = vsel %vm3060, %v3018, %v2219
      %v3083 = vsel %vm3060, %v3019, %v2221
      %v3084 = vsel %vm3060, %v3020, %v2223
      %v3085 = vsel %vm3060, %v3021, %v2225
      %v3086 = vsel %vm3060, %v3022, %v2227
      %v3087 = vsel %vm3060, %v3023, %v2229
      %v3088 = vsel %vm3060, %v3024, %v2231
      %v3089 = vsel %vm3060, %v3025, %v2233
      %v3090 = vsel %vm3060, %v3026, %v2235
      %v3091 = vsel %vm3060, %v3027, %v2237
      %v3092 = vsel %vm3060, %v3028, %v2239
      %v3093 = vsel %vm3060, %v3029, %v2241
      %v3094 = vsel %vm3060, %v3030, %v2243
      %v3095 = vsel %vm3060, %v3031, %v2245
      %v3096 = vsel %vm3060, %v3032, %v2247
      %v3097 = vsel %vm3060, %v3033, %v2249
      %v3098 = vsel %vm3060, %v3034, %v2251
      %v3099 = vsel %vm3060, %v3035, %v2253
      %v3100 = vsel %vm3060, %v3036, %v2255
      %v3101 = vsel %vm3060, %v3037, %v2257
      %v3102 = vsel %vm3060, %v3038, %v2259
      %v3103 = vsel %vm3060, %v3039, %v2261
      %v3104 = vsel %vm3060, %v3040, %v2263
      %v3105 = vsel %vm3060, %v3041, %v2265
      %v3106 = vsel %vm3060, %v3042, %v2267
      %v3107 = vsel %vm3060, %v3043, %v2269
      %v3108 = vsel %vm3060, %v3044, %v2271
      %v3109 = vsel %vm3060, %v3045, %v2273
      %v3110 = vsel %vm3060, %v3046, %v2275
      %v3111 = vsel %vm3060, %v3047, %v2277
      %v3112 = vsel %vm3060, %v3048, %v2279
      %v3113 = vsel %vm3060, %v3049, %v2281
      %v3114 = vsel %vm3060, %v3050, %v2283
      %v3115 = vsel %vm3060, %v3051, %v2285
      %v3116 = vsel %vm3060, %v3052, %v2287
      %v3117 = vsel %vm3060, %v3053, %v2289
      %v3118 = vsel %vm3060, %v3054, %v2291
      %v3119 = vsel %vm3060, %v3055, %v2293
      %v3120 = vsel %vm3060, %v3056, %v2295
      %v3121 = vsel %vm3060, %v3057, %v2297
      %v3122 = vsel %vm3060, %v3058, %v2299
      %v3123 = vsel %vm3060, %v3059, %v2301
      %vm3124 = vcmask 39936
      %v3125 = vsel %vm3124, %v3061, %v2429
      %v3126 = vsel %vm3124, %v3062, %v2431
      %v3127 = vsel %vm3124, %v3063, %v2433
      %v3128 = vsel %vm3124, %v3064, %v2435
      %v3129 = vsel %vm3124, %v3065, %v2437
      %v3130 = vsel %vm3124, %v3066, %v2439
      %v3131 = vsel %vm3124, %v3067, %v2441
      %v3132 = vsel %vm3124, %v3068, %v2443
      %v3133 = vsel %vm3124, %v3069, %v2445
      %v3134 = vsel %vm3124, %v3070, %v2447
      %v3135 = vsel %vm3124, %v3071, %v2449
      %v3136 = vsel %vm3124, %v3072, %v2451
      %v3137 = vsel %vm3124, %v3073, %v2453
      %v3138 = vsel %vm3124, %v3074, %v2455
      %v3139 = vsel %vm3124, %v3075, %v2457
      %v3140 = vsel %vm3124, %v3076, %v2459
      %v3141 = vsel %vm3124, %v3077, %v2461
      %v3142 = vsel %vm3124, %v3078, %v2463
      %v3143 = vsel %vm3124, %v3079, %v2465
      %v3144 = vsel %vm3124, %v3080, %v2467
      %v3145 = vsel %vm3124, %v3081, %v2469
      %v3146 = vsel %vm3124, %v3082, %v2471
      %v3147 = vsel %vm3124, %v3083, %v2473
      %v3148 = vsel %vm3124, %v3084, %v2475
      %v3149 = vsel %vm3124, %v3085, %v2477
      %v3150 = vsel %vm3124, %v3086, %v2479
      %v3151 = vsel %vm3124, %v3087, %v2481
      %v3152 = vsel %vm3124, %v3088, %v2483
      %v3153 = vsel %vm3124, %v3089, %v2485
      %v3154 = vsel %vm3124, %v3090, %v2487
      %v3155 = vsel %vm3124, %v3091, %v2489
      %v3156 = vsel %vm3124, %v3092, %v2491
      %v3157 = vsel %vm3124, %v3093, %v2493
      %v3158 = vsel %vm3124, %v3094, %v2495
      %v3159 = vsel %vm3124, %v3095, %v2497
      %v3160 = vsel %vm3124, %v3096, %v2499
      %v3161 = vsel %vm3124, %v3097, %v2501
      %v3162 = vsel %vm3124, %v3098, %v2503
      %v3163 = vsel %vm3124, %v3099, %v2505
      %v3164 = vsel %vm3124, %v3100, %v2507
      %v3165 = vsel %vm3124, %v3101, %v2509
      %v3166 = vsel %vm3124, %v3102, %v2511
      %v3167 = vsel %vm3124, %v3103, %v2513
      %v3168 = vsel %vm3124, %v3104, %v2515
      %v3169 = vsel %vm3124, %v3105, %v2517
      %v3170 = vsel %vm3124, %v3106, %v2519
      %v3171 = vsel %vm3124, %v3107, %v2521
      %v3172 = vsel %vm3124, %v3108, %v2523
      %v3173 = vsel %vm3124, %v3109, %v2525
      %v3174 = vsel %vm3124, %v3110, %v2527
      %v3175 = vsel %vm3124, %v3111, %v2529
      %v3176 = vsel %vm3124, %v3112, %v2531
      %v3177 = vsel %vm3124, %v3113, %v2533
      %v3178 = vsel %vm3124, %v3114, %v2535
      %v3179 = vsel %vm3124, %v3115, %v2537
      %v3180 = vsel %vm3124, %v3116, %v2539
      %v3181 = vsel %vm3124, %v3117, %v2541
      %v3182 = vsel %vm3124, %v3118, %v2543
      %v3183 = vsel %vm3124, %v3119, %v2545
      %v3184 = vsel %vm3124, %v3120, %v2547
      %v3185 = vsel %vm3124, %v3121, %v2549
      %v3186 = vsel %vm3124, %v3122, %v2551
      %v3187 = vsel %vm3124, %v3123, %v2553
      %vm3188 = vcmask 48128
      %v3189 = vsel %vm3188, %v3125, %v2681
      %v3190 = vsel %vm3188, %v3126, %v2683
      %v3191 = vsel %vm3188, %v3127, %v2685
      %v3192 = vsel %vm3188, %v3128, %v2687
      %v3193 = vsel %vm3188, %v3129, %v2689
      %v3194 = vsel %vm3188, %v3130, %v2691
      %v3195 = vsel %vm3188, %v3131, %v2693
      %v3196 = vsel %vm3188, %v3132, %v2695
      %v3197 = vsel %vm3188, %v3133, %v2697
      %v3198 = vsel %vm3188, %v3134, %v2699
      %v3199 = vsel %vm3188, %v3135, %v2701
      %v3200 = vsel %vm3188, %v3136, %v2703
      %v3201 = vsel %vm3188, %v3137, %v2705
      %v3202 = vsel %vm3188, %v3138, %v2707
      %v3203 = vsel %vm3188, %v3139, %v2709
      %v3204 = vsel %vm3188, %v3140, %v2711
      %v3205 = vsel %vm3188, %v3141, %v2713
      %v3206 = vsel %vm3188, %v3142, %v2715
      %v3207 = vsel %vm3188, %v3143, %v2717
      %v3208 = vsel %vm3188, %v3144, %v2719
      %v3209 = vsel %vm3188, %v3145, %v2721
      %v3210 = vsel %vm3188, %v3146, %v2723
      %v3211 = vsel %vm3188, %v3147, %v2725
      %v3212 = vsel %vm3188, %v3148, %v2727
      %v3213 = vsel %vm3188, %v3149, %v2729
      %v3214 = vsel %vm3188, %v3150, %v2731
      %v3215 = vsel %vm3188, %v3151, %v2733
      %v3216 = vsel %vm3188, %v3152, %v2735
      %v3217 = vsel %vm3188, %v3153, %v2737
      %v3218 = vsel %vm3188, %v3154, %v2739
      %v3219 = vsel %vm3188, %v3155, %v2741
      %v3220 = vsel %vm3188, %v3156, %v2743
      %v3221 = vsel %vm3188, %v3157, %v2745
      %v3222 = vsel %vm3188, %v3158, %v2747
      %v3223 = vsel %vm3188, %v3159, %v2749
      %v3224 = vsel %vm3188, %v3160, %v2751
      %v3225 = vsel %vm3188, %v3161, %v2753
      %v3226 = vsel %vm3188, %v3162, %v2755
      %v3227 = vsel %vm3188, %v3163, %v2757
      %v3228 = vsel %vm3188, %v3164, %v2759
      %v3229 = vsel %vm3188, %v3165, %v2761
      %v3230 = vsel %vm3188, %v3166, %v2763
      %v3231 = vsel %vm3188, %v3167, %v2765
      %v3232 = vsel %vm3188, %v3168, %v2767
      %v3233 = vsel %vm3188, %v3169, %v2769
      %v3234 = vsel %vm3188, %v3170, %v2771
      %v3235 = vsel %vm3188, %v3171, %v2773
      %v3236 = vsel %vm3188, %v3172, %v2775
      %v3237 = vsel %vm3188, %v3173, %v2777
      %v3238 = vsel %vm3188, %v3174, %v2779
      %v3239 = vsel %vm3188, %v3175, %v2781
      %v3240 = vsel %vm3188, %v3176, %v2783
      %v3241 = vsel %vm3188, %v3177, %v2785
      %v3242 = vsel %vm3188, %v3178, %v2787
      %v3243 = vsel %vm3188, %v3179, %v2789
      %v3244 = vsel %vm3188, %v3180, %v2791
      %v3245 = vsel %vm3188, %v3181, %v2793
      %v3246 = vsel %vm3188, %v3182, %v2795
      %v3247 = vsel %vm3188, %v3183, %v2797
      %v3248 = vsel %vm3188, %v3184, %v2799
      %v3249 = vsel %vm3188, %v3185, %v2801
      %v3250 = vsel %vm3188, %v3186, %v2803
      %v3251 = vsel %vm3188, %v3187, %v2805
      %v3252 = vld [vmem:[%s1] sm:$0x7f]
      %v3253 = vld [vmem:[%s2] sm:$0x1]
      %v3255 = vperm.slane %v3253, 0
      %vm3257 = vcmask 56320
      %v3259 = vsel %vm3257, %v3189, 0
      %v3262 = vsel %vm3257, %v3190, 0
      %v3265 = vsel %vm3257, %v3191, 0
      %v3268 = vsel %vm3257, %v3192, 0
      %v3271 = vsel %vm3257, %v3193, 0
      %v3274 = vsel %vm3257, %v3194, 0
      %v3277 = vsel %vm3257, %v3195, 0
      %v3280 = vsel %vm3257, %v3196, 0
      %v3283 = vsel %vm3257, %v3197, 0
      %v3286 = vsel %vm3257, %v3198, 0
      %v3289 = vsel %vm3257, %v3199, 0
      %v3292 = vsel %vm3257, %v3200, 0
      %v3295 = vsel %vm3257, %v3201, 0
      %v3298 = vsel %vm3257, %v3202, 0
      %v3301 = vsel %vm3257, %v3203, 0
      %v3304 = vsel %vm3257, %v3204, 0
      %v3307 = vsel %vm3257, %v3205, 0
      %v3310 = vsel %vm3257, %v3206, 0
      %v3313 = vsel %vm3257, %v3207, 0
      %v3316 = vsel %vm3257, %v3208, 0
      %v3319 = vsel %vm3257, %v3209, 0
      %v3322 = vsel %vm3257, %v3210, 0
      %v3325 = vsel %vm3257, %v3211, 0
      %v3328 = vsel %vm3257, %v3212, 0
      %v3331 = vsel %vm3257, %v3213, 0
      %v3334 = vsel %vm3257, %v3214, 0
      %v3337 = vsel %vm3257, %v3215, 0
      %v3340 = vsel %vm3257, %v3216, 0
      %v3343 = vsel %vm3257, %v3217, 0
      %v3346 = vsel %vm3257, %v3218, 0
      %v3349 = vsel %vm3257, %v3219, 0
      %v3352 = vsel %vm3257, %v3220, 0
      %v3355 = vsel %vm3257, %v3221, 0
      %v3358 = vsel %vm3257, %v3222, 0
      %v3361 = vsel %vm3257, %v3223, 0
      %v3364 = vsel %vm3257, %v3224, 0
      %v3367 = vsel %vm3257, %v3225, 0
      %v3370 = vsel %vm3257, %v3226, 0
      %v3373 = vsel %vm3257, %v3227, 0
      %v3376 = vsel %vm3257, %v3228, 0
      %v3379 = vsel %vm3257, %v3229, 0
      %v3382 = vsel %vm3257, %v3230, 0
      %v3385 = vsel %vm3257, %v3231, 0
      %v3388 = vsel %vm3257, %v3232, 0
      %v3391 = vsel %vm3257, %v3233, 0
      %v3394 = vsel %vm3257, %v3234, 0
      %v3397 = vsel %vm3257, %v3235, 0
      %v3400 = vsel %vm3257, %v3236, 0
      %v3403 = vsel %vm3257, %v3237, 0
      %v3406 = vsel %vm3257, %v3238, 0
      %v3409 = vsel %vm3257, %v3239, 0
      %v3412 = vsel %vm3257, %v3240, 0
      %v3415 = vsel %vm3257, %v3241, 0
      %v3418 = vsel %vm3257, %v3242, 0
      %v3421 = vsel %vm3257, %v3243, 0
      %v3424 = vsel %vm3257, %v3244, 0
      %v3427 = vsel %vm3257, %v3245, 0
      %v3430 = vsel %vm3257, %v3246, 0
      %v3433 = vsel %vm3257, %v3247, 0
      %v3436 = vsel %vm3257, %v3248, 0
      %v3439 = vsel %vm3257, %v3249, 0
      %v3442 = vsel %vm3257, %v3250, 0
      %v3445 = vsel %vm3257, %v3251, 0
      %vm3447 = vcmask 1046528
      %v3449 = vsel %vm3447, %v3252, 0
      %3451 = vmatpush.msra.mxu0 0.0
      %3452 = vmatpush.msra.mxu0 0.0
      %3453 = vmatpush.msra.mxu0 0.0
      %3454 = vmatpush.msra.mxu0 0.0
      %3455 = vmatpush.msra.mxu0 0.0
      %3456 = vmatpush.msra.mxu0 0.0
      %3457 = vmatpush.msra.mxu0 0.0
      %3458 = vmatpush.msra.mxu0 0.0
      %3459 = vmatpush.msra.mxu0 0.0
      %3460 = vmatpush.msra.mxu0 0.0
      %3461 = vmatpush.msra.mxu0 0.0
      %3462 = vmatpush.msra.mxu0 0.0
      %3463 = vmatpush.msra.mxu0 0.0
      %3464 = vmatpush.msra.mxu0 0.0
      %3465 = vmatpush.msra.mxu0 0.0
      %3466 = vmatpush.msra.mxu0 %v3449
      %3467 = vmatmul.f32.gmra.mxu0 %v3259
      %v3468 = vpop.f32.mrf.mxu0
      %v3469 = vadd.f32 %v3255, %v3468
      %3470 = vmatmul.f32.gmra.mxu0 %v3262
      %v3471 = vpop.f32.mrf.mxu0
      %v3472 = vadd.f32 %v3255, %v3471
      %3473 = vmatmul.f32.gmra.mxu0 %v3265
      %v3474 = vpop.f32.mrf.mxu0
      %v3475 = vadd.f32 %v3255, %v3474
      %3476 = vmatmul.f32.gmra.mxu0 %v3268
      %v3477 = vpop.f32.mrf.mxu0
      %v3478 = vadd.f32 %v3255, %v3477
      %3479 = vmatmul.f32.gmra.mxu0 %v3271
      %v3480 = vpop.f32.mrf.mxu0
      %v3481 = vadd.f32 %v3255, %v3480
      %3482 = vmatmul.f32.gmra.mxu0 %v3274
      %v3483 = vpop.f32.mrf.mxu0
      %v3484 = vadd.f32 %v3255, %v3483
      %3485 = vmatmul.f32.gmra.mxu0 %v3277
      %v3486 = vpop.f32.mrf.mxu0
      %v3487 = vadd.f32 %v3255, %v3486
      %3488 = vmatmul.f32.gmra.mxu0 %v3280
      %v3489 = vpop.f32.mrf.mxu0
      %v3490 = vadd.f32 %v3255, %v3489
      %3491 = vmatmul.f32.gmra.mxu0 %v3283
      %v3492 = vpop.f32.mrf.mxu0
      %v3493 = vadd.f32 %v3255, %v3492
      %3494 = vmatmul.f32.gmra.mxu0 %v3286
      %v3495 = vpop.f32.mrf.mxu0
      %v3496 = vadd.f32 %v3255, %v3495
      %3497 = vmatmul.f32.gmra.mxu0 %v3289
      %v3498 = vpop.f32.mrf.mxu0
      %v3499 = vadd.f32 %v3255, %v3498
      %3500 = vmatmul.f32.gmra.mxu0 %v3292
      %v3501 = vpop.f32.mrf.mxu0
      %v3502 = vadd.f32 %v3255, %v3501
      %3503 = vmatmul.f32.gmra.mxu0 %v3295
      %v3504 = vpop.f32.mrf.mxu0
      %v3505 = vadd.f32 %v3255, %v3504
      %3506 = vmatmul.f32.gmra.mxu0 %v3298
      %v3507 = vpop.f32.mrf.mxu0
      %v3508 = vadd.f32 %v3255, %v3507
      %3509 = vmatmul.f32.gmra.mxu0 %v3301
      %v3510 = vpop.f32.mrf.mxu0
      %v3511 = vadd.f32 %v3255, %v3510
      %3512 = vmatmul.f32.gmra.mxu0 %v3304
      %v3513 = vpop.f32.mrf.mxu0
      %v3514 = vadd.f32 %v3255, %v3513
      %3515 = vmatmul.f32.gmra.mxu0 %v3307
      %v3516 = vpop.f32.mrf.mxu0
      %v3517 = vadd.f32 %v3255, %v3516
      %3518 = vmatmul.f32.gmra.mxu0 %v3310
      %v3519 = vpop.f32.mrf.mxu0
      %v3520 = vadd.f32 %v3255, %v3519
      %3521 = vmatmul.f32.gmra.mxu0 %v3313
      %v3522 = vpop.f32.mrf.mxu0
      %v3523 = vadd.f32 %v3255, %v3522
      %3524 = vmatmul.f32.gmra.mxu0 %v3316
      %v3525 = vpop.f32.mrf.mxu0
      %v3526 = vadd.f32 %v3255, %v3525
      %3527 = vmatmul.f32.gmra.mxu0 %v3319
      %v3528 = vpop.f32.mrf.mxu0
      %v3529 = vadd.f32 %v3255, %v3528
      %3530 = vmatmul.f32.gmra.mxu0 %v3322
      %v3531 = vpop.f32.mrf.mxu0
      %v3532 = vadd.f32 %v3255, %v3531
      %3533 = vmatmul.f32.gmra.mxu0 %v3325
      %v3534 = vpop.f32.mrf.mxu0
      %v3535 = vadd.f32 %v3255, %v3534
      %3536 = vmatmul.f32.gmra.mxu0 %v3328
      %v3537 = vpop.f32.mrf.mxu0
      %v3538 = vadd.f32 %v3255, %v3537
      %3539 = vmatmul.f32.gmra.mxu0 %v3331
      %v3540 = vpop.f32.mrf.mxu0
      %v3541 = vadd.f32 %v3255, %v3540
      %3542 = vmatmul.f32.gmra.mxu0 %v3334
      %v3543 = vpop.f32.mrf.mxu0
      %v3544 = vadd.f32 %v3255, %v3543
      %3545 = vmatmul.f32.gmra.mxu0 %v3337
      %v3546 = vpop.f32.mrf.mxu0
      %v3547 = vadd.f32 %v3255, %v3546
      %3548 = vmatmul.f32.gmra.mxu0 %v3340
      %v3549 = vpop.f32.mrf.mxu0
      %v3550 = vadd.f32 %v3255, %v3549
      %3551 = vmatmul.f32.gmra.mxu0 %v3343
      %v3552 = vpop.f32.mrf.mxu0
      %v3553 = vadd.f32 %v3255, %v3552
      %3554 = vmatmul.f32.gmra.mxu0 %v3346
      %v3555 = vpop.f32.mrf.mxu0
      %v3556 = vadd.f32 %v3255, %v3555
      %3557 = vmatmul.f32.gmra.mxu0 %v3349
      %v3558 = vpop.f32.mrf.mxu0
      %v3559 = vadd.f32 %v3255, %v3558
      %3560 = vmatmul.f32.gmra.mxu0 %v3352
      %v3561 = vpop.f32.mrf.mxu0
      %v3562 = vadd.f32 %v3255, %v3561
      %3563 = vmatmul.f32.gmra.mxu0 %v3355
      %v3564 = vpop.f32.mrf.mxu0
      %v3565 = vadd.f32 %v3255, %v3564
      %3566 = vmatmul.f32.gmra.mxu0 %v3358
      %v3567 = vpop.f32.mrf.mxu0
      %v3568 = vadd.f32 %v3255, %v3567
      %3569 = vmatmul.f32.gmra.mxu0 %v3361
      %v3570 = vpop.f32.mrf.mxu0
      %v3571 = vadd.f32 %v3255, %v3570
      %3572 = vmatmul.f32.gmra.mxu0 %v3364
      %v3573 = vpop.f32.mrf.mxu0
      %v3574 = vadd.f32 %v3255, %v3573
      %3575 = vmatmul.f32.gmra.mxu0 %v3367
      %v3576 = vpop.f32.mrf.mxu0
      %v3577 = vadd.f32 %v3255, %v3576
      %3578 = vmatmul.f32.gmra.mxu0 %v3370
      %v3579 = vpop.f32.mrf.mxu0
      %v3580 = vadd.f32 %v3255, %v3579
      %3581 = vmatmul.f32.gmra.mxu0 %v3373
      %v3582 = vpop.f32.mrf.mxu0
      %v3583 = vadd.f32 %v3255, %v3582
      %3584 = vmatmul.f32.gmra.mxu0 %v3376
      %v3585 = vpop.f32.mrf.mxu0
      %v3586 = vadd.f32 %v3255, %v3585
      %3587 = vmatmul.f32.gmra.mxu0 %v3379
      %v3588 = vpop.f32.mrf.mxu0
      %v3589 = vadd.f32 %v3255, %v3588
      %3590 = vmatmul.f32.gmra.mxu0 %v3382
      %v3591 = vpop.f32.mrf.mxu0
      %v3592 = vadd.f32 %v3255, %v3591
      %3593 = vmatmul.f32.gmra.mxu0 %v3385
      %v3594 = vpop.f32.mrf.mxu0
      %v3595 = vadd.f32 %v3255, %v3594
      %3596 = vmatmul.f32.gmra.mxu0 %v3388
      %v3597 = vpop.f32.mrf.mxu0
      %v3598 = vadd.f32 %v3255, %v3597
      %3599 = vmatmul.f32.gmra.mxu0 %v3391
      %v3600 = vpop.f32.mrf.mxu0
      %v3601 = vadd.f32 %v3255, %v3600
      %3602 = vmatmul.f32.gmra.mxu0 %v3394
      %v3603 = vpop.f32.mrf.mxu0
      %v3604 = vadd.f32 %v3255, %v3603
      %3605 = vmatmul.f32.gmra.mxu0 %v3397
      %v3606 = vpop.f32.mrf.mxu0
      %v3607 = vadd.f32 %v3255, %v3606
      %3608 = vmatmul.f32.gmra.mxu0 %v3400
      %v3609 = vpop.f32.mrf.mxu0
      %v3610 = vadd.f32 %v3255, %v3609
      %3611 = vmatmul.f32.gmra.mxu0 %v3403
      %v3612 = vpop.f32.mrf.mxu0
      %v3613 = vadd.f32 %v3255, %v3612
      %3614 = vmatmul.f32.gmra.mxu0 %v3406
      %v3615 = vpop.f32.mrf.mxu0
      %v3616 = vadd.f32 %v3255, %v3615
      %3617 = vmatmul.f32.gmra.mxu0 %v3409
      %v3618 = vpop.f32.mrf.mxu0
      %v3619 = vadd.f32 %v3255, %v3618
      %3620 = vmatmul.f32.gmra.mxu0 %v3412
      %v3621 = vpop.f32.mrf.mxu0
      %v3622 = vadd.f32 %v3255, %v3621
      %3623 = vmatmul.f32.gmra.mxu0 %v3415
      %v3624 = vpop.f32.mrf.mxu0
      %v3625 = vadd.f32 %v3255, %v3624
      %3626 = vmatmul.f32.gmra.mxu0 %v3418
      %v3627 = vpop.f32.mrf.mxu0
      %v3628 = vadd.f32 %v3255, %v3627
      %3629 = vmatmul.f32.gmra.mxu0 %v3421
      %v3630 = vpop.f32.mrf.mxu0
      %v3631 = vadd.f32 %v3255, %v3630
      %3632 = vmatmul.f32.gmra.mxu0 %v3424
      %v3633 = vpop.f32.mrf.mxu0
      %v3634 = vadd.f32 %v3255, %v3633
      %3635 = vmatmul.f32.gmra.mxu0 %v3427
      %v3636 = vpop.f32.mrf.mxu0
      %v3637 = vadd.f32 %v3255, %v3636
      %3638 = vmatmul.f32.gmra.mxu0 %v3430
      %v3639 = vpop.f32.mrf.mxu0
      %v3640 = vadd.f32 %v3255, %v3639
      %3641 = vmatmul.f32.gmra.mxu0 %v3433
      %v3642 = vpop.f32.mrf.mxu0
      %v3643 = vadd.f32 %v3255, %v3642
      %3644 = vmatmul.f32.gmra.mxu0 %v3436
      %v3645 = vpop.f32.mrf.mxu0
      %v3646 = vadd.f32 %v3255, %v3645
      %3647 = vmatmul.f32.gmra.mxu0 %v3439
      %v3648 = vpop.f32.mrf.mxu0
      %v3649 = vadd.f32 %v3255, %v3648
      %3650 = vmatmul.f32.gmra.mxu0 %v3442
      %v3651 = vpop.f32.mrf.mxu0
      %v3652 = vadd.f32 %v3255, %v3651
      %3653 = vmatmul.f32.gmra.mxu0 %v3445
      %v3654 = vpop.f32.mrf.mxu0
      %v3655 = vadd.f32 %v3255, %v3654
      %3656 = vdwg.mxu0
      %v3657 = vmax.f32 %v3469, 0.0
      %v3658 = vmax.f32 %v3472, 0.0
      %v3659 = vmax.f32 %v3475, 0.0
      %v3660 = vmax.f32 %v3478, 0.0
      %v3661 = vmax.f32 %v3481, 0.0
      %v3662 = vmax.f32 %v3484, 0.0
      %v3663 = vmax.f32 %v3487, 0.0
      %v3664 = vmax.f32 %v3490, 0.0
      %v3665 = vmax.f32 %v3493, 0.0
      %v3666 = vmax.f32 %v3496, 0.0
      %v3667 = vmax.f32 %v3499, 0.0
      %v3668 = vmax.f32 %v3502, 0.0
      %v3669 = vmax.f32 %v3505, 0.0
      %v3670 = vmax.f32 %v3508, 0.0
      %v3671 = vmax.f32 %v3511, 0.0
      %v3672 = vmax.f32 %v3514, 0.0
      %v3673 = vmax.f32 %v3517, 0.0
      %v3674 = vmax.f32 %v3520, 0.0
      %v3675 = vmax.f32 %v3523, 0.0
      %v3676 = vmax.f32 %v3526, 0.0
      %v3677 = vmax.f32 %v3529, 0.0
      %v3678 = vmax.f32 %v3532, 0.0
      %v3679 = vmax.f32 %v3535, 0.0
      %v3680 = vmax.f32 %v3538, 0.0
      %v3681 = vmax.f32 %v3541, 0.0
      %v3682 = vmax.f32 %v3544, 0.0
      %v3683 = vmax.f32 %v3547, 0.0
      %v3684 = vmax.f32 %v3550, 0.0
      %v3685 = vmax.f32 %v3553, 0.0
      %v3686 = vmax.f32 %v3556, 0.0
      %v3687 = vmax.f32 %v3559, 0.0
      %v3688 = vmax.f32 %v3562, 0.0
      %v3689 = vmax.f32 %v3565, 0.0
      %v3690 = vmax.f32 %v3568, 0.0
      %v3691 = vmax.f32 %v3571, 0.0
      %v3692 = vmax.f32 %v3574, 0.0
      %v3693 = vmax.f32 %v3577, 0.0
      %v3694 = vmax.f32 %v3580, 0.0
      %v3695 = vmax.f32 %v3583, 0.0
      %v3696 = vmax.f32 %v3586, 0.0
      %v3697 = vmax.f32 %v3589, 0.0
      %v3698 = vmax.f32 %v3592, 0.0
      %v3699 = vmax.f32 %v3595, 0.0
      %v3700 = vmax.f32 %v3598, 0.0
      %v3701 = vmax.f32 %v3601, 0.0
      %v3702 = vmax.f32 %v3604, 0.0
      %v3703 = vmax.f32 %v3607, 0.0
      %v3704 = vmax.f32 %v3610, 0.0
      %v3705 = vmax.f32 %v3613, 0.0
      %v3706 = vmax.f32 %v3616, 0.0
      %v3707 = vmax.f32 %v3619, 0.0
      %v3708 = vmax.f32 %v3622, 0.0
      %v3709 = vmax.f32 %v3625, 0.0
      %v3710 = vmax.f32 %v3628, 0.0
      %v3711 = vmax.f32 %v3631, 0.0
      %v3712 = vmax.f32 %v3634, 0.0
      %v3713 = vmax.f32 %v3637, 0.0
      %v3714 = vmax.f32 %v3640, 0.0
      %v3715 = vmax.f32 %v3643, 0.0
      %v3716 = vmax.f32 %v3646, 0.0
      %v3717 = vmax.f32 %v3649, 0.0
      %v3718 = vmax.f32 %v3652, 0.0
      %v3719 = vmax.f32 %v3655, 0.0
      %vm3720 = vcmask 130048
      %3721 = vst.msk [vmem:[#allocation3] sm:$0xff] %vm3720, %v3657
      %3722 = vst.msk [vmem:[#allocation3 + $0x8] sm:$0xff] %vm3720, %v3658
      %3723 = vst.msk [vmem:[#allocation3 + $0x10] sm:$0xff] %vm3720, %v3659
      %3724 = vst.msk [vmem:[#allocation3 + $0x18] sm:$0xff] %vm3720, %v3660
      %3725 = vst.msk [vmem:[#allocation3 + $0x20] sm:$0xff] %vm3720, %v3661
      %3726 = vst.msk [vmem:[#allocation3 + $0x28] sm:$0xff] %vm3720, %v3662
      %3727 = vst.msk [vmem:[#allocation3 + $0x30] sm:$0xff] %vm3720, %v3663
      %3728 = vst.msk [vmem:[#allocation3 + $0x38] sm:$0xff] %vm3720, %v3664
      %3729 = vst.msk [vmem:[#allocation3 + $0x40] sm:$0xff] %vm3720, %v3665
      %3730 = vst.msk [vmem:[#allocation3 + $0x48] sm:$0xff] %vm3720, %v3666
      %3731 = vst.msk [vmem:[#allocation3 + $0x50] sm:$0xff] %vm3720, %v3667
      %3732 = vst.msk [vmem:[#allocation3 + $0x58] sm:$0xff] %vm3720, %v3668
      %3733 = vst.msk [vmem:[#allocation3 + $0x60] sm:$0xff] %vm3720, %v3669
      %3734 = vst.msk [vmem:[#allocation3 + $0x68] sm:$0xff] %vm3720, %v3670
      %3735 = vst.msk [vmem:[#allocation3 + $0x70] sm:$0xff] %vm3720, %v3671
      %3736 = vst.msk [vmem:[#allocation3 + $0x78] sm:$0xff] %vm3720, %v3672
      %3737 = vst.msk [vmem:[#allocation3 + $0x80] sm:$0xff] %vm3720, %v3673
      %3738 = vst.msk [vmem:[#allocation3 + $0x88] sm:$0xff] %vm3720, %v3674
      %3739 = vst.msk [vmem:[#allocation3 + $0x90] sm:$0xff] %vm3720, %v3675
      %3740 = vst.msk [vmem:[#allocation3 + $0x98] sm:$0xff] %vm3720, %v3676
      %3741 = vst.msk [vmem:[#allocation3 + $0xa0] sm:$0xff] %vm3720, %v3677
      %3742 = vst.msk [vmem:[#allocation3 + $0xa8] sm:$0xff] %vm3720, %v3678
      %3743 = vst.msk [vmem:[#allocation3 + $0xb0] sm:$0xff] %vm3720, %v3679
      %3744 = vst.msk [vmem:[#allocation3 + $0xb8] sm:$0xff] %vm3720, %v3680
      %3745 = vst.msk [vmem:[#allocation3 + $0xc0] sm:$0xff] %vm3720, %v3681
      %3746 = vst.msk [vmem:[#allocation3 + $0xc8] sm:$0xff] %vm3720, %v3682
      %3747 = vst.msk [vmem:[#allocation3 + $0xd0] sm:$0xff] %vm3720, %v3683
      %3748 = vst.msk [vmem:[#allocation3 + $0xd8] sm:$0xff] %vm3720, %v3684
      %3749 = vst.msk [vmem:[#allocation3 + $0xe0] sm:$0xff] %vm3720, %v3685
      %3750 = vst.msk [vmem:[#allocation3 + $0xe8] sm:$0xff] %vm3720, %v3686
      %3751 = vst.msk [vmem:[#allocation3 + $0xf0] sm:$0xff] %vm3720, %v3687
      %3752 = vst.msk [vmem:[#allocation3 + $0xf8] sm:$0xff] %vm3720, %v3688
      %3753 = vst.msk [vmem:[#allocation3 + $0x100] sm:$0xff] %vm3720, %v3689
      %3754 = vst.msk [vmem:[#allocation3 + $0x108] sm:$0xff] %vm3720, %v3690
      %3755 = vst.msk [vmem:[#allocation3 + $0x110] sm:$0xff] %vm3720, %v3691
      %3756 = vst.msk [vmem:[#allocation3 + $0x118] sm:$0xff] %vm3720, %v3692
      %3757 = vst.msk [vmem:[#allocation3 + $0x120] sm:$0xff] %vm3720, %v3693
      %3758 = vst.msk [vmem:[#allocation3 + $0x128] sm:$0xff] %vm3720, %v3694
      %3759 = vst.msk [vmem:[#allocation3 + $0x130] sm:$0xff] %vm3720, %v3695
      %3760 = vst.msk [vmem:[#allocation3 + $0x138] sm:$0xff] %vm3720, %v3696
      %3761 = vst.msk [vmem:[#allocation3 + $0x140] sm:$0xff] %vm3720, %v3697
      %3762 = vst.msk [vmem:[#allocation3 + $0x148] sm:$0xff] %vm3720, %v3698
      %3763 = vst.msk [vmem:[#allocation3 + $0x150] sm:$0xff] %vm3720, %v3699
      %3764 = vst.msk [vmem:[#allocation3 + $0x158] sm:$0xff] %vm3720, %v3700
      %3765 = vst.msk [vmem:[#allocation3 + $0x160] sm:$0xff] %vm3720, %v3701
      %3766 = vst.msk [vmem:[#allocation3 + $0x168] sm:$0xff] %vm3720, %v3702
      %3767 = vst.msk [vmem:[#allocation3 + $0x170] sm:$0xff] %vm3720, %v3703
      %3768 = vst.msk [vmem:[#allocation3 + $0x178] sm:$0xff] %vm3720, %v3704
      %3769 = vst.msk [vmem:[#allocation3 + $0x180] sm:$0xff] %vm3720, %v3705
      %3770 = vst.msk [vmem:[#allocation3 + $0x188] sm:$0xff] %vm3720, %v3706
      %3771 = vst.msk [vmem:[#allocation3 + $0x190] sm:$0xff] %vm3720, %v3707
      %3772 = vst.msk [vmem:[#allocation3 + $0x198] sm:$0xff] %vm3720, %v3708
      %3773 = vst.msk [vmem:[#allocation3 + $0x1a0] sm:$0xff] %vm3720, %v3709
      %3774 = vst.msk [vmem:[#allocation3 + $0x1a8] sm:$0xff] %vm3720, %v3710
      %3775 = vst.msk [vmem:[#allocation3 + $0x1b0] sm:$0xff] %vm3720, %v3711
      %3776 = vst.msk [vmem:[#allocation3 + $0x1b8] sm:$0xff] %vm3720, %v3712
      %3777 = vst.msk [vmem:[#allocation3 + $0x1c0] sm:$0xff] %vm3720, %v3713
      %3778 = vst.msk [vmem:[#allocation3 + $0x1c8] sm:$0xff] %vm3720, %v3714
      %3779 = vst.msk [vmem:[#allocation3 + $0x1d0] sm:$0xff] %vm3720, %v3715
      %3780 = vst.msk [vmem:[#allocation3 + $0x1d8] sm:$0xff] %vm3720, %v3716
      %3781 = vst.msk [vmem:[#allocation3 + $0x1e0] sm:$0xff] %vm3720, %v3717
      %3782 = vst.msk [vmem:[#allocation3 + $0x1e8] sm:$0xff] %vm3720, %v3718
      %vm3783 = vcmask 125952
      %3784 = vst.msk [vmem:[#allocation3 + $0x1f0] sm:$0xf] %vm3783, %v3719
      %v3785 = vld [vmem:[#allocation3] ss:$2 sm:$0xff]
      %s3786 = scalar_lea.vmem [#allocation3], 16
      %v3787 = vld [vmem:[%s3786] ss:$2 sm:$0xff]
      %s3788 = scalar_lea.vmem [#allocation3], 32
      %v3789 = vld [vmem:[%s3788] ss:$2 sm:$0xff]
      %s3790 = scalar_lea.vmem [#allocation3], 48
      %v3791 = vld [vmem:[%s3790] ss:$2 sm:$0xff]
      %s3792 = scalar_lea.vmem [#allocation3], 64
      %v3793 = vld [vmem:[%s3792] ss:$2 sm:$0xff]
      %s3794 = scalar_lea.vmem [#allocation3], 80
      %v3795 = vld [vmem:[%s3794] ss:$2 sm:$0xff]
      %s3796 = scalar_lea.vmem [#allocation3], 96
      %v3797 = vld [vmem:[%s3796] ss:$2 sm:$0xff]
      %s3798 = scalar_lea.vmem [#allocation3], 112
      %v3799 = vld [vmem:[%s3798] ss:$2 sm:$0xff]
      %s3800 = scalar_lea.vmem [#allocation3], 128
      %v3801 = vld [vmem:[%s3800] ss:$2 sm:$0xff]
      %s3802 = scalar_lea.vmem [#allocation3], 144
      %v3803 = vld [vmem:[%s3802] ss:$2 sm:$0xff]
      %s3804 = scalar_lea.vmem [#allocation3], 160
      %v3805 = vld [vmem:[%s3804] ss:$2 sm:$0xff]
      %s3806 = scalar_lea.vmem [#allocation3], 176
      %v3807 = vld [vmem:[%s3806] ss:$2 sm:$0xff]
      %s3808 = scalar_lea.vmem [#allocation3], 192
      %v3809 = vld [vmem:[%s3808] ss:$2 sm:$0xff]
      %s3810 = scalar_lea.vmem [#allocation3], 208
      %v3811 = vld [vmem:[%s3810] ss:$2 sm:$0xff]
      %s3812 = scalar_lea.vmem [#allocation3], 224
      %v3813 = vld [vmem:[%s3812] ss:$2 sm:$0xff]
      %s3814 = scalar_lea.vmem [#allocation3], 240
      %v3815 = vld [vmem:[%s3814] ss:$2 sm:$0xff]
      %s3816 = scalar_lea.vmem [#allocation3], 256
      %v3817 = vld [vmem:[%s3816] ss:$2 sm:$0xff]
      %s3818 = scalar_lea.vmem [#allocation3], 272
      %v3819 = vld [vmem:[%s3818] ss:$2 sm:$0xff]
      %s3820 = scalar_lea.vmem [#allocation3], 288
      %v3821 = vld [vmem:[%s3820] ss:$2 sm:$0xff]
      %s3822 = scalar_lea.vmem [#allocation3], 304
      %v3823 = vld [vmem:[%s3822] ss:$2 sm:$0xff]
      %s3824 = scalar_lea.vmem [#allocation3], 320
      %v3825 = vld [vmem:[%s3824] ss:$2 sm:$0xff]
      %s3826 = scalar_lea.vmem [#allocation3], 336
      %v3827 = vld [vmem:[%s3826] ss:$2 sm:$0xff]
      %s3828 = scalar_lea.vmem [#allocation3], 352
      %v3829 = vld [vmem:[%s3828] ss:$2 sm:$0xff]
      %s3830 = scalar_lea.vmem [#allocation3], 368
      %v3831 = vld [vmem:[%s3830] ss:$2 sm:$0xff]
      %s3832 = scalar_lea.vmem [#allocation3], 384
      %v3833 = vld [vmem:[%s3832] ss:$2 sm:$0xff]
      %s3834 = scalar_lea.vmem [#allocation3], 400
      %v3835 = vld [vmem:[%s3834] ss:$2 sm:$0xff]
      %s3836 = scalar_lea.vmem [#allocation3], 416
      %v3837 = vld [vmem:[%s3836] ss:$2 sm:$0xff]
      %s3838 = scalar_lea.vmem [#allocation3], 432
      %v3839 = vld [vmem:[%s3838] ss:$2 sm:$0xff]
      %s3840 = scalar_lea.vmem [#allocation3], 448
      %v3841 = vld [vmem:[%s3840] ss:$2 sm:$0xff]
      %s3842 = scalar_lea.vmem [#allocation3], 464
      %v3843 = vld [vmem:[%s3842] ss:$2 sm:$0xff]
      %s3844 = scalar_lea.vmem [#allocation3], 480
      %v3845 = vld [vmem:[%s3844] ss:$2 sm:$0xff]
      %s3846 = scalar_lea.vmem [#allocation3], 496
      %v3847 = vld [vmem:[%s3846] ss:$2 sm:$0x3]
      %s3848 = scalar_lea.vmem [#allocation3], 1
      %v3849 = vld [vmem:[%s3848] ss:$2 sm:$0xff]
      %s3850 = scalar_lea.vmem [#allocation3], 17
      %v3851 = vld [vmem:[%s3850] ss:$2 sm:$0xff]
      %s3852 = scalar_lea.vmem [#allocation3], 33
      %v3853 = vld [vmem:[%s3852] ss:$2 sm:$0xff]
      %s3854 = scalar_lea.vmem [#allocation3], 49
      %v3855 = vld [vmem:[%s3854] ss:$2 sm:$0xff]
      %s3856 = scalar_lea.vmem [#allocation3], 65
      %v3857 = vld [vmem:[%s3856] ss:$2 sm:$0xff]
      %s3858 = scalar_lea.vmem [#allocation3], 81
      %v3859 = vld [vmem:[%s3858] ss:$2 sm:$0xff]
      %s3860 = scalar_lea.vmem [#allocation3], 97
      %v3861 = vld [vmem:[%s3860] ss:$2 sm:$0xff]
      %s3862 = scalar_lea.vmem [#allocation3], 113
      %v3863 = vld [vmem:[%s3862] ss:$2 sm:$0xff]
      %s3864 = scalar_lea.vmem [#allocation3], 129
      %v3865 = vld [vmem:[%s3864] ss:$2 sm:$0xff]
      %s3866 = scalar_lea.vmem [#allocation3], 145
      %v3867 = vld [vmem:[%s3866] ss:$2 sm:$0xff]
      %s3868 = scalar_lea.vmem [#allocation3], 161
      %v3869 = vld [vmem:[%s3868] ss:$2 sm:$0xff]
      %s3870 = scalar_lea.vmem [#allocation3], 177
      %v3871 = vld [vmem:[%s3870] ss:$2 sm:$0xff]
      %s3872 = scalar_lea.vmem [#allocation3], 193
      %v3873 = vld [vmem:[%s3872] ss:$2 sm:$0xff]
      %s3874 = scalar_lea.vmem [#allocation3], 209
      %v3875 = vld [vmem:[%s3874] ss:$2 sm:$0xff]
      %s3876 = scalar_lea.vmem [#allocation3], 225
      %v3877 = vld [vmem:[%s3876] ss:$2 sm:$0xff]
      %s3878 = scalar_lea.vmem [#allocation3], 241
      %v3879 = vld [vmem:[%s3878] ss:$2 sm:$0xff]
      %s3880 = scalar_lea.vmem [#allocation3], 257
      %v3881 = vld [vmem:[%s3880] ss:$2 sm:$0xff]
      %s3882 = scalar_lea.vmem [#allocation3], 273
      %v3883 = vld [vmem:[%s3882] ss:$2 sm:$0xff]
      %s3884 = scalar_lea.vmem [#allocation3], 289
      %v3885 = vld [vmem:[%s3884] ss:$2 sm:$0xff]
      %s3886 = scalar_lea.vmem [#allocation3], 305
      %v3887 = vld [vmem:[%s3886] ss:$2 sm:$0xff]
      %s3888 = scalar_lea.vmem [#allocation3], 321
      %v3889 = vld [vmem:[%s3888] ss:$2 sm:$0xff]
      %s3890 = scalar_lea.vmem [#allocation3], 337
      %v3891 = vld [vmem:[%s3890] ss:$2 sm:$0xff]
      %s3892 = scalar_lea.vmem [#allocation3], 353
      %v3893 = vld [vmem:[%s3892] ss:$2 sm:$0xff]
      %s3894 = scalar_lea.vmem [#allocation3], 369
      %v3895 = vld [vmem:[%s3894] ss:$2 sm:$0xff]
      %s3896 = scalar_lea.vmem [#allocation3], 385
      %v3897 = vld [vmem:[%s3896] ss:$2 sm:$0xff]
      %s3898 = scalar_lea.vmem [#allocation3], 401
      %v3899 = vld [vmem:[%s3898] ss:$2 sm:$0xff]
      %s3900 = scalar_lea.vmem [#allocation3], 417
      %v3901 = vld [vmem:[%s3900] ss:$2 sm:$0xff]
      %s3902 = scalar_lea.vmem [#allocation3], 433
      %v3903 = vld [vmem:[%s3902] ss:$2 sm:$0xff]
      %s3904 = scalar_lea.vmem [#allocation3], 449
      %v3905 = vld [vmem:[%s3904] ss:$2 sm:$0xff]
      %s3906 = scalar_lea.vmem [#allocation3], 465
      %v3907 = vld [vmem:[%s3906] ss:$2 sm:$0xff]
      %s3908 = scalar_lea.vmem [#allocation3], 481
      %v3909 = vld [vmem:[%s3908] ss:$2 sm:$0xff]
      %s3910 = scalar_lea.vmem [#allocation3], 497
      %v3911 = vld [vmem:[%s3910] ss:$2 sm:$0x3]
      %v3912 = vmax.f32 %v3785, %v3849
      %v3913 = vmax.f32 %v3787, %v3851
      %v3914 = vmax.f32 %v3789, %v3853
      %v3915 = vmax.f32 %v3791, %v3855
      %v3916 = vmax.f32 %v3793, %v3857
      %v3917 = vmax.f32 %v3795, %v3859
      %v3918 = vmax.f32 %v3797, %v3861
      %v3919 = vmax.f32 %v3799, %v3863
      %v3920 = vmax.f32 %v3801, %v3865
      %v3921 = vmax.f32 %v3803, %v3867
      %v3922 = vmax.f32 %v3805, %v3869
      %v3923 = vmax.f32 %v3807, %v3871
      %v3924 = vmax.f32 %v3809, %v3873
      %v3925 = vmax.f32 %v3811, %v3875
      %v3926 = vmax.f32 %v3813, %v3877
      %v3927 = vmax.f32 %v3815, %v3879
      %v3928 = vmax.f32 %v3817, %v3881
      %v3929 = vmax.f32 %v3819, %v3883
      %v3930 = vmax.f32 %v3821, %v3885
      %v3931 = vmax.f32 %v3823, %v3887
      %v3932 = vmax.f32 %v3825, %v3889
      %v3933 = vmax.f32 %v3827, %v3891
      %v3934 = vmax.f32 %v3829, %v3893
      %v3935 = vmax.f32 %v3831, %v3895
      %v3936 = vmax.f32 %v3833, %v3897
      %v3937 = vmax.f32 %v3835, %v3899
      %v3938 = vmax.f32 %v3837, %v3901
      %v3939 = vmax.f32 %v3839, %v3903
      %v3940 = vmax.f32 %v3841, %v3905
      %v3941 = vmax.f32 %v3843, %v3907
      %v3942 = vmax.f32 %v3845, %v3909
      %v3943 = vmax.f32 %v3847, %v3911
      %vm3944 = vcmask 123904
      %3945 = vst.msk [vmem:[#allocation4] sm:$0x3] %vm3944, 0.0
      %3946 = vst.msk [vmem:[#allocation4 + $0xfc] sm:$0x3] %vm3944, 0.0
      %3947 = vst.msk [vmem:[#allocation4 + $0x2] sm:$0xff] %vm3720, %v3912
      %3948 = vst.msk [vmem:[#allocation4 + $0xa] sm:$0xff] %vm3720, %v3913
      %3949 = vst.msk [vmem:[#allocation4 + $0x12] sm:$0xff] %vm3720, %v3914
      %3950 = vst.msk [vmem:[#allocation4 + $0x1a] sm:$0xff] %vm3720, %v3915
      %3951 = vst.msk [vmem:[#allocation4 + $0x22] sm:$0xff] %vm3720, %v3916
      %3952 = vst.msk [vmem:[#allocation4 + $0x2a] sm:$0xff] %vm3720, %v3917
      %3953 = vst.msk [vmem:[#allocation4 + $0x32] sm:$0xff] %vm3720, %v3918
      %3954 = vst.msk [vmem:[#allocation4 + $0x3a] sm:$0xff] %vm3720, %v3919
      %3955 = vst.msk [vmem:[#allocation4 + $0x42] sm:$0xff] %vm3720, %v3920
      %3956 = vst.msk [vmem:[#allocation4 + $0x4a] sm:$0xff] %vm3720, %v3921
      %3957 = vst.msk [vmem:[#allocation4 + $0x52] sm:$0xff] %vm3720, %v3922
      %3958 = vst.msk [vmem:[#allocation4 + $0x5a] sm:$0xff] %vm3720, %v3923
      %3959 = vst.msk [vmem:[#allocation4 + $0x62] sm:$0xff] %vm3720, %v3924
      %3960 = vst.msk [vmem:[#allocation4 + $0x6a] sm:$0xff] %vm3720, %v3925
      %3961 = vst.msk [vmem:[#allocation4 + $0x72] sm:$0xff] %vm3720, %v3926
      %3962 = vst.msk [vmem:[#allocation4 + $0x7a] sm:$0xff] %vm3720, %v3927
      %3963 = vst.msk [vmem:[#allocation4 + $0x82] sm:$0xff] %vm3720, %v3928
      %3964 = vst.msk [vmem:[#allocation4 + $0x8a] sm:$0xff] %vm3720, %v3929
      %3965 = vst.msk [vmem:[#allocation4 + $0x92] sm:$0xff] %vm3720, %v3930
      %3966 = vst.msk [vmem:[#allocation4 + $0x9a] sm:$0xff] %vm3720, %v3931
      %3967 = vst.msk [vmem:[#allocation4 + $0xa2] sm:$0xff] %vm3720, %v3932
      %3968 = vst.msk [vmem:[#allocation4 + $0xaa] sm:$0xff] %vm3720, %v3933
      %3969 = vst.msk [vmem:[#allocation4 + $0xb2] sm:$0xff] %vm3720, %v3934
      %3970 = vst.msk [vmem:[#allocation4 + $0xba] sm:$0xff] %vm3720, %v3935
      %3971 = vst.msk [vmem:[#allocation4 + $0xc2] sm:$0xff] %vm3720, %v3936
      %3972 = vst.msk [vmem:[#allocation4 + $0xca] sm:$0xff] %vm3720, %v3937
      %3973 = vst.msk [vmem:[#allocation4 + $0xd2] sm:$0xff] %vm3720, %v3938
      %3974 = vst.msk [vmem:[#allocation4 + $0xda] sm:$0xff] %vm3720, %v3939
      %3975 = vst.msk [vmem:[#allocation4 + $0xe2] sm:$0xff] %vm3720, %v3940
      %3976 = vst.msk [vmem:[#allocation4 + $0xea] sm:$0xff] %vm3720, %v3941
      %3977 = vst.msk [vmem:[#allocation4 + $0xf2] sm:$0xff] %vm3720, %v3942
      %3978 = vst.msk [vmem:[#allocation4 + $0xfa] sm:$0x3] %vm3944, %v3943
      %v3979 = vld [vmem:[#allocation4] sm:$0xff]
      %v3980 = vld [vmem:[#allocation4 + $0x8] sm:$0xff]
      %v3981 = vld [vmem:[#allocation4 + $0x10] sm:$0xff]
      %v3982 = vld [vmem:[#allocation4 + $0x18] sm:$0xff]
      %v3983 = vld [vmem:[#allocation4 + $0x20] sm:$0xff]
      %v3984 = vld [vmem:[#allocation4 + $0x28] sm:$0xff]
      %v3985 = vld [vmem:[#allocation4 + $0x30] sm:$0xff]
      %v3986 = vld [vmem:[#allocation4 + $0x38] sm:$0xff]
      %v3987 = vld [vmem:[#allocation4 + $0x40] sm:$0xff]
      %v3988 = vld [vmem:[#allocation4 + $0x48] sm:$0xff]
      %v3989 = vld [vmem:[#allocation4 + $0x50] sm:$0xff]
      %v3990 = vld [vmem:[#allocation4 + $0x58] sm:$0xff]
      %v3991 = vld [vmem:[#allocation4 + $0x60] sm:$0xff]
      %v3992 = vld [vmem:[#allocation4 + $0x68] sm:$0xff]
      %v3993 = vld [vmem:[#allocation4 + $0x70] sm:$0xff]
      %v3994 = vld [vmem:[#allocation4 + $0x78] sm:$0xff]
      %v3995 = vld [vmem:[#allocation4 + $0x80] sm:$0xff]
      %v3996 = vld [vmem:[#allocation4 + $0x88] sm:$0xff]
      %v3997 = vld [vmem:[#allocation4 + $0x90] sm:$0xff]
      %v3998 = vld [vmem:[#allocation4 + $0x98] sm:$0xff]
      %v3999 = vld [vmem:[#allocation4 + $0xa0] sm:$0xff]
      %v4000 = vld [vmem:[#allocation4 + $0xa8] sm:$0xff]
      %v4001 = vld [vmem:[#allocation4 + $0xb0] sm:$0xff]
      %v4002 = vld [vmem:[#allocation4 + $0xb8] sm:$0xff]
      %v4003 = vld [vmem:[#allocation4 + $0xc0] sm:$0xff]
      %v4004 = vld [vmem:[#allocation4 + $0xc8] sm:$0xff]
      %v4005 = vld [vmem:[#allocation4 + $0xd0] sm:$0xff]
      %v4006 = vld [vmem:[#allocation4 + $0xd8] sm:$0xff]
      %v4007 = vld [vmem:[#allocation4 + $0xe0] sm:$0xff]
      %v4008 = vld [vmem:[#allocation4 + $0xe8] sm:$0xff]
      %v4009 = vld [vmem:[#allocation4 + $0xf0] sm:$0xff]
      %v4010 = vld [vmem:[#allocation4 + $0xf8] sm:$0x3]
      %v4011 = vld [vmem:[#allocation4 + $0x1] sm:$0xff]
      %v4012 = vld [vmem:[#allocation4 + $0x9] sm:$0xff]
      %v4013 = vld [vmem:[#allocation4 + $0x11] sm:$0xff]
      %v4014 = vld [vmem:[#allocation4 + $0x19] sm:$0xff]
      %v4015 = vld [vmem:[#allocation4 + $0x21] sm:$0xff]
      %v4016 = vld [vmem:[#allocation4 + $0x29] sm:$0xff]
      %v4017 = vld [vmem:[#allocation4 + $0x31] sm:$0xff]
      %v4018 = vld [vmem:[#allocation4 + $0x39] sm:$0xff]
      %v4019 = vld [vmem:[#allocation4 + $0x41] sm:$0xff]
      %v4020 = vld [vmem:[#allocation4 + $0x49] sm:$0xff]
      %v4021 = vld [vmem:[#allocation4 + $0x51] sm:$0xff]
      %v4022 = vld [vmem:[#allocation4 + $0x59] sm:$0xff]
      %v4023 = vld [vmem:[#allocation4 + $0x61] sm:$0xff]
      %v4024 = vld [vmem:[#allocation4 + $0x69] sm:$0xff]
      %v4025 = vld [vmem:[#allocation4 + $0x71] sm:$0xff]
      %v4026 = vld [vmem:[#allocation4 + $0x79] sm:$0xff]
      %v4027 = vld [vmem:[#allocation4 + $0x81] sm:$0xff]
      %v4028 = vld [vmem:[#allocation4 + $0x89] sm:$0xff]
      %v4029 = vld [vmem:[#allocation4 + $0x91] sm:$0xff]
      %v4030 = vld [vmem:[#allocation4 + $0x99] sm:$0xff]
      %v4031 = vld [vmem:[#allocation4 + $0xa1] sm:$0xff]
      %v4032 = vld [vmem:[#allocation4 + $0xa9] sm:$0xff]
      %v4033 = vld [vmem:[#allocation4 + $0xb1] sm:$0xff]
      %v4034 = vld [vmem:[#allocation4 + $0xb9] sm:$0xff]
      %v4035 = vld [vmem:[#allocation4 + $0xc1] sm:$0xff]
      %v4036 = vld [vmem:[#allocation4 + $0xc9] sm:$0xff]
      %v4037 = vld [vmem:[#allocation4 + $0xd1] sm:$0xff]
      %v4038 = vld [vmem:[#allocation4 + $0xd9] sm:$0xff]
      %v4039 = vld [vmem:[#allocation4 + $0xe1] sm:$0xff]
      %v4040 = vld [vmem:[#allocation4 + $0xe9] sm:$0xff]
      %v4041 = vld [vmem:[#allocation4 + $0xf1] sm:$0xff]
      %v4042 = vld [vmem:[#allocation4 + $0xf9] sm:$0x3]
      %v4043 = vld [vmem:[#allocation4 + $0x2] sm:$0xff]
      %v4044 = vld [vmem:[#allocation4 + $0xa] sm:$0xff]
      %v4045 = vld [vmem:[#allocation4 + $0x12] sm:$0xff]
      %v4046 = vld [vmem:[#allocation4 + $0x1a] sm:$0xff]
      %v4047 = vld [vmem:[#allocation4 + $0x22] sm:$0xff]
      %v4048 = vld [vmem:[#allocation4 + $0x2a] sm:$0xff]
      %v4049 = vld [vmem:[#allocation4 + $0x32] sm:$0xff]
      %v4050 = vld [vmem:[#allocation4 + $0x3a] sm:$0xff]
      %v4051 = vld [vmem:[#allocation4 + $0x42] sm:$0xff]
      %v4052 = vld [vmem:[#allocation4 + $0x4a] sm:$0xff]
      %v4053 = vld [vmem:[#allocation4 + $0x52] sm:$0xff]
      %v4054 = vld [vmem:[#allocation4 + $0x5a] sm:$0xff]
      %v4055 = vld [vmem:[#allocation4 + $0x62] sm:$0xff]
      %v4056 = vld [vmem:[#allocation4 + $0x6a] sm:$0xff]
      %v4057 = vld [vmem:[#allocation4 + $0x72] sm:$0xff]
      %v4058 = vld [vmem:[#allocation4 + $0x7a] sm:$0xff]
      %v4059 = vld [vmem:[#allocation4 + $0x82] sm:$0xff]
      %v4060 = vld [vmem:[#allocation4 + $0x8a] sm:$0xff]
      %v4061 = vld [vmem:[#allocation4 + $0x92] sm:$0xff]
      %v4062 = vld [vmem:[#allocation4 + $0x9a] sm:$0xff]
      %v4063 = vld [vmem:[#allocation4 + $0xa2] sm:$0xff]
      %v4064 = vld [vmem:[#allocation4 + $0xaa] sm:$0xff]
      %v4065 = vld [vmem:[#allocation4 + $0xb2] sm:$0xff]
      %v4066 = vld [vmem:[#allocation4 + $0xba] sm:$0xff]
      %v4067 = vld [vmem:[#allocation4 + $0xc2] sm:$0xff]
      %v4068 = vld [vmem:[#allocation4 + $0xca] sm:$0xff]
      %v4069 = vld [vmem:[#allocation4 + $0xd2] sm:$0xff]
      %v4070 = vld [vmem:[#allocation4 + $0xda] sm:$0xff]
      %v4071 = vld [vmem:[#allocation4 + $0xe2] sm:$0xff]
      %v4072 = vld [vmem:[#allocation4 + $0xea] sm:$0xff]
      %v4073 = vld [vmem:[#allocation4 + $0xf2] sm:$0xff]
      %v4074 = vld [vmem:[#allocation4 + $0xfa] sm:$0x3]
      %v4075 = vld [vmem:[#allocation4 + $0x3] sm:$0xff]
      %v4076 = vld [vmem:[#allocation4 + $0xb] sm:$0xff]
      %v4077 = vld [vmem:[#allocation4 + $0x13] sm:$0xff]
      %v4078 = vld [vmem:[#allocation4 + $0x1b] sm:$0xff]
      %v4079 = vld [vmem:[#allocation4 + $0x23] sm:$0xff]
      %v4080 = vld [vmem:[#allocation4 + $0x2b] sm:$0xff]
      %v4081 = vld [vmem:[#allocation4 + $0x33] sm:$0xff]
      %v4082 = vld [vmem:[#allocation4 + $0x3b] sm:$0xff]
      %v4083 = vld [vmem:[#allocation4 + $0x43] sm:$0xff]
      %v4084 = vld [vmem:[#allocation4 + $0x4b] sm:$0xff]
      %v4085 = vld [vmem:[#allocation4 + $0x53] sm:$0xff]
      %v4086 = vld [vmem:[#allocation4 + $0x5b] sm:$0xff]
      %v4087 = vld [vmem:[#allocation4 + $0x63] sm:$0xff]
      %v4088 = vld [vmem:[#allocation4 + $0x6b] sm:$0xff]
      %v4089 = vld [vmem:[#allocation4 + $0x73] sm:$0xff]
      %v4090 = vld [vmem:[#allocation4 + $0x7b] sm:$0xff]
      %v4091 = vld [vmem:[#allocation4 + $0x83] sm:$0xff]
      %v4092 = vld [vmem:[#allocation4 + $0x8b] sm:$0xff]
      %v4093 = vld [vmem:[#allocation4 + $0x93] sm:$0xff]
      %v4094 = vld [vmem:[#allocation4 + $0x9b] sm:$0xff]
      %v4095 = vld [vmem:[#allocation4 + $0xa3] sm:$0xff]
      %v4096 = vld [vmem:[#allocation4 + $0xab] sm:$0xff]
      %v4097 = vld [vmem:[#allocation4 + $0xb3] sm:$0xff]
      %v4098 = vld [vmem:[#allocation4 + $0xbb] sm:$0xff]
      %v4099 = vld [vmem:[#allocation4 + $0xc3] sm:$0xff]
      %v4100 = vld [vmem:[#allocation4 + $0xcb] sm:$0xff]
      %v4101 = vld [vmem:[#allocation4 + $0xd3] sm:$0xff]
      %v4102 = vld [vmem:[#allocation4 + $0xdb] sm:$0xff]
      %v4103 = vld [vmem:[#allocation4 + $0xe3] sm:$0xff]
      %v4104 = vld [vmem:[#allocation4 + $0xeb] sm:$0xff]
      %v4105 = vld [vmem:[#allocation4 + $0xf3] sm:$0xff]
      %v4106 = vld [vmem:[#allocation4 + $0xfb] sm:$0x3]
      %v4107 = vld [vmem:[#allocation4 + $0x4] sm:$0xff]
      %v4108 = vld [vmem:[#allocation4 + $0xc] sm:$0xff]
      %v4109 = vld [vmem:[#allocation4 + $0x14] sm:$0xff]
      %v4110 = vld [vmem:[#allocation4 + $0x1c] sm:$0xff]
      %v4111 = vld [vmem:[#allocation4 + $0x24] sm:$0xff]
      %v4112 = vld [vmem:[#allocation4 + $0x2c] sm:$0xff]
      %v4113 = vld [vmem:[#allocation4 + $0x34] sm:$0xff]
      %v4114 = vld [vmem:[#allocation4 + $0x3c] sm:$0xff]
      %v4115 = vld [vmem:[#allocation4 + $0x44] sm:$0xff]
      %v4116 = vld [vmem:[#allocation4 + $0x4c] sm:$0xff]
      %v4117 = vld [vmem:[#allocation4 + $0x54] sm:$0xff]
      %v4118 = vld [vmem:[#allocation4 + $0x5c] sm:$0xff]
      %v4119 = vld [vmem:[#allocation4 + $0x64] sm:$0xff]
      %v4120 = vld [vmem:[#allocation4 + $0x6c] sm:$0xff]
      %v4121 = vld [vmem:[#allocation4 + $0x74] sm:$0xff]
      %v4122 = vld [vmem:[#allocation4 + $0x7c] sm:$0xff]
      %v4123 = vld [vmem:[#allocation4 + $0x84] sm:$0xff]
      %v4124 = vld [vmem:[#allocation4 + $0x8c] sm:$0xff]
      %v4125 = vld [vmem:[#allocation4 + $0x94] sm:$0xff]
      %v4126 = vld [vmem:[#allocation4 + $0x9c] sm:$0xff]
      %v4127 = vld [vmem:[#allocation4 + $0xa4] sm:$0xff]
      %v4128 = vld [vmem:[#allocation4 + $0xac] sm:$0xff]
      %v4129 = vld [vmem:[#allocation4 + $0xb4] sm:$0xff]
      %v4130 = vld [vmem:[#allocation4 + $0xbc] sm:$0xff]
      %v4131 = vld [vmem:[#allocation4 + $0xc4] sm:$0xff]
      %v4132 = vld [vmem:[#allocation4 + $0xcc] sm:$0xff]
      %v4133 = vld [vmem:[#allocation4 + $0xd4] sm:$0xff]
      %v4134 = vld [vmem:[#allocation4 + $0xdc] sm:$0xff]
      %v4135 = vld [vmem:[#allocation4 + $0xe4] sm:$0xff]
      %v4136 = vld [vmem:[#allocation4 + $0xec] sm:$0xff]
      %v4137 = vld [vmem:[#allocation4 + $0xf4] sm:$0xff]
      %v4138 = vld [vmem:[#allocation4 + $0xfc] sm:$0x3]
      %4171 = vrot.lane.b32.xlu0 %v4011, 16
      %v4172 = vpop.permute.xlu0 %4171
      %4173 = vrot.lane.b32.xlu0 %v4012, 16
      %v4174 = vpop.permute.xlu0 %4173
      %4175 = vrot.lane.b32.xlu0 %v4013, 16
      %v4176 = vpop.permute.xlu0 %4175
      %4177 = vrot.lane.b32.xlu0 %v4014, 16
      %v4178 = vpop.permute.xlu0 %4177
      %4179 = vrot.lane.b32.xlu0 %v4015, 16
      %v4180 = vpop.permute.xlu0 %4179
      %4181 = vrot.lane.b32.xlu0 %v4016, 16
      %v4182 = vpop.permute.xlu0 %4181
      %4183 = vrot.lane.b32.xlu0 %v4017, 16
      %v4184 = vpop.permute.xlu0 %4183
      %4185 = vrot.lane.b32.xlu0 %v4018, 16
      %v4186 = vpop.permute.xlu0 %4185
      %4187 = vrot.lane.b32.xlu0 %v4019, 16
      %v4188 = vpop.permute.xlu0 %4187
      %4189 = vrot.lane.b32.xlu0 %v4020, 16
      %v4190 = vpop.permute.xlu0 %4189
      %4191 = vrot.lane.b32.xlu0 %v4021, 16
      %v4192 = vpop.permute.xlu0 %4191
      %4193 = vrot.lane.b32.xlu0 %v4022, 16
      %v4194 = vpop.permute.xlu0 %4193
      %4195 = vrot.lane.b32.xlu0 %v4023, 16
      %v4196 = vpop.permute.xlu0 %4195
      %4197 = vrot.lane.b32.xlu0 %v4024, 16
      %v4198 = vpop.permute.xlu0 %4197
      %4199 = vrot.lane.b32.xlu0 %v4025, 16
      %v4200 = vpop.permute.xlu0 %4199
      %4201 = vrot.lane.b32.xlu0 %v4026, 16
      %v4202 = vpop.permute.xlu0 %4201
      %4203 = vrot.lane.b32.xlu0 %v4027, 16
      %v4204 = vpop.permute.xlu0 %4203
      %4205 = vrot.lane.b32.xlu0 %v4028, 16
      %v4206 = vpop.permute.xlu0 %4205
      %4207 = vrot.lane.b32.xlu0 %v4029, 16
      %v4208 = vpop.permute.xlu0 %4207
      %4209 = vrot.lane.b32.xlu0 %v4030, 16
      %v4210 = vpop.permute.xlu0 %4209
      %4211 = vrot.lane.b32.xlu0 %v4031, 16
      %v4212 = vpop.permute.xlu0 %4211
      %4213 = vrot.lane.b32.xlu0 %v4032, 16
      %v4214 = vpop.permute.xlu0 %4213
      %4215 = vrot.lane.b32.xlu0 %v4033, 16
      %v4216 = vpop.permute.xlu0 %4215
      %4217 = vrot.lane.b32.xlu0 %v4034, 16
      %v4218 = vpop.permute.xlu0 %4217
      %4219 = vrot.lane.b32.xlu0 %v4035, 16
      %v4220 = vpop.permute.xlu0 %4219
      %4221 = vrot.lane.b32.xlu0 %v4036, 16
      %v4222 = vpop.permute.xlu0 %4221
      %4223 = vrot.lane.b32.xlu0 %v4037, 16
      %v4224 = vpop.permute.xlu0 %4223
      %4225 = vrot.lane.b32.xlu0 %v4038, 16
      %v4226 = vpop.permute.xlu0 %4225
      %4227 = vrot.lane.b32.xlu0 %v4039, 16
      %v4228 = vpop.permute.xlu0 %4227
      %4229 = vrot.lane.b32.xlu0 %v4040, 16
      %v4230 = vpop.permute.xlu0 %4229
      %4231 = vrot.lane.b32.xlu0 %v4041, 16
      %v4232 = vpop.permute.xlu0 %4231
      %4233 = vrot.lane.b32.xlu0 %v4042, 16
      %v4234 = vpop.permute.xlu0 %4233
      %4299 = vrot.lane.b32.xlu0 %v4043, 32
      %v4300 = vpop.permute.xlu0 %4299
      %4301 = vrot.lane.b32.xlu0 %v4044, 32
      %v4302 = vpop.permute.xlu0 %4301
      %4303 = vrot.lane.b32.xlu0 %v4045, 32
      %v4304 = vpop.permute.xlu0 %4303
      %4305 = vrot.lane.b32.xlu0 %v4046, 32
      %v4306 = vpop.permute.xlu0 %4305
      %4307 = vrot.lane.b32.xlu0 %v4047, 32
      %v4308 = vpop.permute.xlu0 %4307
      %4309 = vrot.lane.b32.xlu0 %v4048, 32
      %v4310 = vpop.permute.xlu0 %4309
      %4311 = vrot.lane.b32.xlu0 %v4049, 32
      %v4312 = vpop.permute.xlu0 %4311
      %4313 = vrot.lane.b32.xlu0 %v4050, 32
      %v4314 = vpop.permute.xlu0 %4313
      %4315 = vrot.lane.b32.xlu0 %v4051, 32
      %v4316 = vpop.permute.xlu0 %4315
      %4317 = vrot.lane.b32.xlu0 %v4052, 32
      %v4318 = vpop.permute.xlu0 %4317
      %4319 = vrot.lane.b32.xlu0 %v4053, 32
      %v4320 = vpop.permute.xlu0 %4319
      %4321 = vrot.lane.b32.xlu0 %v4054, 32
      %v4322 = vpop.permute.xlu0 %4321
      %4323 = vrot.lane.b32.xlu0 %v4055, 32
      %v4324 = vpop.permute.xlu0 %4323
      %4325 = vrot.lane.b32.xlu0 %v4056, 32
      %v4326 = vpop.permute.xlu0 %4325
      %4327 = vrot.lane.b32.xlu0 %v4057, 32
      %v4328 = vpop.permute.xlu0 %4327
      %4329 = vrot.lane.b32.xlu0 %v4058, 32
      %v4330 = vpop.permute.xlu0 %4329
      %4331 = vrot.lane.b32.xlu0 %v4059, 32
      %v4332 = vpop.permute.xlu0 %4331
      %4333 = vrot.lane.b32.xlu0 %v4060, 32
      %v4334 = vpop.permute.xlu0 %4333
      %4335 = vrot.lane.b32.xlu0 %v4061, 32
      %v4336 = vpop.permute.xlu0 %4335
      %4337 = vrot.lane.b32.xlu0 %v4062, 32
      %v4338 = vpop.permute.xlu0 %4337
      %4339 = vrot.lane.b32.xlu0 %v4063, 32
      %v4340 = vpop.permute.xlu0 %4339
      %4341 = vrot.lane.b32.xlu0 %v4064, 32
      %v4342 = vpop.permute.xlu0 %4341
      %4343 = vrot.lane.b32.xlu0 %v4065, 32
      %v4344 = vpop.permute.xlu0 %4343
      %4345 = vrot.lane.b32.xlu0 %v4066, 32
      %v4346 = vpop.permute.xlu0 %4345
      %4347 = vrot.lane.b32.xlu0 %v4067, 32
      %v4348 = vpop.permute.xlu0 %4347
      %4349 = vrot.lane.b32.xlu0 %v4068, 32
      %v4350 = vpop.permute.xlu0 %4349
      %4351 = vrot.lane.b32.xlu0 %v4069, 32
      %v4352 = vpop.permute.xlu0 %4351
      %4353 = vrot.lane.b32.xlu0 %v4070, 32
      %v4354 = vpop.permute.xlu0 %4353
      %4355 = vrot.lane.b32.xlu0 %v4071, 32
      %v4356 = vpop.permute.xlu0 %4355
      %4357 = vrot.lane.b32.xlu0 %v4072, 32
      %v4358 = vpop.permute.xlu0 %4357
      %4359 = vrot.lane.b32.xlu0 %v4073, 32
      %v4360 = vpop.permute.xlu0 %4359
      %4361 = vrot.lane.b32.xlu0 %v4074, 32
      %v4362 = vpop.permute.xlu0 %4361
      %4427 = vrot.lane.b32.xlu0 %v4075, 48
      %v4428 = vpop.permute.xlu0 %4427
      %4429 = vrot.lane.b32.xlu0 %v4076, 48
      %v4430 = vpop.permute.xlu0 %4429
      %4431 = vrot.lane.b32.xlu0 %v4077, 48
      %v4432 = vpop.permute.xlu0 %4431
      %4433 = vrot.lane.b32.xlu0 %v4078, 48
      %v4434 = vpop.permute.xlu0 %4433
      %4435 = vrot.lane.b32.xlu0 %v4079, 48
      %v4436 = vpop.permute.xlu0 %4435
      %4437 = vrot.lane.b32.xlu0 %v4080, 48
      %v4438 = vpop.permute.xlu0 %4437
      %4439 = vrot.lane.b32.xlu0 %v4081, 48
      %v4440 = vpop.permute.xlu0 %4439
      %4441 = vrot.lane.b32.xlu0 %v4082, 48
      %v4442 = vpop.permute.xlu0 %4441
      %4443 = vrot.lane.b32.xlu0 %v4083, 48
      %v4444 = vpop.permute.xlu0 %4443
      %4445 = vrot.lane.b32.xlu0 %v4084, 48
      %v4446 = vpop.permute.xlu0 %4445
      %4447 = vrot.lane.b32.xlu0 %v4085, 48
      %v4448 = vpop.permute.xlu0 %4447
      %4449 = vrot.lane.b32.xlu0 %v4086, 48
      %v4450 = vpop.permute.xlu0 %4449
      %4451 = vrot.lane.b32.xlu0 %v4087, 48
      %v4452 = vpop.permute.xlu0 %4451
      %4453 = vrot.lane.b32.xlu0 %v4088, 48
      %v4454 = vpop.permute.xlu0 %4453
      %4455 = vrot.lane.b32.xlu0 %v4089, 48
      %v4456 = vpop.permute.xlu0 %4455
      %4457 = vrot.lane.b32.xlu0 %v4090, 48
      %v4458 = vpop.permute.xlu0 %4457
      %4459 = vrot.lane.b32.xlu0 %v4091, 48
      %v4460 = vpop.permute.xlu0 %4459
      %4461 = vrot.lane.b32.xlu0 %v4092, 48
      %v4462 = vpop.permute.xlu0 %4461
      %4463 = vrot.lane.b32.xlu0 %v4093, 48
      %v4464 = vpop.permute.xlu0 %4463
      %4465 = vrot.lane.b32.xlu0 %v4094, 48
      %v4466 = vpop.permute.xlu0 %4465
      %4467 = vrot.lane.b32.xlu0 %v4095, 48
      %v4468 = vpop.permute.xlu0 %4467
      %4469 = vrot.lane.b32.xlu0 %v4096, 48
      %v4470 = vpop.permute.xlu0 %4469
      %4471 = vrot.lane.b32.xlu0 %v4097, 48
      %v4472 = vpop.permute.xlu0 %4471
      %4473 = vrot.lane.b32.xlu0 %v4098, 48
      %v4474 = vpop.permute.xlu0 %4473
      %4475 = vrot.lane.b32.xlu0 %v4099, 48
      %v4476 = vpop.permute.xlu0 %4475
      %4477 = vrot.lane.b32.xlu0 %v4100, 48
      %v4478 = vpop.permute.xlu0 %4477
      %4479 = vrot.lane.b32.xlu0 %v4101, 48
      %v4480 = vpop.permute.xlu0 %4479
      %4481 = vrot.lane.b32.xlu0 %v4102, 48
      %v4482 = vpop.permute.xlu0 %4481
      %4483 = vrot.lane.b32.xlu0 %v4103, 48
      %v4484 = vpop.permute.xlu0 %4483
      %4485 = vrot.lane.b32.xlu0 %v4104, 48
      %v4486 = vpop.permute.xlu0 %4485
      %4487 = vrot.lane.b32.xlu0 %v4105, 48
      %v4488 = vpop.permute.xlu0 %4487
      %4489 = vrot.lane.b32.xlu0 %v4106, 48
      %v4490 = vpop.permute.xlu0 %4489
      %4555 = vrot.lane.b32.xlu0 %v4107, 64
      %v4556 = vpop.permute.xlu0 %4555
      %4557 = vrot.lane.b32.xlu0 %v4108, 64
      %v4558 = vpop.permute.xlu0 %4557
      %4559 = vrot.lane.b32.xlu0 %v4109, 64
      %v4560 = vpop.permute.xlu0 %4559
      %4561 = vrot.lane.b32.xlu0 %v4110, 64
      %v4562 = vpop.permute.xlu0 %4561
      %4563 = vrot.lane.b32.xlu0 %v4111, 64
      %v4564 = vpop.permute.xlu0 %4563
      %4565 = vrot.lane.b32.xlu0 %v4112, 64
      %v4566 = vpop.permute.xlu0 %4565
      %4567 = vrot.lane.b32.xlu0 %v4113, 64
      %v4568 = vpop.permute.xlu0 %4567
      %4569 = vrot.lane.b32.xlu0 %v4114, 64
      %v4570 = vpop.permute.xlu0 %4569
      %4571 = vrot.lane.b32.xlu0 %v4115, 64
      %v4572 = vpop.permute.xlu0 %4571
      %4573 = vrot.lane.b32.xlu0 %v4116, 64
      %v4574 = vpop.permute.xlu0 %4573
      %4575 = vrot.lane.b32.xlu0 %v4117, 64
      %v4576 = vpop.permute.xlu0 %4575
      %4577 = vrot.lane.b32.xlu0 %v4118, 64
      %v4578 = vpop.permute.xlu0 %4577
      %4579 = vrot.lane.b32.xlu0 %v4119, 64
      %v4580 = vpop.permute.xlu0 %4579
      %4581 = vrot.lane.b32.xlu0 %v4120, 64
      %v4582 = vpop.permute.xlu0 %4581
      %4583 = vrot.lane.b32.xlu0 %v4121, 64
      %v4584 = vpop.permute.xlu0 %4583
      %4585 = vrot.lane.b32.xlu0 %v4122, 64
      %v4586 = vpop.permute.xlu0 %4585
      %4587 = vrot.lane.b32.xlu0 %v4123, 64
      %v4588 = vpop.permute.xlu0 %4587
      %4589 = vrot.lane.b32.xlu0 %v4124, 64
      %v4590 = vpop.permute.xlu0 %4589
      %4591 = vrot.lane.b32.xlu0 %v4125, 64
      %v4592 = vpop.permute.xlu0 %4591
      %4593 = vrot.lane.b32.xlu0 %v4126, 64
      %v4594 = vpop.permute.xlu0 %4593
      %4595 = vrot.lane.b32.xlu0 %v4127, 64
      %v4596 = vpop.permute.xlu0 %4595
      %4597 = vrot.lane.b32.xlu0 %v4128, 64
      %v4598 = vpop.permute.xlu0 %4597
      %4599 = vrot.lane.b32.xlu0 %v4129, 64
      %v4600 = vpop.permute.xlu0 %4599
      %4601 = vrot.lane.b32.xlu0 %v4130, 64
      %v4602 = vpop.permute.xlu0 %4601
      %4603 = vrot.lane.b32.xlu0 %v4131, 64
      %v4604 = vpop.permute.xlu0 %4603
      %4605 = vrot.lane.b32.xlu0 %v4132, 64
      %v4606 = vpop.permute.xlu0 %4605
      %4607 = vrot.lane.b32.xlu0 %v4133, 64
      %v4608 = vpop.permute.xlu0 %4607
      %4609 = vrot.lane.b32.xlu0 %v4134, 64
      %v4610 = vpop.permute.xlu0 %4609
      %4611 = vrot.lane.b32.xlu0 %v4135, 64
      %v4612 = vpop.permute.xlu0 %4611
      %4613 = vrot.lane.b32.xlu0 %v4136, 64
      %v4614 = vpop.permute.xlu0 %4613
      %4615 = vrot.lane.b32.xlu0 %v4137, 64
      %v4616 = vpop.permute.xlu0 %4615
      %4617 = vrot.lane.b32.xlu0 %v4138, 64
      %v4618 = vpop.permute.xlu0 %4617
      %v4651 = vsel %vm3720, %v3979, %v4172
      %v4652 = vsel %vm3720, %v3980, %v4174
      %v4653 = vsel %vm3720, %v3981, %v4176
      %v4654 = vsel %vm3720, %v3982, %v4178
      %v4655 = vsel %vm3720, %v3983, %v4180
      %v4656 = vsel %vm3720, %v3984, %v4182
      %v4657 = vsel %vm3720, %v3985, %v4184
      %v4658 = vsel %vm3720, %v3986, %v4186
      %v4659 = vsel %vm3720, %v3987, %v4188
      %v4660 = vsel %vm3720, %v3988, %v4190
      %v4661 = vsel %vm3720, %v3989, %v4192
      %v4662 = vsel %vm3720, %v3990, %v4194
      %v4663 = vsel %vm3720, %v3991, %v4196
      %v4664 = vsel %vm3720, %v3992, %v4198
      %v4665 = vsel %vm3720, %v3993, %v4200
      %v4666 = vsel %vm3720, %v3994, %v4202
      %v4667 = vsel %vm3720, %v3995, %v4204
      %v4668 = vsel %vm3720, %v3996, %v4206
      %v4669 = vsel %vm3720, %v3997, %v4208
      %v4670 = vsel %vm3720, %v3998, %v4210
      %v4671 = vsel %vm3720, %v3999, %v4212
      %v4672 = vsel %vm3720, %v4000, %v4214
      %v4673 = vsel %vm3720, %v4001, %v4216
      %v4674 = vsel %vm3720, %v4002, %v4218
      %v4675 = vsel %vm3720, %v4003, %v4220
      %v4676 = vsel %vm3720, %v4004, %v4222
      %v4677 = vsel %vm3720, %v4005, %v4224
      %v4678 = vsel %vm3720, %v4006, %v4226
      %v4679 = vsel %vm3720, %v4007, %v4228
      %v4680 = vsel %vm3720, %v4008, %v4230
      %v4681 = vsel %vm3720, %v4009, %v4232
      %v4682 = vsel %vm3720, %v4010, %v4234
      %vm4683 = vcmask 261120
      %v4684 = vsel %vm4683, %v4651, %v4300
      %v4685 = vsel %vm4683, %v4652, %v4302
      %v4686 = vsel %vm4683, %v4653, %v4304
      %v4687 = vsel %vm4683, %v4654, %v4306
      %v4688 = vsel %vm4683, %v4655, %v4308
      %v4689 = vsel %vm4683, %v4656, %v4310
      %v4690 = vsel %vm4683, %v4657, %v4312
      %v4691 = vsel %vm4683, %v4658, %v4314
      %v4692 = vsel %vm4683, %v4659, %v4316
      %v4693 = vsel %vm4683, %v4660, %v4318
      %v4694 = vsel %vm4683, %v4661, %v4320
      %v4695 = vsel %vm4683, %v4662, %v4322
      %v4696 = vsel %vm4683, %v4663, %v4324
      %v4697 = vsel %vm4683, %v4664, %v4326
      %v4698 = vsel %vm4683, %v4665, %v4328
      %v4699 = vsel %vm4683, %v4666, %v4330
      %v4700 = vsel %vm4683, %v4667, %v4332
      %v4701 = vsel %vm4683, %v4668, %v4334
      %v4702 = vsel %vm4683, %v4669, %v4336
      %v4703 = vsel %vm4683, %v4670, %v4338
      %v4704 = vsel %vm4683, %v4671, %v4340
      %v4705 = vsel %vm4683, %v4672, %v4342
      %v4706 = vsel %vm4683, %v4673, %v4344
      %v4707 = vsel %vm4683, %v4674, %v4346
      %v4708 = vsel %vm4683, %v4675, %v4348
      %v4709 = vsel %vm4683, %v4676, %v4350
      %v4710 = vsel %vm4683, %v4677, %v4352
      %v4711 = vsel %vm4683, %v4678, %v4354
      %v4712 = vsel %vm4683, %v4679, %v4356
      %v4713 = vsel %vm4683, %v4680, %v4358
      %v4714 = vsel %vm4683, %v4681, %v4360
      %v4715 = vsel %vm4683, %v4682, %v4362
      %vm4716 = vcmask 392192
      %v4717 = vsel %vm4716, %v4684, %v4428
      %v4718 = vsel %vm4716, %v4685, %v4430
      %v4719 = vsel %vm4716, %v4686, %v4432
      %v4720 = vsel %vm4716, %v4687, %v4434
      %v4721 = vsel %vm4716, %v4688, %v4436
      %v4722 = vsel %vm4716, %v4689, %v4438
      %v4723 = vsel %vm4716, %v4690, %v4440
      %v4724 = vsel %vm4716, %v4691, %v4442
      %v4725 = vsel %vm4716, %v4692, %v4444
      %v4726 = vsel %vm4716, %v4693, %v4446
      %v4727 = vsel %vm4716, %v4694, %v4448
      %v4728 = vsel %vm4716, %v4695, %v4450
      %v4729 = vsel %vm4716, %v4696, %v4452
      %v4730 = vsel %vm4716, %v4697, %v4454
      %v4731 = vsel %vm4716, %v4698, %v4456
      %v4732 = vsel %vm4716, %v4699, %v4458
      %v4733 = vsel %vm4716, %v4700, %v4460
      %v4734 = vsel %vm4716, %v4701, %v4462
      %v4735 = vsel %vm4716, %v4702, %v4464
      %v4736 = vsel %vm4716, %v4703, %v4466
      %v4737 = vsel %vm4716, %v4704, %v4468
      %v4738 = vsel %vm4716, %v4705, %v4470
      %v4739 = vsel %vm4716, %v4706, %v4472
      %v4740 = vsel %vm4716, %v4707, %v4474
      %v4741 = vsel %vm4716, %v4708, %v4476
      %v4742 = vsel %vm4716, %v4709, %v4478
      %v4743 = vsel %vm4716, %v4710, %v4480
      %v4744 = vsel %vm4716, %v4711, %v4482
      %v4745 = vsel %vm4716, %v4712, %v4484
      %v4746 = vsel %vm4716, %v4713, %v4486
      %v4747 = vsel %vm4716, %v4714, %v4488
      %v4748 = vsel %vm4716, %v4715, %v4490
      %vm4749 = vcmask 523264
      %v4750 = vsel %vm4749, %v4717, %v4556
      %v4751 = vsel %vm4749, %v4718, %v4558
      %v4752 = vsel %vm4749, %v4719, %v4560
      %v4753 = vsel %vm4749, %v4720, %v4562
      %v4754 = vsel %vm4749, %v4721, %v4564
      %v4755 = vsel %vm4749, %v4722, %v4566
      %v4756 = vsel %vm4749, %v4723, %v4568
      %v4757 = vsel %vm4749, %v4724, %v4570
      %v4758 = vsel %vm4749, %v4725, %v4572
      %v4759 = vsel %vm4749, %v4726, %v4574
      %v4760 = vsel %vm4749, %v4727, %v4576
      %v4761 = vsel %vm4749, %v4728, %v4578
      %v4762 = vsel %vm4749, %v4729, %v4580
      %v4763 = vsel %vm4749, %v4730, %v4582
      %v4764 = vsel %vm4749, %v4731, %v4584
      %v4765 = vsel %vm4749, %v4732, %v4586
      %v4766 = vsel %vm4749, %v4733, %v4588
      %v4767 = vsel %vm4749, %v4734, %v4590
      %v4768 = vsel %vm4749, %v4735, %v4592
      %v4769 = vsel %vm4749, %v4736, %v4594
      %v4770 = vsel %vm4749, %v4737, %v4596
      %v4771 = vsel %vm4749, %v4738, %v4598
      %v4772 = vsel %vm4749, %v4739, %v4600
      %v4773 = vsel %vm4749, %v4740, %v4602
      %v4774 = vsel %vm4749, %v4741, %v4604
      %v4775 = vsel %vm4749, %v4742, %v4606
      %v4776 = vsel %vm4749, %v4743, %v4608
      %v4777 = vsel %vm4749, %v4744, %v4610
      %v4778 = vsel %vm4749, %v4745, %v4612
      %v4779 = vsel %vm4749, %v4746, %v4614
      %v4780 = vsel %vm4749, %v4747, %v4616
      %v4781 = vsel %vm4749, %v4748, %v4618
      %v4782 = vld [vmem:[%s3] sm:$0xff]
      %v4783 = vld [vmem:[%s3 + $0x8] sm:$0xff]
      %v4784 = vld [vmem:[%s3 + $0x10] sm:$0xff]
      %v4785 = vld [vmem:[%s3 + $0x18] sm:$0xff]
      %v4786 = vld [vmem:[%s3 + $0x20] sm:$0xff]
      %v4787 = vld [vmem:[%s3 + $0x28] sm:$0xff]
      %v4788 = vld [vmem:[%s3 + $0x30] sm:$0xff]
      %v4789 = vld [vmem:[%s3 + $0x38] sm:$0xff]
      %v4790 = vld [vmem:[%s3 + $0x40] sm:$0xff]
      %v4791 = vld [vmem:[%s3 + $0x48] sm:$0xff]
      %v4792 = vld [vmem:[%s4] sm:$0x1]
      %v4794 = vperm.slane %v4792, 0
      %vm4796 = vcmask 654336
      %v4798 = vsel %vm4796, %v4750, 0
      %v4801 = vsel %vm4796, %v4751, 0
      %v4804 = vsel %vm4796, %v4752, 0
      %v4807 = vsel %vm4796, %v4753, 0
      %v4810 = vsel %vm4796, %v4754, 0
      %v4813 = vsel %vm4796, %v4755, 0
      %v4816 = vsel %vm4796, %v4756, 0
      %v4819 = vsel %vm4796, %v4757, 0
      %v4822 = vsel %vm4796, %v4758, 0
      %v4825 = vsel %vm4796, %v4759, 0
      %v4828 = vsel %vm4796, %v4760, 0
      %v4831 = vsel %vm4796, %v4761, 0
      %v4834 = vsel %vm4796, %v4762, 0
      %v4837 = vsel %vm4796, %v4763, 0
      %v4840 = vsel %vm4796, %v4764, 0
      %v4843 = vsel %vm4796, %v4765, 0
      %v4846 = vsel %vm4796, %v4766, 0
      %v4849 = vsel %vm4796, %v4767, 0
      %v4852 = vsel %vm4796, %v4768, 0
      %v4855 = vsel %vm4796, %v4769, 0
      %v4858 = vsel %vm4796, %v4770, 0
      %v4861 = vsel %vm4796, %v4771, 0
      %v4864 = vsel %vm4796, %v4772, 0
      %v4867 = vsel %vm4796, %v4773, 0
      %v4870 = vsel %vm4796, %v4774, 0
      %v4873 = vsel %vm4796, %v4775, 0
      %v4876 = vsel %vm4796, %v4776, 0
      %v4879 = vsel %vm4796, %v4777, 0
      %v4882 = vsel %vm4796, %v4778, 0
      %v4885 = vsel %vm4796, %v4779, 0
      %v4888 = vsel %vm4796, %v4780, 0
      %v4891 = vsel %vm4796, %v4781, 0
      %4893 = vmatpush.msra.mxu0 0.0
      %4894 = vmatpush.msra.mxu0 0.0
      %4895 = vmatpush.msra.mxu0 0.0
      %4896 = vmatpush.msra.mxu0 0.0
      %4897 = vmatpush.msra.mxu0 0.0
      %4898 = vmatpush.msra.mxu0 0.0
      %4899 = vmatpush.msra.mxu0 %v4791
      %4900 = vmatpush.msra.mxu0 %v4790
      %4901 = vmatpush.msra.mxu0 %v4789
      %4902 = vmatpush.msra.mxu0 %v4788
      %4903 = vmatpush.msra.mxu0 %v4787
      %4904 = vmatpush.msra.mxu0 %v4786
      %4905 = vmatpush.msra.mxu0 %v4785
      %4906 = vmatpush.msra.mxu0 %v4784
      %4907 = vmatpush.msra.mxu0 %v4783
      %4908 = vmatpush.msra.mxu0 %v4782
      %4909 = vmatmul.f32.gmra.mxu0 %v4798
      %v4910 = vpop.f32.mrf.mxu0
      %v4911 = vadd.f32 %v4794, %v4910
      %4912 = vmatmul.f32.gmra.mxu0 %v4801
      %v4913 = vpop.f32.mrf.mxu0
      %v4914 = vadd.f32 %v4794, %v4913
      %4915 = vmatmul.f32.gmra.mxu0 %v4804
      %v4916 = vpop.f32.mrf.mxu0
      %v4917 = vadd.f32 %v4794, %v4916
      %4918 = vmatmul.f32.gmra.mxu0 %v4807
      %v4919 = vpop.f32.mrf.mxu0
      %v4920 = vadd.f32 %v4794, %v4919
      %4921 = vmatmul.f32.gmra.mxu0 %v4810
      %v4922 = vpop.f32.mrf.mxu0
      %v4923 = vadd.f32 %v4794, %v4922
      %4924 = vmatmul.f32.gmra.mxu0 %v4813
      %v4925 = vpop.f32.mrf.mxu0
      %v4926 = vadd.f32 %v4794, %v4925
      %4927 = vmatmul.f32.gmra.mxu0 %v4816
      %v4928 = vpop.f32.mrf.mxu0
      %v4929 = vadd.f32 %v4794, %v4928
      %4930 = vmatmul.f32.gmra.mxu0 %v4819
      %v4931 = vpop.f32.mrf.mxu0
      %v4932 = vadd.f32 %v4794, %v4931
      %4933 = vmatmul.f32.gmra.mxu0 %v4822
      %v4934 = vpop.f32.mrf.mxu0
      %v4935 = vadd.f32 %v4794, %v4934
      %4936 = vmatmul.f32.gmra.mxu0 %v4825
      %v4937 = vpop.f32.mrf.mxu0
      %v4938 = vadd.f32 %v4794, %v4937
      %4939 = vmatmul.f32.gmra.mxu0 %v4828
      %v4940 = vpop.f32.mrf.mxu0
      %v4941 = vadd.f32 %v4794, %v4940
      %4942 = vmatmul.f32.gmra.mxu0 %v4831
      %v4943 = vpop.f32.mrf.mxu0
      %v4944 = vadd.f32 %v4794, %v4943
      %4945 = vmatmul.f32.gmra.mxu0 %v4834
      %v4946 = vpop.f32.mrf.mxu0
      %v4947 = vadd.f32 %v4794, %v4946
      %4948 = vmatmul.f32.gmra.mxu0 %v4837
      %v4949 = vpop.f32.mrf.mxu0
      %v4950 = vadd.f32 %v4794, %v4949
      %4951 = vmatmul.f32.gmra.mxu0 %v4840
      %v4952 = vpop.f32.mrf.mxu0
      %v4953 = vadd.f32 %v4794, %v4952
      %4954 = vmatmul.f32.gmra.mxu0 %v4843
      %v4955 = vpop.f32.mrf.mxu0
      %v4956 = vadd.f32 %v4794, %v4955
      %4957 = vmatmul.f32.gmra.mxu0 %v4846
      %v4958 = vpop.f32.mrf.mxu0
      %v4959 = vadd.f32 %v4794, %v4958
      %4960 = vmatmul.f32.gmra.mxu0 %v4849
      %v4961 = vpop.f32.mrf.mxu0
      %v4962 = vadd.f32 %v4794, %v4961
      %4963 = vmatmul.f32.gmra.mxu0 %v4852
      %v4964 = vpop.f32.mrf.mxu0
      %v4965 = vadd.f32 %v4794, %v4964
      %4966 = vmatmul.f32.gmra.mxu0 %v4855
      %v4967 = vpop.f32.mrf.mxu0
      %v4968 = vadd.f32 %v4794, %v4967
      %4969 = vmatmul.f32.gmra.mxu0 %v4858
      %v4970 = vpop.f32.mrf.mxu0
      %v4971 = vadd.f32 %v4794, %v4970
      %4972 = vmatmul.f32.gmra.mxu0 %v4861
      %v4973 = vpop.f32.mrf.mxu0
      %v4974 = vadd.f32 %v4794, %v4973
      %4975 = vmatmul.f32.gmra.mxu0 %v4864
      %v4976 = vpop.f32.mrf.mxu0
      %v4977 = vadd.f32 %v4794, %v4976
      %4978 = vmatmul.f32.gmra.mxu0 %v4867
      %v4979 = vpop.f32.mrf.mxu0
      %v4980 = vadd.f32 %v4794, %v4979
      %4981 = vmatmul.f32.gmra.mxu0 %v4870
      %v4982 = vpop.f32.mrf.mxu0
      %v4983 = vadd.f32 %v4794, %v4982
      %4984 = vmatmul.f32.gmra.mxu0 %v4873
      %v4985 = vpop.f32.mrf.mxu0
      %v4986 = vadd.f32 %v4794, %v4985
      %4987 = vmatmul.f32.gmra.mxu0 %v4876
      %v4988 = vpop.f32.mrf.mxu0
      %v4989 = vadd.f32 %v4794, %v4988
      %4990 = vmatmul.f32.gmra.mxu0 %v4879
      %v4991 = vpop.f32.mrf.mxu0
      %v4992 = vadd.f32 %v4794, %v4991
      %4993 = vmatmul.f32.gmra.mxu0 %v4882
      %v4994 = vpop.f32.mrf.mxu0
      %v4995 = vadd.f32 %v4794, %v4994
      %4996 = vmatmul.f32.gmra.mxu0 %v4885
      %v4997 = vpop.f32.mrf.mxu0
      %v4998 = vadd.f32 %v4794, %v4997
      %4999 = vmatmul.f32.gmra.mxu0 %v4888
      %v5000 = vpop.f32.mrf.mxu0
      %v5001 = vadd.f32 %v4794, %v5000
      %5002 = vmatmul.f32.gmra.mxu0 %v4891
      %v5003 = vpop.f32.mrf.mxu0
      %v5004 = vadd.f32 %v4794, %v5003
      %5005 = vdwg.mxu0
      %v5006 = vmax.f32 %v4911, 0.0
      %v5007 = vmax.f32 %v4914, 0.0
      %v5008 = vmax.f32 %v4917, 0.0
      %v5009 = vmax.f32 %v4920, 0.0
      %v5010 = vmax.f32 %v4923, 0.0
      %v5011 = vmax.f32 %v4926, 0.0
      %v5012 = vmax.f32 %v4929, 0.0
      %v5013 = vmax.f32 %v4932, 0.0
      %v5014 = vmax.f32 %v4935, 0.0
      %v5015 = vmax.f32 %v4938, 0.0
      %v5016 = vmax.f32 %v4941, 0.0
      %v5017 = vmax.f32 %v4944, 0.0
      %v5018 = vmax.f32 %v4947, 0.0
      %v5019 = vmax.f32 %v4950, 0.0
      %v5020 = vmax.f32 %v4953, 0.0
      %v5021 = vmax.f32 %v4956, 0.0
      %v5022 = vmax.f32 %v4959, 0.0
      %v5023 = vmax.f32 %v4962, 0.0
      %v5024 = vmax.f32 %v4965, 0.0
      %v5025 = vmax.f32 %v4968, 0.0
      %v5026 = vmax.f32 %v4971, 0.0
      %v5027 = vmax.f32 %v4974, 0.0
      %v5028 = vmax.f32 %v4977, 0.0
      %v5029 = vmax.f32 %v4980, 0.0
      %v5030 = vmax.f32 %v4983, 0.0
      %v5031 = vmax.f32 %v4986, 0.0
      %v5032 = vmax.f32 %v4989, 0.0
      %v5033 = vmax.f32 %v4992, 0.0
      %v5034 = vmax.f32 %v4995, 0.0
      %v5035 = vmax.f32 %v4998, 0.0
      %v5036 = vmax.f32 %v5001, 0.0
      %v5037 = vmax.f32 %v5004, 0.0
      %5038 = vst.msk [vmem:[#allocation5] sm:$0xff] %vm4683, %v5006
      %5039 = vst.msk [vmem:[#allocation5 + $0x8] sm:$0xff] %vm4683, %v5007
      %5040 = vst.msk [vmem:[#allocation5 + $0x10] sm:$0xff] %vm4683, %v5008
      %5041 = vst.msk [vmem:[#allocation5 + $0x18] sm:$0xff] %vm4683, %v5009
      %5042 = vst.msk [vmem:[#allocation5 + $0x20] sm:$0xff] %vm4683, %v5010
      %5043 = vst.msk [vmem:[#allocation5 + $0x28] sm:$0xff] %vm4683, %v5011
      %5044 = vst.msk [vmem:[#allocation5 + $0x30] sm:$0xff] %vm4683, %v5012
      %5045 = vst.msk [vmem:[#allocation5 + $0x38] sm:$0xff] %vm4683, %v5013
      %5046 = vst.msk [vmem:[#allocation5 + $0x40] sm:$0xff] %vm4683, %v5014
      %5047 = vst.msk [vmem:[#allocation5 + $0x48] sm:$0xff] %vm4683, %v5015
      %5048 = vst.msk [vmem:[#allocation5 + $0x50] sm:$0xff] %vm4683, %v5016
      %5049 = vst.msk [vmem:[#allocation5 + $0x58] sm:$0xff] %vm4683, %v5017
      %5050 = vst.msk [vmem:[#allocation5 + $0x60] sm:$0xff] %vm4683, %v5018
      %5051 = vst.msk [vmem:[#allocation5 + $0x68] sm:$0xff] %vm4683, %v5019
      %5052 = vst.msk [vmem:[#allocation5 + $0x70] sm:$0xff] %vm4683, %v5020
      %5053 = vst.msk [vmem:[#allocation5 + $0x78] sm:$0xff] %vm4683, %v5021
      %5054 = vst.msk [vmem:[#allocation5 + $0x80] sm:$0xff] %vm4683, %v5022
      %5055 = vst.msk [vmem:[#allocation5 + $0x88] sm:$0xff] %vm4683, %v5023
      %5056 = vst.msk [vmem:[#allocation5 + $0x90] sm:$0xff] %vm4683, %v5024
      %5057 = vst.msk [vmem:[#allocation5 + $0x98] sm:$0xff] %vm4683, %v5025
      %5058 = vst.msk [vmem:[#allocation5 + $0xa0] sm:$0xff] %vm4683, %v5026
      %5059 = vst.msk [vmem:[#allocation5 + $0xa8] sm:$0xff] %vm4683, %v5027
      %5060 = vst.msk [vmem:[#allocation5 + $0xb0] sm:$0xff] %vm4683, %v5028
      %5061 = vst.msk [vmem:[#allocation5 + $0xb8] sm:$0xff] %vm4683, %v5029
      %5062 = vst.msk [vmem:[#allocation5 + $0xc0] sm:$0xff] %vm4683, %v5030
      %5063 = vst.msk [vmem:[#allocation5 + $0xc8] sm:$0xff] %vm4683, %v5031
      %5064 = vst.msk [vmem:[#allocation5 + $0xd0] sm:$0xff] %vm4683, %v5032
      %5065 = vst.msk [vmem:[#allocation5 + $0xd8] sm:$0xff] %vm4683, %v5033
      %5066 = vst.msk [vmem:[#allocation5 + $0xe0] sm:$0xff] %vm4683, %v5034
      %5067 = vst.msk [vmem:[#allocation5 + $0xe8] sm:$0xff] %vm4683, %v5035
      %5068 = vst.msk [vmem:[#allocation5 + $0xf0] sm:$0xff] %vm4683, %v5036
      %vm5069 = vcmask 254976
      %5070 = vst.msk [vmem:[#allocation5 + $0xf8] sm:$0x3] %vm5069, %v5037
      %v5071 = vld [vmem:[#allocation5] ss:$2 sm:$0xff]
      %s5072 = scalar_lea.vmem [#allocation5], 16
      %v5073 = vld [vmem:[%s5072] ss:$2 sm:$0xff]
      %s5074 = scalar_lea.vmem [#allocation5], 32
      %v5075 = vld [vmem:[%s5074] ss:$2 sm:$0xff]
      %s5076 = scalar_lea.vmem [#allocation5], 48
      %v5077 = vld [vmem:[%s5076] ss:$2 sm:$0xff]
      %s5078 = scalar_lea.vmem [#allocation5], 64
      %v5079 = vld [vmem:[%s5078] ss:$2 sm:$0xff]
      %s5080 = scalar_lea.vmem [#allocation5], 80
      %v5081 = vld [vmem:[%s5080] ss:$2 sm:$0xff]
      %s5082 = scalar_lea.vmem [#allocation5], 96
      %v5083 = vld [vmem:[%s5082] ss:$2 sm:$0xff]
      %s5084 = scalar_lea.vmem [#allocation5], 112
      %v5085 = vld [vmem:[%s5084] ss:$2 sm:$0xff]
      %s5086 = scalar_lea.vmem [#allocation5], 128
      %v5087 = vld [vmem:[%s5086] ss:$2 sm:$0xff]
      %s5088 = scalar_lea.vmem [#allocation5], 144
      %v5089 = vld [vmem:[%s5088] ss:$2 sm:$0xff]
      %s5090 = scalar_lea.vmem [#allocation5], 160
      %v5091 = vld [vmem:[%s5090] ss:$2 sm:$0xff]
      %s5092 = scalar_lea.vmem [#allocation5], 176
      %v5093 = vld [vmem:[%s5092] ss:$2 sm:$0xff]
      %s5094 = scalar_lea.vmem [#allocation5], 192
      %v5095 = vld [vmem:[%s5094] ss:$2 sm:$0xff]
      %s5096 = scalar_lea.vmem [#allocation5], 208
      %v5097 = vld [vmem:[%s5096] ss:$2 sm:$0xff]
      %s5098 = scalar_lea.vmem [#allocation5], 224
      %v5099 = vld [vmem:[%s5098] ss:$2 sm:$0xff]
      %s5100 = scalar_lea.vmem [#allocation5], 240
      %v5101 = vld [vmem:[%s5100] ss:$2 sm:$0x1f]
      %s5102 = scalar_lea.vmem [#allocation5], 1
      %v5103 = vld [vmem:[%s5102] ss:$2 sm:$0xff]
      %s5104 = scalar_lea.vmem [#allocation5], 17
      %v5105 = vld [vmem:[%s5104] ss:$2 sm:$0xff]
      %s5106 = scalar_lea.vmem [#allocation5], 33
      %v5107 = vld [vmem:[%s5106] ss:$2 sm:$0xff]
      %s5108 = scalar_lea.vmem [#allocation5], 49
      %v5109 = vld [vmem:[%s5108] ss:$2 sm:$0xff]
      %s5110 = scalar_lea.vmem [#allocation5], 65
      %v5111 = vld [vmem:[%s5110] ss:$2 sm:$0xff]
      %s5112 = scalar_lea.vmem [#allocation5], 81
      %v5113 = vld [vmem:[%s5112] ss:$2 sm:$0xff]
      %s5114 = scalar_lea.vmem [#allocation5], 97
      %v5115 = vld [vmem:[%s5114] ss:$2 sm:$0xff]
      %s5116 = scalar_lea.vmem [#allocation5], 113
      %v5117 = vld [vmem:[%s5116] ss:$2 sm:$0xff]
      %s5118 = scalar_lea.vmem [#allocation5], 129
      %v5119 = vld [vmem:[%s5118] ss:$2 sm:$0xff]
      %s5120 = scalar_lea.vmem [#allocation5], 145
      %v5121 = vld [vmem:[%s5120] ss:$2 sm:$0xff]
      %s5122 = scalar_lea.vmem [#allocation5], 161
      %v5123 = vld [vmem:[%s5122] ss:$2 sm:$0xff]
      %s5124 = scalar_lea.vmem [#allocation5], 177
      %v5125 = vld [vmem:[%s5124] ss:$2 sm:$0xff]
      %s5126 = scalar_lea.vmem [#allocation5], 193
      %v5127 = vld [vmem:[%s5126] ss:$2 sm:$0xff]
      %s5128 = scalar_lea.vmem [#allocation5], 209
      %v5129 = vld [vmem:[%s5128] ss:$2 sm:$0xff]
      %s5130 = scalar_lea.vmem [#allocation5], 225
      %v5131 = vld [vmem:[%s5130] ss:$2 sm:$0xff]
      %s5132 = scalar_lea.vmem [#allocation5], 241
      %v5133 = vld [vmem:[%s5132] ss:$2 sm:$0x1f]
      %v5134 = vmax.f32 %v5071, %v5103
      %v5135 = vmax.f32 %v5073, %v5105
      %v5136 = vmax.f32 %v5075, %v5107
      %v5137 = vmax.f32 %v5077, %v5109
      %v5138 = vmax.f32 %v5079, %v5111
      %v5139 = vmax.f32 %v5081, %v5113
      %v5140 = vmax.f32 %v5083, %v5115
      %v5141 = vmax.f32 %v5085, %v5117
      %v5142 = vmax.f32 %v5087, %v5119
      %v5143 = vmax.f32 %v5089, %v5121
      %v5144 = vmax.f32 %v5091, %v5123
      %v5145 = vmax.f32 %v5093, %v5125
      %v5146 = vmax.f32 %v5095, %v5127
      %v5147 = vmax.f32 %v5097, %v5129
      %v5148 = vmax.f32 %v5099, %v5131
      %v5149 = vmax.f32 %v5101, %v5133
      %vm5150 = vcmask 253952
      %5151 = vst.msk [vmem:[#allocation6] sm:$0x1] %vm5150, 0.0
      %5152 = vst.msk [vmem:[#allocation6 + $0x7e] sm:$0x1] %vm5150, 0.0
      %5153 = vst.msk [vmem:[#allocation6 + $0x1] sm:$0xff] %vm4683, %v5134
      %5154 = vst.msk [vmem:[#allocation6 + $0x9] sm:$0xff] %vm4683, %v5135
      %5155 = vst.msk [vmem:[#allocation6 + $0x11] sm:$0xff] %vm4683, %v5136
      %5156 = vst.msk [vmem:[#allocation6 + $0x19] sm:$0xff] %vm4683, %v5137
      %5157 = vst.msk [vmem:[#allocation6 + $0x21] sm:$0xff] %vm4683, %v5138
      %5158 = vst.msk [vmem:[#allocation6 + $0x29] sm:$0xff] %vm4683, %v5139
      %5159 = vst.msk [vmem:[#allocation6 + $0x31] sm:$0xff] %vm4683, %v5140
      %5160 = vst.msk [vmem:[#allocation6 + $0x39] sm:$0xff] %vm4683, %v5141
      %5161 = vst.msk [vmem:[#allocation6 + $0x41] sm:$0xff] %vm4683, %v5142
      %5162 = vst.msk [vmem:[#allocation6 + $0x49] sm:$0xff] %vm4683, %v5143
      %5163 = vst.msk [vmem:[#allocation6 + $0x51] sm:$0xff] %vm4683, %v5144
      %5164 = vst.msk [vmem:[#allocation6 + $0x59] sm:$0xff] %vm4683, %v5145
      %5165 = vst.msk [vmem:[#allocation6 + $0x61] sm:$0xff] %vm4683, %v5146
      %5166 = vst.msk [vmem:[#allocation6 + $0x69] sm:$0xff] %vm4683, %v5147
      %5167 = vst.msk [vmem:[#allocation6 + $0x71] sm:$0xff] %vm4683, %v5148
      %vm5168 = vcmask 258048
      %5169 = vst.msk [vmem:[#allocation6 + $0x79] sm:$0x1f] %vm5168, %v5149
      %v5170 = vld [vmem:[#allocation6] sm:$0xff]
      %v5171 = vld [vmem:[#allocation6 + $0x8] sm:$0xff]
      %v5172 = vld [vmem:[#allocation6 + $0x10] sm:$0xff]
      %v5173 = vld [vmem:[#allocation6 + $0x18] sm:$0xff]
      %v5174 = vld [vmem:[#allocation6 + $0x20] sm:$0xff]
      %v5175 = vld [vmem:[#allocation6 + $0x28] sm:$0xff]
      %v5176 = vld [vmem:[#allocation6 + $0x30] sm:$0xff]
      %v5177 = vld [vmem:[#allocation6 + $0x38] sm:$0xff]
      %v5178 = vld [vmem:[#allocation6 + $0x40] sm:$0xff]
      %v5179 = vld [vmem:[#allocation6 + $0x48] sm:$0xff]
      %v5180 = vld [vmem:[#allocation6 + $0x50] sm:$0xff]
      %v5181 = vld [vmem:[#allocation6 + $0x58] sm:$0xff]
      %v5182 = vld [vmem:[#allocation6 + $0x60] sm:$0xff]
      %v5183 = vld [vmem:[#allocation6 + $0x68] sm:$0xff]
      %v5184 = vld [vmem:[#allocation6 + $0x70] sm:$0xff]
      %v5185 = vld [vmem:[#allocation6 + $0x78] sm:$0x1f]
      %v5186 = vld [vmem:[#allocation6 + $0x1] sm:$0xff]
      %v5187 = vld [vmem:[#allocation6 + $0x9] sm:$0xff]
      %v5188 = vld [vmem:[#allocation6 + $0x11] sm:$0xff]
      %v5189 = vld [vmem:[#allocation6 + $0x19] sm:$0xff]
      %v5190 = vld [vmem:[#allocation6 + $0x21] sm:$0xff]
      %v5191 = vld [vmem:[#allocation6 + $0x29] sm:$0xff]
      %v5192 = vld [vmem:[#allocation6 + $0x31] sm:$0xff]
      %v5193 = vld [vmem:[#allocation6 + $0x39] sm:$0xff]
      %v5194 = vld [vmem:[#allocation6 + $0x41] sm:$0xff]
      %v5195 = vld [vmem:[#allocation6 + $0x49] sm:$0xff]
      %v5196 = vld [vmem:[#allocation6 + $0x51] sm:$0xff]
      %v5197 = vld [vmem:[#allocation6 + $0x59] sm:$0xff]
      %v5198 = vld [vmem:[#allocation6 + $0x61] sm:$0xff]
      %v5199 = vld [vmem:[#allocation6 + $0x69] sm:$0xff]
      %v5200 = vld [vmem:[#allocation6 + $0x71] sm:$0xff]
      %v5201 = vld [vmem:[#allocation6 + $0x79] sm:$0x1f]
      %v5202 = vld [vmem:[#allocation6 + $0x2] sm:$0xff]
      %v5203 = vld [vmem:[#allocation6 + $0xa] sm:$0xff]
      %v5204 = vld [vmem:[#allocation6 + $0x12] sm:$0xff]
      %v5205 = vld [vmem:[#allocation6 + $0x1a] sm:$0xff]
      %v5206 = vld [vmem:[#allocation6 + $0x22] sm:$0xff]
      %v5207 = vld [vmem:[#allocation6 + $0x2a] sm:$0xff]
      %v5208 = vld [vmem:[#allocation6 + $0x32] sm:$0xff]
      %v5209 = vld [vmem:[#allocation6 + $0x3a] sm:$0xff]
      %v5210 = vld [vmem:[#allocation6 + $0x42] sm:$0xff]
      %v5211 = vld [vmem:[#allocation6 + $0x4a] sm:$0xff]
      %v5212 = vld [vmem:[#allocation6 + $0x52] sm:$0xff]
      %v5213 = vld [vmem:[#allocation6 + $0x5a] sm:$0xff]
      %v5214 = vld [vmem:[#allocation6 + $0x62] sm:$0xff]
      %v5215 = vld [vmem:[#allocation6 + $0x6a] sm:$0xff]
      %v5216 = vld [vmem:[#allocation6 + $0x72] sm:$0xff]
      %v5217 = vld [vmem:[#allocation6 + $0x7a] sm:$0x1f]
      %5234 = vrot.lane.b32.xlu0 %v5186, 32
      %v5235 = vpop.permute.xlu0 %5234
      %5236 = vrot.lane.b32.xlu0 %v5187, 32
      %v5237 = vpop.permute.xlu0 %5236
      %5238 = vrot.lane.b32.xlu0 %v5188, 32
      %v5239 = vpop.permute.xlu0 %5238
      %5240 = vrot.lane.b32.xlu0 %v5189, 32
      %v5241 = vpop.permute.xlu0 %5240
      %5242 = vrot.lane.b32.xlu0 %v5190, 32
      %v5243 = vpop.permute.xlu0 %5242
      %5244 = vrot.lane.b32.xlu0 %v5191, 32
      %v5245 = vpop.permute.xlu0 %5244
      %5246 = vrot.lane.b32.xlu0 %v5192, 32
      %v5247 = vpop.permute.xlu0 %5246
      %5248 = vrot.lane.b32.xlu0 %v5193, 32
      %v5249 = vpop.permute.xlu0 %5248
      %5250 = vrot.lane.b32.xlu0 %v5194, 32
      %v5251 = vpop.permute.xlu0 %5250
      %5252 = vrot.lane.b32.xlu0 %v5195, 32
      %v5253 = vpop.permute.xlu0 %5252
      %5254 = vrot.lane.b32.xlu0 %v5196, 32
      %v5255 = vpop.permute.xlu0 %5254
      %5256 = vrot.lane.b32.xlu0 %v5197, 32
      %v5257 = vpop.permute.xlu0 %5256
      %5258 = vrot.lane.b32.xlu0 %v5198, 32
      %v5259 = vpop.permute.xlu0 %5258
      %5260 = vrot.lane.b32.xlu0 %v5199, 32
      %v5261 = vpop.permute.xlu0 %5260
      %5262 = vrot.lane.b32.xlu0 %v5200, 32
      %v5263 = vpop.permute.xlu0 %5262
      %5264 = vrot.lane.b32.xlu0 %v5201, 32
      %v5265 = vpop.permute.xlu0 %5264
      %5298 = vrot.lane.b32.xlu0 %v5202, 64
      %v5299 = vpop.permute.xlu0 %5298
      %5300 = vrot.lane.b32.xlu0 %v5203, 64
      %v5301 = vpop.permute.xlu0 %5300
      %5302 = vrot.lane.b32.xlu0 %v5204, 64
      %v5303 = vpop.permute.xlu0 %5302
      %5304 = vrot.lane.b32.xlu0 %v5205, 64
      %v5305 = vpop.permute.xlu0 %5304
      %5306 = vrot.lane.b32.xlu0 %v5206, 64
      %v5307 = vpop.permute.xlu0 %5306
      %5308 = vrot.lane.b32.xlu0 %v5207, 64
      %v5309 = vpop.permute.xlu0 %5308
      %5310 = vrot.lane.b32.xlu0 %v5208, 64
      %v5311 = vpop.permute.xlu0 %5310
      %5312 = vrot.lane.b32.xlu0 %v5209, 64
      %v5313 = vpop.permute.xlu0 %5312
      %5314 = vrot.lane.b32.xlu0 %v5210, 64
      %v5315 = vpop.permute.xlu0 %5314
      %5316 = vrot.lane.b32.xlu0 %v5211, 64
      %v5317 = vpop.permute.xlu0 %5316
      %5318 = vrot.lane.b32.xlu0 %v5212, 64
      %v5319 = vpop.permute.xlu0 %5318
      %5320 = vrot.lane.b32.xlu0 %v5213, 64
      %v5321 = vpop.permute.xlu0 %5320
      %5322 = vrot.lane.b32.xlu0 %v5214, 64
      %v5323 = vpop.permute.xlu0 %5322
      %5324 = vrot.lane.b32.xlu0 %v5215, 64
      %v5325 = vpop.permute.xlu0 %5324
      %5326 = vrot.lane.b32.xlu0 %v5216, 64
      %v5327 = vpop.permute.xlu0 %5326
      %5328 = vrot.lane.b32.xlu0 %v5217, 64
      %v5329 = vpop.permute.xlu0 %5328
      %v5346 = vsel %vm4683, %v5170, %v5235
      %v5347 = vsel %vm4683, %v5171, %v5237
      %v5348 = vsel %vm4683, %v5172, %v5239
      %v5349 = vsel %vm4683, %v5173, %v5241
      %v5350 = vsel %vm4683, %v5174, %v5243
      %v5351 = vsel %vm4683, %v5175, %v5245
      %v5352 = vsel %vm4683, %v5176, %v5247
      %v5353 = vsel %vm4683, %v5177, %v5249
      %v5354 = vsel %vm4683, %v5178, %v5251
      %v5355 = vsel %vm4683, %v5179, %v5253
      %v5356 = vsel %vm4683, %v5180, %v5255
      %v5357 = vsel %vm4683, %v5181, %v5257
      %v5358 = vsel %vm4683, %v5182, %v5259
      %v5359 = vsel %vm4683, %v5183, %v5261
      %v5360 = vsel %vm4683, %v5184, %v5263
      %v5361 = vsel %vm4683, %v5185, %v5265
      %v5362 = vsel %vm4749, %v5346, %v5299
      %v5363 = vsel %vm4749, %v5347, %v5301
      %v5364 = vsel %vm4749, %v5348, %v5303
      %v5365 = vsel %vm4749, %v5349, %v5305
      %v5366 = vsel %vm4749, %v5350, %v5307
      %v5367 = vsel %vm4749, %v5351, %v5309
      %v5368 = vsel %vm4749, %v5352, %v5311
      %v5369 = vsel %vm4749, %v5353, %v5313
      %v5370 = vsel %vm4749, %v5354, %v5315
      %v5371 = vsel %vm4749, %v5355, %v5317
      %v5372 = vsel %vm4749, %v5356, %v5319
      %v5373 = vsel %vm4749, %v5357, %v5321
      %v5374 = vsel %vm4749, %v5358, %v5323
      %v5375 = vsel %vm4749, %v5359, %v5325
      %v5376 = vsel %vm4749, %v5360, %v5327
      %v5377 = vsel %vm4749, %v5361, %v5329
      %v5378 = vld [vmem:[%s5] sm:$0xff]
      %v5379 = vld [vmem:[%s5 + $0x8] sm:$0xff]
      %v5380 = vld [vmem:[%s5 + $0x10] sm:$0xff]
      %v5381 = vld [vmem:[%s5 + $0x18] sm:$0xff]
      %v5382 = vld [vmem:[%s5 + $0x20] sm:$0xff]
      %v5383 = vld [vmem:[%s5 + $0x28] sm:$0xff]
      %v5384 = vld [vmem:[%s5 + $0x30] sm:$0xff]
      %v5385 = vld [vmem:[%s5 + $0x38] sm:$0xff]
      %v5386 = vld [vmem:[%s5 + $0x40] sm:$0xff]
      %v5387 = vld [vmem:[%s5 + $0x48] sm:$0xff]
      %v5388 = vld [vmem:[%s5 + $0x50] sm:$0xff]
      %v5389 = vld [vmem:[%s5 + $0x58] sm:$0xff]
      %v5390 = vld [vmem:[%s6] sm:$0x1]
      %v5392 = vperm.slane %v5390, 0
      %vm5394 = vcmask 785408
      %v5396 = vsel %vm5394, %v5362, 0
      %v5399 = vsel %vm5394, %v5363, 0
      %v5402 = vsel %vm5394, %v5364, 0
      %v5405 = vsel %vm5394, %v5365, 0
      %v5408 = vsel %vm5394, %v5366, 0
      %v5411 = vsel %vm5394, %v5367, 0
      %v5414 = vsel %vm5394, %v5368, 0
      %v5417 = vsel %vm5394, %v5369, 0
      %v5420 = vsel %vm5394, %v5370, 0
      %v5423 = vsel %vm5394, %v5371, 0
      %v5426 = vsel %vm5394, %v5372, 0
      %v5429 = vsel %vm5394, %v5373, 0
      %v5432 = vsel %vm5394, %v5374, 0
      %v5435 = vsel %vm5394, %v5375, 0
      %v5438 = vsel %vm5394, %v5376, 0
      %v5441 = vsel %vm5394, %v5377, 0
      %5443 = vmatpush.msra.mxu0 0.0
      %5444 = vmatpush.msra.mxu0 0.0
      %5445 = vmatpush.msra.mxu0 0.0
      %5446 = vmatpush.msra.mxu0 0.0
      %5447 = vmatpush.msra.mxu0 %v5389
      %5448 = vmatpush.msra.mxu0 %v5388
      %5449 = vmatpush.msra.mxu0 %v5387
      %5450 = vmatpush.msra.mxu0 %v5386
      %5451 = vmatpush.msra.mxu0 %v5385
      %5452 = vmatpush.msra.mxu0 %v5384
      %5453 = vmatpush.msra.mxu0 %v5383
      %5454 = vmatpush.msra.mxu0 %v5382
      %5455 = vmatpush.msra.mxu0 %v5381
      %5456 = vmatpush.msra.mxu0 %v5380
      %5457 = vmatpush.msra.mxu0 %v5379
      %5458 = vmatpush.msra.mxu0 %v5378
      %5459 = vmatmul.f32.gmra.mxu0 %v5396
      %v5460 = vpop.f32.mrf.mxu0
      %v5461 = vadd.f32 %v5392, %v5460
      %5462 = vmatmul.f32.gmra.mxu0 %v5399
      %v5463 = vpop.f32.mrf.mxu0
      %v5464 = vadd.f32 %v5392, %v5463
      %5465 = vmatmul.f32.gmra.mxu0 %v5402
      %v5466 = vpop.f32.mrf.mxu0
      %v5467 = vadd.f32 %v5392, %v5466
      %5468 = vmatmul.f32.gmra.mxu0 %v5405
      %v5469 = vpop.f32.mrf.mxu0
      %v5470 = vadd.f32 %v5392, %v5469
      %5471 = vmatmul.f32.gmra.mxu0 %v5408
      %v5472 = vpop.f32.mrf.mxu0
      %v5473 = vadd.f32 %v5392, %v5472
      %5474 = vmatmul.f32.gmra.mxu0 %v5411
      %v5475 = vpop.f32.mrf.mxu0
      %v5476 = vadd.f32 %v5392, %v5475
      %5477 = vmatmul.f32.gmra.mxu0 %v5414
      %v5478 = vpop.f32.mrf.mxu0
      %v5479 = vadd.f32 %v5392, %v5478
      %5480 = vmatmul.f32.gmra.mxu0 %v5417
      %v5481 = vpop.f32.mrf.mxu0
      %v5482 = vadd.f32 %v5392, %v5481
      %5483 = vmatmul.f32.gmra.mxu0 %v5420
      %v5484 = vpop.f32.mrf.mxu0
      %v5485 = vadd.f32 %v5392, %v5484
      %5486 = vmatmul.f32.gmra.mxu0 %v5423
      %v5487 = vpop.f32.mrf.mxu0
      %v5488 = vadd.f32 %v5392, %v5487
      %5489 = vmatmul.f32.gmra.mxu0 %v5426
      %v5490 = vpop.f32.mrf.mxu0
      %v5491 = vadd.f32 %v5392, %v5490
      %5492 = vmatmul.f32.gmra.mxu0 %v5429
      %v5493 = vpop.f32.mrf.mxu0
      %v5494 = vadd.f32 %v5392, %v5493
      %5495 = vmatmul.f32.gmra.mxu0 %v5432
      %v5496 = vpop.f32.mrf.mxu0
      %v5497 = vadd.f32 %v5392, %v5496
      %5498 = vmatmul.f32.gmra.mxu0 %v5435
      %v5499 = vpop.f32.mrf.mxu0
      %v5500 = vadd.f32 %v5392, %v5499
      %5501 = vmatmul.f32.gmra.mxu0 %v5438
      %v5502 = vpop.f32.mrf.mxu0
      %v5503 = vadd.f32 %v5392, %v5502
      %5504 = vmatmul.f32.gmra.mxu0 %v5441
      %v5505 = vpop.f32.mrf.mxu0
      %v5506 = vadd.f32 %v5392, %v5505
      %5507 = vdwg.mxu0
      %v5508 = vmax.f32 %v5461, 0.0
      %v5509 = vmax.f32 %v5464, 0.0
      %v5510 = vmax.f32 %v5467, 0.0
      %v5511 = vmax.f32 %v5470, 0.0
      %v5512 = vmax.f32 %v5473, 0.0
      %v5513 = vmax.f32 %v5476, 0.0
      %v5514 = vmax.f32 %v5479, 0.0
      %v5515 = vmax.f32 %v5482, 0.0
      %v5516 = vmax.f32 %v5485, 0.0
      %v5517 = vmax.f32 %v5488, 0.0
      %v5518 = vmax.f32 %v5491, 0.0
      %v5519 = vmax.f32 %v5494, 0.0
      %v5520 = vmax.f32 %v5497, 0.0
      %v5521 = vmax.f32 %v5500, 0.0
      %v5522 = vmax.f32 %v5503, 0.0
      %v5523 = vmax.f32 %v5506, 0.0
      %5524 = vst.msk [vmem:[#allocation7] sm:$0xff] %vm4749, %v5508
      %5525 = vst.msk [vmem:[#allocation7 + $0x8] sm:$0xff] %vm4749, %v5509
      %5526 = vst.msk [vmem:[#allocation7 + $0x10] sm:$0xff] %vm4749, %v5510
      %5527 = vst.msk [vmem:[#allocation7 + $0x18] sm:$0xff] %vm4749, %v5511
      %5528 = vst.msk [vmem:[#allocation7 + $0x20] sm:$0xff] %vm4749, %v5512
      %5529 = vst.msk [vmem:[#allocation7 + $0x28] sm:$0xff] %vm4749, %v5513
      %5530 = vst.msk [vmem:[#allocation7 + $0x30] sm:$0xff] %vm4749, %v5514
      %5531 = vst.msk [vmem:[#allocation7 + $0x38] sm:$0xff] %vm4749, %v5515
      %5532 = vst.msk [vmem:[#allocation7 + $0x40] sm:$0xff] %vm4749, %v5516
      %5533 = vst.msk [vmem:[#allocation7 + $0x48] sm:$0xff] %vm4749, %v5517
      %5534 = vst.msk [vmem:[#allocation7 + $0x50] sm:$0xff] %vm4749, %v5518
      %5535 = vst.msk [vmem:[#allocation7 + $0x58] sm:$0xff] %vm4749, %v5519
      %5536 = vst.msk [vmem:[#allocation7 + $0x60] sm:$0xff] %vm4749, %v5520
      %5537 = vst.msk [vmem:[#allocation7 + $0x68] sm:$0xff] %vm4749, %v5521
      %5538 = vst.msk [vmem:[#allocation7 + $0x70] sm:$0xff] %vm4749, %v5522
      %vm5539 = vcmask 520192
      %5540 = vst.msk [vmem:[#allocation7 + $0x78] sm:$0x1f] %vm5539, %v5523
      %v5541 = vld [vmem:[#allocation7] ss:$5 sm:$0xff]
      %s5542 = scalar_lea.vmem [#allocation7], 40
      %v5543 = vld [vmem:[%s5542] ss:$5 sm:$0xff]
      %s5544 = scalar_lea.vmem [#allocation7], 80
      %v5545 = vld [vmem:[%s5544] ss:$5 sm:$0xff]
      %s5546 = scalar_lea.vmem [#allocation7], 120
      %v5547 = vld [vmem:[%s5546] ss:$5 sm:$0x1]
      %s5548 = scalar_lea.vmem [#allocation7], 1
      %v5549 = vld [vmem:[%s5548] ss:$5 sm:$0xff]
      %s5550 = scalar_lea.vmem [#allocation7], 41
      %v5551 = vld [vmem:[%s5550] ss:$5 sm:$0xff]
      %s5552 = scalar_lea.vmem [#allocation7], 81
      %v5553 = vld [vmem:[%s5552] ss:$5 sm:$0xff]
      %s5554 = scalar_lea.vmem [#allocation7], 121
      %v5555 = vld [vmem:[%s5554] ss:$5 sm:$0x1]
      %v5556 = vmax.f32 %v5541, %v5549
      %v5557 = vmax.f32 %v5543, %v5551
      %v5558 = vmax.f32 %v5545, %v5553
      %v5559 = vmax.f32 %v5547, %v5555
      %s5560 = scalar_lea.vmem [#allocation7], 2
      %v5561 = vld [vmem:[%s5560] ss:$5 sm:$0xff]
      %s5562 = scalar_lea.vmem [#allocation7], 42
      %v5563 = vld [vmem:[%s5562] ss:$5 sm:$0xff]
      %s5564 = scalar_lea.vmem [#allocation7], 82
      %v5565 = vld [vmem:[%s5564] ss:$5 sm:$0xff]
      %s5566 = scalar_lea.vmem [#allocation7], 122
      %v5567 = vld [vmem:[%s5566] ss:$5 sm:$0x1]
      %v5568 = vmax.f32 %v5556, %v5561
      %v5569 = vmax.f32 %v5557, %v5563
      %v5570 = vmax.f32 %v5558, %v5565
      %v5571 = vmax.f32 %v5559, %v5567
      %s5572 = scalar_lea.vmem [#allocation7], 3
      %v5573 = vld [vmem:[%s5572] ss:$5 sm:$0xff]
      %s5574 = scalar_lea.vmem [#allocation7], 43
      %v5575 = vld [vmem:[%s5574] ss:$5 sm:$0xff]
      %s5576 = scalar_lea.vmem [#allocation7], 83
      %v5577 = vld [vmem:[%s5576] ss:$5 sm:$0xff]
      %s5578 = scalar_lea.vmem [#allocation7], 123
      %v5579 = vld [vmem:[%s5578] ss:$5 sm:$0x1]
      %v5580 = vmax.f32 %v5568, %v5573
      %v5581 = vmax.f32 %v5569, %v5575
      %v5582 = vmax.f32 %v5570, %v5577
      %v5583 = vmax.f32 %v5571, %v5579
      %s5584 = scalar_lea.vmem [#allocation7], 4
      %v5585 = vld [vmem:[%s5584] ss:$5 sm:$0xff]
      %s5586 = scalar_lea.vmem [#allocation7], 44
      %v5587 = vld [vmem:[%s5586] ss:$5 sm:$0xff]
      %s5588 = scalar_lea.vmem [#allocation7], 84
      %v5589 = vld [vmem:[%s5588] ss:$5 sm:$0xff]
      %s5590 = scalar_lea.vmem [#allocation7], 124
      %v5591 = vld [vmem:[%s5590] ss:$5 sm:$0x1]
      %v5592 = vmax.f32 %v5580, %v5585
      %v5593 = vmax.f32 %v5581, %v5587
      %v5594 = vmax.f32 %v5582, %v5589
      %v5595 = vmax.f32 %v5583, %v5591
      %5596 = vst.msk [vmem:[%s278] sm:$0xff] %vm4749, %v5592
      %5597 = vst.msk [vmem:[%s278 + $0x8] sm:$0xff] %vm4749, %v5593
      %5598 = vst.msk [vmem:[%s278 + $0x10] sm:$0xff] %vm4749, %v5594
      %vm5599 = vcmask 516096
      %5600 = vst.msk [vmem:[%s278 + $0x18] sm:$0x1] %vm5599, %v5595
      %p5601 = scmp.lt.s32.totalorder %s18, 7
      %s5602 = scalar_select %p5601, %s18, 7
      %s5603 = smul.addr %s5602, 4
      %s5604 = smul.addr %s5603, 8
      %s5605 = scalar_lea.vmem %s7, %s5604
      // Predicated region
      $region49: #{tpu_custom_call.1} parent=47 // pred_check
        %p5606 = pneg %p188
      $region50: #{tpu_custom_call.1} parent=47 // pred_check_branch
        %5608 = sbr.rel (%p5606) target = $region52
      $region51: #{tpu_custom_call.1} parent=47 // pred_region
        _
      $region52: #{tpu_custom_call.1} parent=47 // pred_fallthru
        _
    $region48: #{tpu_custom_call.1} parent=5 // pred_fallthru
      _
    %p5609 = scmp.le.s32.totalorder 2, %s13
    // Predicated region
    $region53: #{tpu_custom_call.1} parent=5 // pred_check
      %p5610 = pneg %p5609
    $region54: #{tpu_custom_call.1} parent=5 // pred_check_branch
      %5612 = sbr.rel (%p5610) target = $region56
    $region55: #{tpu_custom_call.1} parent=5 // pred_region
      %s5613 = ssub.s32 %s13, 2
      // Predicated region
      $region57: #{tpu_custom_call.1} parent=55 // pred_check
        %p5614 = pneg %p194
      $region58: #{tpu_custom_call.1} parent=55 // pred_check_branch
        %5616 = sbr.rel (%p5614) target = $region60
      $region59: #{tpu_custom_call.1} parent=55 // pred_region
        %p5617 = scmp.lt.s32.totalorder %s19, 7
        %s5618 = scalar_select %p5617, %s19, 7
        %s5619 = smul.addr %s5618, 4
        %s5620 = smul.addr %s5619, 8
        %s5621 = scalar_lea.vmem %s7, %s5620
      $region60: #{tpu_custom_call.1} parent=55 // pred_fallthru
        _
    $region56: #{tpu_custom_call.1} parent=5 // pred_fallthru
      _
  $region6: #{tpu_custom_call.1} parent=0 // loop_footer
    %s17 = sadd.s32 1, %s13
  $region7: #{tpu_custom_call.1} parent=0 // loop_footer_branch
    %12 = sbr.rel target = $region3
  $region8: #{tpu_custom_call.1} parent=0 // loop_exit
    _

</llo_original>
